<compile_context>
chip_gen: v7x
topology: tpu7x:2x2x1
jax: 0.10.0
libtpu: 0.0.40
codegen_flags: <defaults>
</compile_context>

<pallas_src>
import functools

import jax
import jax.numpy as jnp
import numpy as np
from jax.experimental import pallas as pl
from jax.experimental.pallas import tpu as pltpu


def _knn_repulsion_kernel(pcs_ref, init_ref, out_ref, *, k, n_seeds, h):
    """One block of Nb batch elements per grid step.

    pcs_ref  : VMEM f32[C, Nb, N]   -- channel-major point block (Nb sublanes, N lanes)
    init_ref : VMEM i32[Nb, 1]      -- initial FPS index per batch element
    out_ref  : VMEM f32[Nb, 128]    -- per-batch loss, broadcast along lanes (unmasked vst)
    """
    C, Nb, N = pcs_ref.shape
    f32 = jnp.float32

    # Hoist the C channel planes out of the FPS loop (C vreg loads total).
    planes = [pcs_ref[c].astype(f32) for c in range(C)]          # C x [Nb, N]
    col_iota = jax.lax.broadcasted_iota(jnp.int32, (Nb, N), 1)   # [Nb, N]

    farthest = init_ref[...]                                      # [Nb, 1] int32
    distance = jnp.full((Nb, N), 1e10, f32)                       # [Nb, N] (torch init value)
    big = f32(1e18)                                               # safe: exp(-1e18/h^2) == 0 exactly

    # ---- farthest point sampling (sequential n_seeds steps, vectorized over Nb) ----
    d_rows = []                                                   # n_seeds x [Nb, N] squared dists, self-masked
    for i in range(n_seeds):
        is_seed = col_iota == farthest                            # [Nb, N] bool
        onehot = is_seed.astype(f32)
        d = jnp.zeros((Nb, N), f32)
        for p in planes:
            cent = jnp.sum(p * onehot, axis=1, keepdims=True)     # [Nb, 1] gather of seed coord (masked sum)
            diff = p - cent
            d = d + diff * diff                                   # accumulate over channels (VPU)
        # Pre-mask the seed's own column: the k-NN phase then needs only k min passes
        # (torch drops top_dist[..., 0], which is exactly this self-distance of 0).
        d_rows.append(jnp.where(is_seed, big, d))
        if i < n_seeds - 1:                                       # argmax unused after last row
            distance = jnp.minimum(distance, d)                   # FPS update uses the UNMASKED row
            mx = jnp.max(distance, axis=1, keepdims=True)
            farthest = jnp.min(
                jnp.where(distance == mx, col_iota, jnp.int32(N)),
                axis=1, keepdims=True)                            # first index achieving max (== argmax)

    # ---- k-NN repulsion: k smallest non-self squared distances per (seed, batch) row ----
    work = jnp.stack(d_rows, axis=0)                              # [S, Nb, N] squared distances
    inv_h2 = f32(1.0 / (h * h))

    acc = jnp.zeros((n_seeds, Nb, 1), f32)
    for j in range(k):
        m = jnp.min(work, axis=-1, keepdims=True)                 # [S, Nb, 1] (squared)
        acc = acc - jnp.sqrt(m) * jnp.exp(m * (-inv_h2))          # sqrt/exp only on selected minima (EUP)
        if j < k - 1:
            # Mask all lanes equal to the current min.  Ties require bit-exact duplicate
            # distances, which never occur for continuous point clouds.
            work = jnp.where(work == m, big, work)

    per_batch = jnp.sum(acc, axis=0)                              # [Nb, 1] sum over seeds & neighbours
    out_ref[...] = jnp.broadcast_to(per_batch, out_ref.shape).astype(out_ref.dtype)


def knn_repulsion_loss(pcs, *, k=10, n_seeds=20, h=0.01, key=None, batch_block=8):
    """pcs: [B, N, C] float32 point cloud (same convention as the torch module).

    batch_block: batch elements packed into the sublane dim per grid step
    (multiple of 8; raise it on chips with plenty of VMEM to amortize the
    ~0.35us per-step overhead when B is large).
    """
    B, N, C = pcs.shape
    if key is None:
        key = jax.random.PRNGKey(0)
    # TODO(synk): torch.randint's RNG stream cannot be reproduced in JAX; the FPS
    # start indices are drawn deterministically from jax.random instead.
    init_idx = jax.random.randint(key, (B,), 0, N, dtype=jnp.int32)

    Nb = batch_block
    num_blocks = -(-B // Nb)
    B_pad = num_blocks * Nb

    # [B, N, C] -> [C, B, N], zero-pad batch, -> [num_blocks, C, Nb, N]
    # (zero-padded batches put every point at the origin -> all distances 0 ->
    #  sqrt(0)*exp(0) contributions are 0, so padding adds nothing to the loss)
    pcs_cbn = jnp.transpose(jnp.asarray(pcs, jnp.float32), (2, 0, 1))
    pcs_cbn = jnp.pad(pcs_cbn, ((0, 0), (0, B_pad - B), (0, 0)))
    pcs_blk = jnp.transpose(pcs_cbn.reshape(C, num_blocks, Nb, N), (1, 0, 2, 3))

    init_blk = jnp.pad(init_idx, (0, B_pad - B)).reshape(num_blocks, Nb, 1)

    kernel = functools.partial(_knn_repulsion_kernel, k=k, n_seeds=n_seeds, h=h)

    out = pl.pallas_call(
        kernel,
        out_shape=jax.ShapeDtypeStruct((num_blocks, Nb, 128), jnp.float32),
        grid_spec=pltpu.PrefetchScalarGridSpec(
            num_scalar_prefetch=0,
            grid=(num_blocks,),
            in_specs=[
                pl.BlockSpec((None, C, Nb, N), lambda g: (g, 0, 0, 0)),
                pl.BlockSpec((None, Nb, 1), lambda g: (g, 0, 0)),
            ],
            out_specs=pl.BlockSpec((None, Nb, 128), lambda g: (g, 0, 0)),
        ),
        compiler_params=pltpu.CompilerParams(
            dimension_semantics=("parallel",)),   # no cross-step state -> megacore-safe
    )(pcs_blk, init_blk)

    per_batch = out[:, :, 0].reshape(B_pad)[:B]
    return jnp.sum(per_batch) / jnp.float32(B)


# ---------------- pure-JAX reference (mirrors the torch forward) ----------------
def _reference_loss(pcs, init_idx, *, k=10, n_seeds=20, h=0.01):
    B, N, C = pcs.shape

    def fps_values(xyz, init):
        distance = jnp.full((N,), 1e10, jnp.float32)
        farthest = init
        cents = []
        for _ in range(n_seeds):
            cent = xyz[farthest]                                  # [C]
            cents.append(cent)
            d = jnp.sum((xyz - cent[None, :]) ** 2, axis=-1)
            distance = jnp.minimum(distance, d)
            farthest = jnp.argmax(distance)
        return jnp.stack(cents)                                   # [S, C]

    seeds = jax.vmap(fps_values)(pcs, init_idx)                   # [B, S, C]
    diff = pcs[:, :, None, :] - seeds[:, None, :, :]              # [B, N, S, C]
    dist_value = jnp.linalg.norm(diff, axis=-1)                   # [B, N, S]
    dist_new = jnp.transpose(dist_value, (0, 2, 1))               # [B, S, N]
    top = -jax.lax.top_k(-dist_new, k + 1)[0]                     # k+1 smallest, ascending
    top_net = top[:, :, 1:]
    weights = jnp.exp(-(top_net ** 2) * (1.0 / h ** 2))
    repulsion = -top_net * weights
    return repulsion.sum(2).sum(1).mean()


if __name__ == "__main__":
    B, N, C = 10, 128, 3
    k, n_seeds, h = 10, 20, 0.01

    key = jax.random.PRNGKey(0)
    k_pts, k_init = jax.random.split(key)
    # points in a small cube so that nearest-neighbour weights are non-trivial
    pcs = jax.random.uniform(k_pts, (B, N, C), dtype=jnp.float32) * 0.1

    loss = knn_repulsion_loss(pcs, k=k, n_seeds=n_seeds, h=h, key=k_init)
    loss = jax.block_until_ready(loss)

    init_idx = jax.random.randint(k_init, (B,), 0, N, dtype=jnp.int32)
    ref = jax.block_until_ready(
        _reference_loss(pcs, init_idx, k=k, n_seeds=n_seeds, h=h))

    np.testing.assert_allclose(float(loss), float(ref), rtol=1e-4, atol=1e-6)
    print("KERNEL_OK")
</pallas_src>

<mosaic_0001>
module attributes {stable_mosaic.version = 11 : i64} {
  func.func @_knn_repulsion_kernel(%arg0: i32, %arg1: memref<1x3x8x128xf32, #tpu.memory_space<vmem>>, %arg2: memref<1x8x1xi32, #tpu.memory_space<vmem>>, %arg3: memref<1x8x128xf32, #tpu.memory_space<vmem>>) attributes {dimension_semantics = [#tpu.dimension_semantics<parallel>], iteration_bounds = array<i64: 2>, scalar_prefetch = 0 : i64, scratch_operands = 0 : i64, tpu.core_type = #tpu.core_type<tc>, window_params = [{transform_indices = @transform_0, window_bounds = array<i64: 1, 3, 8, 128>}, {transform_indices = @transform_1, window_bounds = array<i64: 1, 8, 1>}, {transform_indices = @transform_2, window_bounds = array<i64: 1, 8, 128>}]} {
    %c0 = arith.constant 0 : index
    %c0_0 = arith.constant 0 : index
    %c0_1 = arith.constant 0 : index
    %c0_2 = arith.constant 0 : index
    %0 = vector.load %arg1[%c0, %c0_0, %c0_1, %c0_2] : memref<1x3x8x128xf32, #tpu.memory_space<vmem>>, vector<1x1x8x128xf32>
    %1 = vector.shape_cast %0 : vector<1x1x8x128xf32> to vector<8x128xf32>
    %c0_3 = arith.constant 0 : index
    %c1 = arith.constant 1 : index
    %c0_4 = arith.constant 0 : index
    %c0_5 = arith.constant 0 : index
    %2 = vector.load %arg1[%c0_3, %c1, %c0_4, %c0_5] : memref<1x3x8x128xf32, #tpu.memory_space<vmem>>, vector<1x1x8x128xf32>
    %3 = vector.shape_cast %2 : vector<1x1x8x128xf32> to vector<8x128xf32>
    %c0_6 = arith.constant 0 : index
    %c2 = arith.constant 2 : index
    %c0_7 = arith.constant 0 : index
    %c0_8 = arith.constant 0 : index
    %4 = vector.load %arg1[%c0_6, %c2, %c0_7, %c0_8] : memref<1x3x8x128xf32, #tpu.memory_space<vmem>>, vector<1x1x8x128xf32>
    %5 = vector.shape_cast %4 : vector<1x1x8x128xf32> to vector<8x128xf32>
    %6 = tpu.iota {dimensions = array<i32: 1>} : vector<8x128xi32>
    %c0_9 = arith.constant 0 : index
    %c0_10 = arith.constant 0 : index
    %c0_11 = arith.constant 0 : index
    %7 = vector.load %arg2[%c0_9, %c0_10, %c0_11] : memref<1x8x1xi32, #tpu.memory_space<vmem>>, vector<1x8x1xi32>
    %8 = vector.shape_cast %7 : vector<1x8x1xi32> to vector<8x1xi32>
    %cst = arith.constant 1.000000e+10 : f32
    %9 = vector.broadcast %cst : f32 to vector<8x128xf32>
    %10 = vector.broadcast %8 : vector<8x1xi32> to vector<8x128xi32>
    %11 = arith.cmpi eq, %6, %10 : vector<8x128xi32>
    %12 = arith.extui %11 : vector<8x128xi1> to vector<8x128xi32>
    %13 = arith.sitofp %12 : vector<8x128xi32> to vector<8x128xf32>
    %cst_12 = arith.constant 0.000000e+00 : f32
    %14 = vector.broadcast %cst_12 : f32 to vector<8x128xf32>
    %15 = arith.mulf %1, %13 : vector<8x128xf32>
    %cst_13 = arith.constant dense<0.000000e+00> : vector<8xf32>
    %16 = vector.multi_reduction <add>, %15, %cst_13 [1] : vector<8x128xf32> to vector<8xf32>
    %17 = vector.shape_cast %16 : vector<8xf32> to vector<8x1xf32>
    %18 = vector.broadcast %17 : vector<8x1xf32> to vector<8x128xf32>
    %19 = arith.subf %1, %18 : vector<8x128xf32>
    %20 = arith.mulf %19, %19 : vector<8x128xf32>
    %21 = arith.addf %14, %20 : vector<8x128xf32>
    %22 = arith.mulf %3, %13 : vector<8x128xf32>
    %cst_14 = arith.constant dense<0.000000e+00> : vector<8xf32>
    %23 = vector.multi_reduction <add>, %22, %cst_14 [1] : vector<8x128xf32> to vector<8xf32>
    %24 = vector.shape_cast %23 : vector<8xf32> to vector<8x1xf32>
    %25 = vector.broadcast %24 : vector<8x1xf32> to vector<8x128xf32>
    %26 = arith.subf %3, %25 : vector<8x128xf32>
    %27 = arith.mulf %26, %26 : vector<8x128xf32>
    %28 = arith.addf %21, %27 : vector<8x128xf32>
    %29 = arith.mulf %5, %13 : vector<8x128xf32>
    %cst_15 = arith.constant dense<0.000000e+00> : vector<8xf32>
    %30 = vector.multi_reduction <add>, %29, %cst_15 [1] : vector<8x128xf32> to vector<8xf32>
    %31 = vector.shape_cast %30 : vector<8xf32> to vector<8x1xf32>
    %32 = vector.broadcast %31 : vector<8x1xf32> to vector<8x128xf32>
    %33 = arith.subf %5, %32 : vector<8x128xf32>
    %34 = arith.mulf %33, %33 : vector<8x128xf32>
    %35 = arith.addf %28, %34 : vector<8x128xf32>
    %cst_16 = arith.constant 9.99999984E+17 : f32
    %36 = vector.broadcast %cst_16 : f32 to vector<8x128xf32>
    %37 = arith.select %11, %36, %35 : vector<8x128xi1>, vector<8x128xf32>
    %38 = arith.minimumf %9, %35 : vector<8x128xf32>
    %cst_17 = arith.constant dense<0xFF800000> : vector<8xf32>
    %39 = vector.multi_reduction <maximumf>, %38, %cst_17 [1] : vector<8x128xf32> to vector<8xf32>
    %40 = vector.shape_cast %39 : vector<8xf32> to vector<8x1xf32>
    %41 = vector.broadcast %40 : vector<8x1xf32> to vector<8x128xf32>
    %42 = arith.cmpf oeq, %38, %41 : vector<8x128xf32>
    %c128_i32 = arith.constant 128 : i32
    %43 = vector.broadcast %c128_i32 : i32 to vector<8x128xi32>
    %44 = arith.select %42, %6, %43 : vector<8x128xi1>, vector<8x128xi32>
    %cst_18 = arith.constant dense<2147483647> : vector<8xi32>
    %45 = vector.multi_reduction <minsi>, %44, %cst_18 [1] : vector<8x128xi32> to vector<8xi32>
    %46 = vector.shape_cast %45 : vector<8xi32> to vector<8x1xi32>
    %47 = vector.broadcast %46 : vector<8x1xi32> to vector<8x128xi32>
    %48 = arith.cmpi eq, %6, %47 : vector<8x128xi32>
    %49 = arith.extui %48 : vector<8x128xi1> to vector<8x128xi32>
    %50 = arith.sitofp %49 : vector<8x128xi32> to vector<8x128xf32>
    %cst_19 = arith.constant 0.000000e+00 : f32
    %51 = vector.broadcast %cst_19 : f32 to vector<8x128xf32>
    %52 = arith.mulf %1, %50 : vector<8x128xf32>
    %cst_20 = arith.constant dense<0.000000e+00> : vector<8xf32>
    %53 = vector.multi_reduction <add>, %52, %cst_20 [1] : vector<8x128xf32> to vector<8xf32>
    %54 = vector.shape_cast %53 : vector<8xf32> to vector<8x1xf32>
    %55 = vector.broadcast %54 : vector<8x1xf32> to vector<8x128xf32>
    %56 = arith.subf %1, %55 : vector<8x128xf32>
    %57 = arith.mulf %56, %56 : vector<8x128xf32>
    %58 = arith.addf %51, %57 : vector<8x128xf32>
    %59 = arith.mulf %3, %50 : vector<8x128xf32>
    %cst_21 = arith.constant dense<0.000000e+00> : vector<8xf32>
    %60 = vector.multi_reduction <add>, %59, %cst_21 [1] : vector<8x128xf32> to vector<8xf32>
    %61 = vector.shape_cast %60 : vector<8xf32> to vector<8x1xf32>
    %62 = vector.broadcast %61 : vector<8x1xf32> to vector<8x128xf32>
    %63 = arith.subf %3, %62 : vector<8x128xf32>
    %64 = arith.mulf %63, %63 : vector<8x128xf32>
    %65 = arith.addf %58, %64 : vector<8x128xf32>
    %66 = arith.mulf %5, %50 : vector<8x128xf32>
    %cst_22 = arith.constant dense<0.000000e+00> : vector<8xf32>
    %67 = vector.multi_reduction <add>, %66, %cst_22 [1] : vector<8x128xf32> to vector<8xf32>
    %68 = vector.shape_cast %67 : vector<8xf32> to vector<8x1xf32>
    %69 = vector.broadcast %68 : vector<8x1xf32> to vector<8x128xf32>
    %70 = arith.subf %5, %69 : vector<8x128xf32>
    %71 = arith.mulf %70, %70 : vector<8x128xf32>
    %72 = arith.addf %65, %71 : vector<8x128xf32>
    %cst_23 = arith.constant 9.99999984E+17 : f32
    %73 = vector.broadcast %cst_23 : f32 to vector<8x128xf32>
    %74 = arith.select %48, %73, %72 : vector<8x128xi1>, vector<8x128xf32>
    %75 = arith.minimumf %38, %72 : vector<8x128xf32>
    %cst_24 = arith.constant dense<0xFF800000> : vector<8xf32>
    %76 = vector.multi_reduction <maximumf>, %75, %cst_24 [1] : vector<8x128xf32> to vector<8xf32>
    %77 = vector.shape_cast %76 : vector<8xf32> to vector<8x1xf32>
    %78 = vector.broadcast %77 : vector<8x1xf32> to vector<8x128xf32>
    %79 = arith.cmpf oeq, %75, %78 : vector<8x128xf32>
    %c128_i32_25 = arith.constant 128 : i32
    %80 = vector.broadcast %c128_i32_25 : i32 to vector<8x128xi32>
    %81 = arith.select %79, %6, %80 : vector<8x128xi1>, vector<8x128xi32>
    %cst_26 = arith.constant dense<2147483647> : vector<8xi32>
    %82 = vector.multi_reduction <minsi>, %81, %cst_26 [1] : vector<8x128xi32> to vector<8xi32>
    %83 = vector.shape_cast %82 : vector<8xi32> to vector<8x1xi32>
    %84 = vector.broadcast %83 : vector<8x1xi32> to vector<8x128xi32>
    %85 = arith.cmpi eq, %6, %84 : vector<8x128xi32>
    %86 = arith.extui %85 : vector<8x128xi1> to vector<8x128xi32>
    %87 = arith.sitofp %86 : vector<8x128xi32> to vector<8x128xf32>
    %cst_27 = arith.constant 0.000000e+00 : f32
    %88 = vector.broadcast %cst_27 : f32 to vector<8x128xf32>
    %89 = arith.mulf %1, %87 : vector<8x128xf32>
    %cst_28 = arith.constant dense<0.000000e+00> : vector<8xf32>
    %90 = vector.multi_reduction <add>, %89, %cst_28 [1] : vector<8x128xf32> to vector<8xf32>
    %91 = vector.shape_cast %90 : vector<8xf32> to vector<8x1xf32>
    %92 = vector.broadcast %91 : vector<8x1xf32> to vector<8x128xf32>
    %93 = arith.subf %1, %92 : vector<8x128xf32>
    %94 = arith.mulf %93, %93 : vector<8x128xf32>
    %95 = arith.addf %88, %94 : vector<8x128xf32>
    %96 = arith.mulf %3, %87 : vector<8x128xf32>
    %cst_29 = arith.constant dense<0.000000e+00> : vector<8xf32>
    %97 = vector.multi_reduction <add>, %96, %cst_29 [1] : vector<8x128xf32> to vector<8xf32>
    %98 = vector.shape_cast %97 : vector<8xf32> to vector<8x1xf32>
    %99 = vector.broadcast %98 : vector<8x1xf32> to vector<8x128xf32>
    %100 = arith.subf %3, %99 : vector<8x128xf32>
    %101 = arith.mulf %100, %100 : vector<8x128xf32>
    %102 = arith.addf %95, %101 : vector<8x128xf32>
    %103 = arith.mulf %5, %87 : vector<8x128xf32>
    %cst_30 = arith.constant dense<0.000000e+00> : vector<8xf32>
    %104 = vector.multi_reduction <add>, %103, %cst_30 [1] : vector<8x128xf32> to vector<8xf32>
    %105 = vector.shape_cast %104 : vector<8xf32> to vector<8x1xf32>
    %106 = vector.broadcast %105 : vector<8x1xf32> to vector<8x128xf32>
    %107 = arith.subf %5, %106 : vector<8x128xf32>
    %108 = arith.mulf %107, %107 : vector<8x128xf32>
    %109 = arith.addf %102, %108 : vector<8x128xf32>
    %cst_31 = arith.constant 9.99999984E+17 : f32
    %110 = vector.broadcast %cst_31 : f32 to vector<8x128xf32>
    %111 = arith.select %85, %110, %109 : vector<8x128xi1>, vector<8x128xf32>
    %112 = arith.minimumf %75, %109 : vector<8x128xf32>
    %cst_32 = arith.constant dense<0xFF800000> : vector<8xf32>
    %113 = vector.multi_reduction <maximumf>, %112, %cst_32 [1] : vector<8x128xf32> to vector<8xf32>
    %114 = vector.shape_cast %113 : vector<8xf32> to vector<8x1xf32>
    %115 = vector.broadcast %114 : vector<8x1xf32> to vector<8x128xf32>
    %116 = arith.cmpf oeq, %112, %115 : vector<8x128xf32>
    %c128_i32_33 = arith.constant 128 : i32
    %117 = vector.broadcast %c128_i32_33 : i32 to vector<8x128xi32>
    %118 = arith.select %116, %6, %117 : vector<8x128xi1>, vector<8x128xi32>
    %cst_34 = arith.constant dense<2147483647> : vector<8xi32>
    %119 = vector.multi_reduction <minsi>, %118, %cst_34 [1] : vector<8x128xi32> to vector<8xi32>
    %120 = vector.shape_cast %119 : vector<8xi32> to vector<8x1xi32>
    %121 = vector.broadcast %120 : vector<8x1xi32> to vector<8x128xi32>
    %122 = arith.cmpi eq, %6, %121 : vector<8x128xi32>
    %123 = arith.extui %122 : vector<8x128xi1> to vector<8x128xi32>
    %124 = arith.sitofp %123 : vector<8x128xi32> to vector<8x128xf32>
    %cst_35 = arith.constant 0.000000e+00 : f32
    %125 = vector.broadcast %cst_35 : f32 to vector<8x128xf32>
    %126 = arith.mulf %1, %124 : vector<8x128xf32>
    %cst_36 = arith.constant dense<0.000000e+00> : vector<8xf32>
    %127 = vector.multi_reduction <add>, %126, %cst_36 [1] : vector<8x128xf32> to vector<8xf32>
    %128 = vector.shape_cast %127 : vector<8xf32> to vector<8x1xf32>
    %129 = vector.broadcast %128 : vector<8x1xf32> to vector<8x128xf32>
    %130 = arith.subf %1, %129 : vector<8x128xf32>
    %131 = arith.mulf %130, %130 : vector<8x128xf32>
    %132 = arith.addf %125, %131 : vector<8x128xf32>
    %133 = arith.mulf %3, %124 : vector<8x128xf32>
    %cst_37 = arith.constant dense<0.000000e+00> : vector<8xf32>
    %134 = vector.multi_reduction <add>, %133, %cst_37 [1] : vector<8x128xf32> to vector<8xf32>
    %135 = vector.shape_cast %134 : vector<8xf32> to vector<8x1xf32>
    %136 = vector.broadcast %135 : vector<8x1xf32> to vector<8x128xf32>
    %137 = arith.subf %3, %136 : vector<8x128xf32>
    %138 = arith.mulf %137, %137 : vector<8x128xf32>
    %139 = arith.addf %132, %138 : vector<8x128xf32>
    %140 = arith.mulf %5, %124 : vector<8x128xf32>
    %cst_38 = arith.constant dense<0.000000e+00> : vector<8xf32>
    %141 = vector.multi_reduction <add>, %140, %cst_38 [1] : vector<8x128xf32> to vector<8xf32>
    %142 = vector.shape_cast %141 : vector<8xf32> to vector<8x1xf32>
    %143 = vector.broadcast %142 : vector<8x1xf32> to vector<8x128xf32>
    %144 = arith.subf %5, %143 : vector<8x128xf32>
    %145 = arith.mulf %144, %144 : vector<8x128xf32>
    %146 = arith.addf %139, %145 : vector<8x128xf32>
    %cst_39 = arith.constant 9.99999984E+17 : f32
    %147 = vector.broadcast %cst_39 : f32 to vector<8x128xf32>
    %148 = arith.select %122, %147, %146 : vector<8x128xi1>, vector<8x128xf32>
    %149 = arith.minimumf %112, %146 : vector<8x128xf32>
    %cst_40 = arith.constant dense<0xFF800000> : vector<8xf32>
    %150 = vector.multi_reduction <maximumf>, %149, %cst_40 [1] : vector<8x128xf32> to vector<8xf32>
    %151 = vector.shape_cast %150 : vector<8xf32> to vector<8x1xf32>
    %152 = vector.broadcast %151 : vector<8x1xf32> to vector<8x128xf32>
    %153 = arith.cmpf oeq, %149, %152 : vector<8x128xf32>
    %c128_i32_41 = arith.constant 128 : i32
    %154 = vector.broadcast %c128_i32_41 : i32 to vector<8x128xi32>
    %155 = arith.select %153, %6, %154 : vector<8x128xi1>, vector<8x128xi32>
    %cst_42 = arith.constant dense<2147483647> : vector<8xi32>
    %156 = vector.multi_reduction <minsi>, %155, %cst_42 [1] : vector<8x128xi32> to vector<8xi32>
    %157 = vector.shape_cast %156 : vector<8xi32> to vector<8x1xi32>
    %158 = vector.broadcast %157 : vector<8x1xi32> to vector<8x128xi32>
    %159 = arith.cmpi eq, %6, %158 : vector<8x128xi32>
    %160 = arith.extui %159 : vector<8x128xi1> to vector<8x128xi32>
    %161 = arith.sitofp %160 : vector<8x128xi32> to vector<8x128xf32>
    %cst_43 = arith.constant 0.000000e+00 : f32
    %162 = vector.broadcast %cst_43 : f32 to vector<8x128xf32>
    %163 = arith.mulf %1, %161 : vector<8x128xf32>
    %cst_44 = arith.constant dense<0.000000e+00> : vector<8xf32>
    %164 = vector.multi_reduction <add>, %163, %cst_44 [1] : vector<8x128xf32> to vector<8xf32>
    %165 = vector.shape_cast %164 : vector<8xf32> to vector<8x1xf32>
    %166 = vector.broadcast %165 : vector<8x1xf32> to vector<8x128xf32>
    %167 = arith.subf %1, %166 : vector<8x128xf32>
    %168 = arith.mulf %167, %167 : vector<8x128xf32>
    %169 = arith.addf %162, %168 : vector<8x128xf32>
    %170 = arith.mulf %3, %161 : vector<8x128xf32>
    %cst_45 = arith.constant dense<0.000000e+00> : vector<8xf32>
    %171 = vector.multi_reduction <add>, %170, %cst_45 [1] : vector<8x128xf32> to vector<8xf32>
    %172 = vector.shape_cast %171 : vector<8xf32> to vector<8x1xf32>
    %173 = vector.broadcast %172 : vector<8x1xf32> to vector<8x128xf32>
    %174 = arith.subf %3, %173 : vector<8x128xf32>
    %175 = arith.mulf %174, %174 : vector<8x128xf32>
    %176 = arith.addf %169, %175 : vector<8x128xf32>
    %177 = arith.mulf %5, %161 : vector<8x128xf32>
    %cst_46 = arith.constant dense<0.000000e+00> : vector<8xf32>
    %178 = vector.multi_reduction <add>, %177, %cst_46 [1] : vector<8x128xf32> to vector<8xf32>
    %179 = vector.shape_cast %178 : vector<8xf32> to vector<8x1xf32>
    %180 = vector.broadcast %179 : vector<8x1xf32> to vector<8x128xf32>
    %181 = arith.subf %5, %180 : vector<8x128xf32>
    %182 = arith.mulf %181, %181 : vector<8x128xf32>
    %183 = arith.addf %176, %182 : vector<8x128xf32>
    %cst_47 = arith.constant 9.99999984E+17 : f32
    %184 = vector.broadcast %cst_47 : f32 to vector<8x128xf32>
    %185 = arith.select %159, %184, %183 : vector<8x128xi1>, vector<8x128xf32>
    %186 = arith.minimumf %149, %183 : vector<8x128xf32>
    %cst_48 = arith.constant dense<0xFF800000> : vector<8xf32>
    %187 = vector.multi_reduction <maximumf>, %186, %cst_48 [1] : vector<8x128xf32> to vector<8xf32>
    %188 = vector.shape_cast %187 : vector<8xf32> to vector<8x1xf32>
    %189 = vector.broadcast %188 : vector<8x1xf32> to vector<8x128xf32>
    %190 = arith.cmpf oeq, %186, %189 : vector<8x128xf32>
    %c128_i32_49 = arith.constant 128 : i32
    %191 = vector.broadcast %c128_i32_49 : i32 to vector<8x128xi32>
    %192 = arith.select %190, %6, %191 : vector<8x128xi1>, vector<8x128xi32>
    %cst_50 = arith.constant dense<2147483647> : vector<8xi32>
    %193 = vector.multi_reduction <minsi>, %192, %cst_50 [1] : vector<8x128xi32> to vector<8xi32>
    %194 = vector.shape_cast %193 : vector<8xi32> to vector<8x1xi32>
    %195 = vector.broadcast %194 : vector<8x1xi32> to vector<8x128xi32>
    %196 = arith.cmpi eq, %6, %195 : vector<8x128xi32>
    %197 = arith.extui %196 : vector<8x128xi1> to vector<8x128xi32>
    %198 = arith.sitofp %197 : vector<8x128xi32> to vector<8x128xf32>
    %cst_51 = arith.constant 0.000000e+00 : f32
    %199 = vector.broadcast %cst_51 : f32 to vector<8x128xf32>
    %200 = arith.mulf %1, %198 : vector<8x128xf32>
    %cst_52 = arith.constant dense<0.000000e+00> : vector<8xf32>
    %201 = vector.multi_reduction <add>, %200, %cst_52 [1] : vector<8x128xf32> to vector<8xf32>
    %202 = vector.shape_cast %201 : vector<8xf32> to vector<8x1xf32>
    %203 = vector.broadcast %202 : vector<8x1xf32> to vector<8x128xf32>
    %204 = arith.subf %1, %203 : vector<8x128xf32>
    %205 = arith.mulf %204, %204 : vector<8x128xf32>
    %206 = arith.addf %199, %205 : vector<8x128xf32>
    %207 = arith.mulf %3, %198 : vector<8x128xf32>
    %cst_53 = arith.constant dense<0.000000e+00> : vector<8xf32>
    %208 = vector.multi_reduction <add>, %207, %cst_53 [1] : vector<8x128xf32> to vector<8xf32>
    %209 = vector.shape_cast %208 : vector<8xf32> to vector<8x1xf32>
    %210 = vector.broadcast %209 : vector<8x1xf32> to vector<8x128xf32>
    %211 = arith.subf %3, %210 : vector<8x128xf32>
    %212 = arith.mulf %211, %211 : vector<8x128xf32>
    %213 = arith.addf %206, %212 : vector<8x128xf32>
    %214 = arith.mulf %5, %198 : vector<8x128xf32>
    %cst_54 = arith.constant dense<0.000000e+00> : vector<8xf32>
    %215 = vector.multi_reduction <add>, %214, %cst_54 [1] : vector<8x128xf32> to vector<8xf32>
    %216 = vector.shape_cast %215 : vector<8xf32> to vector<8x1xf32>
    %217 = vector.broadcast %216 : vector<8x1xf32> to vector<8x128xf32>
    %218 = arith.subf %5, %217 : vector<8x128xf32>
    %219 = arith.mulf %218, %218 : vector<8x128xf32>
    %220 = arith.addf %213, %219 : vector<8x128xf32>
    %cst_55 = arith.constant 9.99999984E+17 : f32
    %221 = vector.broadcast %cst_55 : f32 to vector<8x128xf32>
    %222 = arith.select %196, %221, %220 : vector<8x128xi1>, vector<8x128xf32>
    %223 = arith.minimumf %186, %220 : vector<8x128xf32>
    %cst_56 = arith.constant dense<0xFF800000> : vector<8xf32>
    %224 = vector.multi_reduction <maximumf>, %223, %cst_56 [1] : vector<8x128xf32> to vector<8xf32>
    %225 = vector.shape_cast %224 : vector<8xf32> to vector<8x1xf32>
    %226 = vector.broadcast %225 : vector<8x1xf32> to vector<8x128xf32>
    %227 = arith.cmpf oeq, %223, %226 : vector<8x128xf32>
    %c128_i32_57 = arith.constant 128 : i32
    %228 = vector.broadcast %c128_i32_57 : i32 to vector<8x128xi32>
    %229 = arith.select %227, %6, %228 : vector<8x128xi1>, vector<8x128xi32>
    %cst_58 = arith.constant dense<2147483647> : vector<8xi32>
    %230 = vector.multi_reduction <minsi>, %229, %cst_58 [1] : vector<8x128xi32> to vector<8xi32>
    %231 = vector.shape_cast %230 : vector<8xi32> to vector<8x1xi32>
    %232 = vector.broadcast %231 : vector<8x1xi32> to vector<8x128xi32>
    %233 = arith.cmpi eq, %6, %232 : vector<8x128xi32>
    %234 = arith.extui %233 : vector<8x128xi1> to vector<8x128xi32>
    %235 = arith.sitofp %234 : vector<8x128xi32> to vector<8x128xf32>
    %cst_59 = arith.constant 0.000000e+00 : f32
    %236 = vector.broadcast %cst_59 : f32 to vector<8x128xf32>
    %237 = arith.mulf %1, %235 : vector<8x128xf32>
    %cst_60 = arith.constant dense<0.000000e+00> : vector<8xf32>
    %238 = vector.multi_reduction <add>, %237, %cst_60 [1] : vector<8x128xf32> to vector<8xf32>
    %239 = vector.shape_cast %238 : vector<8xf32> to vector<8x1xf32>
    %240 = vector.broadcast %239 : vector<8x1xf32> to vector<8x128xf32>
    %241 = arith.subf %1, %240 : vector<8x128xf32>
    %242 = arith.mulf %241, %241 : vector<8x128xf32>
    %243 = arith.addf %236, %242 : vector<8x128xf32>
    %244 = arith.mulf %3, %235 : vector<8x128xf32>
    %cst_61 = arith.constant dense<0.000000e+00> : vector<8xf32>
    %245 = vector.multi_reduction <add>, %244, %cst_61 [1] : vector<8x128xf32> to vector<8xf32>
    %246 = vector.shape_cast %245 : vector<8xf32> to vector<8x1xf32>
    %247 = vector.broadcast %246 : vector<8x1xf32> to vector<8x128xf32>
    %248 = arith.subf %3, %247 : vector<8x128xf32>
    %249 = arith.mulf %248, %248 : vector<8x128xf32>
    %250 = arith.addf %243, %249 : vector<8x128xf32>
    %251 = arith.mulf %5, %235 : vector<8x128xf32>
    %cst_62 = arith.constant dense<0.000000e+00> : vector<8xf32>
    %252 = vector.multi_reduction <add>, %251, %cst_62 [1] : vector<8x128xf32> to vector<8xf32>
    %253 = vector.shape_cast %252 : vector<8xf32> to vector<8x1xf32>
    %254 = vector.broadcast %253 : vector<8x1xf32> to vector<8x128xf32>
    %255 = arith.subf %5, %254 : vector<8x128xf32>
    %256 = arith.mulf %255, %255 : vector<8x128xf32>
    %257 = arith.addf %250, %256 : vector<8x128xf32>
    %cst_63 = arith.constant 9.99999984E+17 : f32
    %258 = vector.broadcast %cst_63 : f32 to vector<8x128xf32>
    %259 = arith.select %233, %258, %257 : vector<8x128xi1>, vector<8x128xf32>
    %260 = arith.minimumf %223, %257 : vector<8x128xf32>
    %cst_64 = arith.constant dense<0xFF800000> : vector<8xf32>
    %261 = vector.multi_reduction <maximumf>, %260, %cst_64 [1] : vector<8x128xf32> to vector<8xf32>
    %262 = vector.shape_cast %261 : vector<8xf32> to vector<8x1xf32>
    %263 = vector.broadcast %262 : vector<8x1xf32> to vector<8x128xf32>
    %264 = arith.cmpf oeq, %260, %263 : vector<8x128xf32>
    %c128_i32_65 = arith.constant 128 : i32
    %265 = vector.broadcast %c128_i32_65 : i32 to vector<8x128xi32>
    %266 = arith.select %264, %6, %265 : vector<8x128xi1>, vector<8x128xi32>
    %cst_66 = arith.constant dense<2147483647> : vector<8xi32>
    %267 = vector.multi_reduction <minsi>, %266, %cst_66 [1] : vector<8x128xi32> to vector<8xi32>
    %268 = vector.shape_cast %267 : vector<8xi32> to vector<8x1xi32>
    %269 = vector.broadcast %268 : vector<8x1xi32> to vector<8x128xi32>
    %270 = arith.cmpi eq, %6, %269 : vector<8x128xi32>
    %271 = arith.extui %270 : vector<8x128xi1> to vector<8x128xi32>
    %272 = arith.sitofp %271 : vector<8x128xi32> to vector<8x128xf32>
    %cst_67 = arith.constant 0.000000e+00 : f32
    %273 = vector.broadcast %cst_67 : f32 to vector<8x128xf32>
    %274 = arith.mulf %1, %272 : vector<8x128xf32>
    %cst_68 = arith.constant dense<0.000000e+00> : vector<8xf32>
    %275 = vector.multi_reduction <add>, %274, %cst_68 [1] : vector<8x128xf32> to vector<8xf32>
    %276 = vector.shape_cast %275 : vector<8xf32> to vector<8x1xf32>
    %277 = vector.broadcast %276 : vector<8x1xf32> to vector<8x128xf32>
    %278 = arith.subf %1, %277 : vector<8x128xf32>
    %279 = arith.mulf %278, %278 : vector<8x128xf32>
    %280 = arith.addf %273, %279 : vector<8x128xf32>
    %281 = arith.mulf %3, %272 : vector<8x128xf32>
    %cst_69 = arith.constant dense<0.000000e+00> : vector<8xf32>
    %282 = vector.multi_reduction <add>, %281, %cst_69 [1] : vector<8x128xf32> to vector<8xf32>
    %283 = vector.shape_cast %282 : vector<8xf32> to vector<8x1xf32>
    %284 = vector.broadcast %283 : vector<8x1xf32> to vector<8x128xf32>
    %285 = arith.subf %3, %284 : vector<8x128xf32>
    %286 = arith.mulf %285, %285 : vector<8x128xf32>
    %287 = arith.addf %280, %286 : vector<8x128xf32>
    %288 = arith.mulf %5, %272 : vector<8x128xf32>
    %cst_70 = arith.constant dense<0.000000e+00> : vector<8xf32>
    %289 = vector.multi_reduction <add>, %288, %cst_70 [1] : vector<8x128xf32> to vector<8xf32>
    %290 = vector.shape_cast %289 : vector<8xf32> to vector<8x1xf32>
    %291 = vector.broadcast %290 : vector<8x1xf32> to vector<8x128xf32>
    %292 = arith.subf %5, %291 : vector<8x128xf32>
    %293 = arith.mulf %292, %292 : vector<8x128xf32>
    %294 = arith.addf %287, %293 : vector<8x128xf32>
    %cst_71 = arith.constant 9.99999984E+17 : f32
    %295 = vector.broadcast %cst_71 : f32 to vector<8x128xf32>
    %296 = arith.select %270, %295, %294 : vector<8x128xi1>, vector<8x128xf32>
    %297 = arith.minimumf %260, %294 : vector<8x128xf32>
    %cst_72 = arith.constant dense<0xFF800000> : vector<8xf32>
    %298 = vector.multi_reduction <maximumf>, %297, %cst_72 [1] : vector<8x128xf32> to vector<8xf32>
    %299 = vector.shape_cast %298 : vector<8xf32> to vector<8x1xf32>
    %300 = vector.broadcast %299 : vector<8x1xf32> to vector<8x128xf32>
    %301 = arith.cmpf oeq, %297, %300 : vector<8x128xf32>
    %c128_i32_73 = arith.constant 128 : i32
    %302 = vector.broadcast %c128_i32_73 : i32 to vector<8x128xi32>
    %303 = arith.select %301, %6, %302 : vector<8x128xi1>, vector<8x128xi32>
    %cst_74 = arith.constant dense<2147483647> : vector<8xi32>
    %304 = vector.multi_reduction <minsi>, %303, %cst_74 [1] : vector<8x128xi32> to vector<8xi32>
    %305 = vector.shape_cast %304 : vector<8xi32> to vector<8x1xi32>
    %306 = vector.broadcast %305 : vector<8x1xi32> to vector<8x128xi32>
    %307 = arith.cmpi eq, %6, %306 : vector<8x128xi32>
    %308 = arith.extui %307 : vector<8x128xi1> to vector<8x128xi32>
    %309 = arith.sitofp %308 : vector<8x128xi32> to vector<8x128xf32>
    %cst_75 = arith.constant 0.000000e+00 : f32
    %310 = vector.broadcast %cst_75 : f32 to vector<8x128xf32>
    %311 = arith.mulf %1, %309 : vector<8x128xf32>
    %cst_76 = arith.constant dense<0.000000e+00> : vector<8xf32>
    %312 = vector.multi_reduction <add>, %311, %cst_76 [1] : vector<8x128xf32> to vector<8xf32>
    %313 = vector.shape_cast %312 : vector<8xf32> to vector<8x1xf32>
    %314 = vector.broadcast %313 : vector<8x1xf32> to vector<8x128xf32>
    %315 = arith.subf %1, %314 : vector<8x128xf32>
    %316 = arith.mulf %315, %315 : vector<8x128xf32>
    %317 = arith.addf %310, %316 : vector<8x128xf32>
    %318 = arith.mulf %3, %309 : vector<8x128xf32>
    %cst_77 = arith.constant dense<0.000000e+00> : vector<8xf32>
    %319 = vector.multi_reduction <add>, %318, %cst_77 [1] : vector<8x128xf32> to vector<8xf32>
    %320 = vector.shape_cast %319 : vector<8xf32> to vector<8x1xf32>
    %321 = vector.broadcast %320 : vector<8x1xf32> to vector<8x128xf32>
    %322 = arith.subf %3, %321 : vector<8x128xf32>
    %323 = arith.mulf %322, %322 : vector<8x128xf32>
    %324 = arith.addf %317, %323 : vector<8x128xf32>
    %325 = arith.mulf %5, %309 : vector<8x128xf32>
    %cst_78 = arith.constant dense<0.000000e+00> : vector<8xf32>
    %326 = vector.multi_reduction <add>, %325, %cst_78 [1] : vector<8x128xf32> to vector<8xf32>
    %327 = vector.shape_cast %326 : vector<8xf32> to vector<8x1xf32>
    %328 = vector.broadcast %327 : vector<8x1xf32> to vector<8x128xf32>
    %329 = arith.subf %5, %328 : vector<8x128xf32>
    %330 = arith.mulf %329, %329 : vector<8x128xf32>
    %331 = arith.addf %324, %330 : vector<8x128xf32>
    %cst_79 = arith.constant 9.99999984E+17 : f32
    %332 = vector.broadcast %cst_79 : f32 to vector<8x128xf32>
    %333 = arith.select %307, %332, %331 : vector<8x128xi1>, vector<8x128xf32>
    %334 = arith.minimumf %297, %331 : vector<8x128xf32>
    %cst_80 = arith.constant dense<0xFF800000> : vector<8xf32>
    %335 = vector.multi_reduction <maximumf>, %334, %cst_80 [1] : vector<8x128xf32> to vector<8xf32>
    %336 = vector.shape_cast %335 : vector<8xf32> to vector<8x1xf32>
    %337 = vector.broadcast %336 : vector<8x1xf32> to vector<8x128xf32>
    %338 = arith.cmpf oeq, %334, %337 : vector<8x128xf32>
    %c128_i32_81 = arith.constant 128 : i32
    %339 = vector.broadcast %c128_i32_81 : i32 to vector<8x128xi32>
    %340 = arith.select %338, %6, %339 : vector<8x128xi1>, vector<8x128xi32>
    %cst_82 = arith.constant dense<2147483647> : vector<8xi32>
    %341 = vector.multi_reduction <minsi>, %340, %cst_82 [1] : vector<8x128xi32> to vector<8xi32>
    %342 = vector.shape_cast %341 : vector<8xi32> to vector<8x1xi32>
    %343 = vector.broadcast %342 : vector<8x1xi32> to vector<8x128xi32>
    %344 = arith.cmpi eq, %6, %343 : vector<8x128xi32>
    %345 = arith.extui %344 : vector<8x128xi1> to vector<8x128xi32>
    %346 = arith.sitofp %345 : vector<8x128xi32> to vector<8x128xf32>
    %cst_83 = arith.constant 0.000000e+00 : f32
    %347 = vector.broadcast %cst_83 : f32 to vector<8x128xf32>
    %348 = arith.mulf %1, %346 : vector<8x128xf32>
    %cst_84 = arith.constant dense<0.000000e+00> : vector<8xf32>
    %349 = vector.multi_reduction <add>, %348, %cst_84 [1] : vector<8x128xf32> to vector<8xf32>
    %350 = vector.shape_cast %349 : vector<8xf32> to vector<8x1xf32>
    %351 = vector.broadcast %350 : vector<8x1xf32> to vector<8x128xf32>
    %352 = arith.subf %1, %351 : vector<8x128xf32>
    %353 = arith.mulf %352, %352 : vector<8x128xf32>
    %354 = arith.addf %347, %353 : vector<8x128xf32>
    %355 = arith.mulf %3, %346 : vector<8x128xf32>
    %cst_85 = arith.constant dense<0.000000e+00> : vector<8xf32>
    %356 = vector.multi_reduction <add>, %355, %cst_85 [1] : vector<8x128xf32> to vector<8xf32>
    %357 = vector.shape_cast %356 : vector<8xf32> to vector<8x1xf32>
    %358 = vector.broadcast %357 : vector<8x1xf32> to vector<8x128xf32>
    %359 = arith.subf %3, %358 : vector<8x128xf32>
    %360 = arith.mulf %359, %359 : vector<8x128xf32>
    %361 = arith.addf %354, %360 : vector<8x128xf32>
    %362 = arith.mulf %5, %346 : vector<8x128xf32>
    %cst_86 = arith.constant dense<0.000000e+00> : vector<8xf32>
    %363 = vector.multi_reduction <add>, %362, %cst_86 [1] : vector<8x128xf32> to vector<8xf32>
    %364 = vector.shape_cast %363 : vector<8xf32> to vector<8x1xf32>
    %365 = vector.broadcast %364 : vector<8x1xf32> to vector<8x128xf32>
    %366 = arith.subf %5, %365 : vector<8x128xf32>
    %367 = arith.mulf %366, %366 : vector<8x128xf32>
    %368 = arith.addf %361, %367 : vector<8x128xf32>
    %cst_87 = arith.constant 9.99999984E+17 : f32
    %369 = vector.broadcast %cst_87 : f32 to vector<8x128xf32>
    %370 = arith.select %344, %369, %368 : vector<8x128xi1>, vector<8x128xf32>
    %371 = arith.minimumf %334, %368 : vector<8x128xf32>
    %cst_88 = arith.constant dense<0xFF800000> : vector<8xf32>
    %372 = vector.multi_reduction <maximumf>, %371, %cst_88 [1] : vector<8x128xf32> to vector<8xf32>
    %373 = vector.shape_cast %372 : vector<8xf32> to vector<8x1xf32>
    %374 = vector.broadcast %373 : vector<8x1xf32> to vector<8x128xf32>
    %375 = arith.cmpf oeq, %371, %374 : vector<8x128xf32>
    %c128_i32_89 = arith.constant 128 : i32
    %376 = vector.broadcast %c128_i32_89 : i32 to vector<8x128xi32>
    %377 = arith.select %375, %6, %376 : vector<8x128xi1>, vector<8x128xi32>
    %cst_90 = arith.constant dense<2147483647> : vector<8xi32>
    %378 = vector.multi_reduction <minsi>, %377, %cst_90 [1] : vector<8x128xi32> to vector<8xi32>
    %379 = vector.shape_cast %378 : vector<8xi32> to vector<8x1xi32>
    %380 = vector.broadcast %379 : vector<8x1xi32> to vector<8x128xi32>
    %381 = arith.cmpi eq, %6, %380 : vector<8x128xi32>
    %382 = arith.extui %381 : vector<8x128xi1> to vector<8x128xi32>
    %383 = arith.sitofp %382 : vector<8x128xi32> to vector<8x128xf32>
    %cst_91 = arith.constant 0.000000e+00 : f32
    %384 = vector.broadcast %cst_91 : f32 to vector<8x128xf32>
    %385 = arith.mulf %1, %383 : vector<8x128xf32>
    %cst_92 = arith.constant dense<0.000000e+00> : vector<8xf32>
    %386 = vector.multi_reduction <add>, %385, %cst_92 [1] : vector<8x128xf32> to vector<8xf32>
    %387 = vector.shape_cast %386 : vector<8xf32> to vector<8x1xf32>
    %388 = vector.broadcast %387 : vector<8x1xf32> to vector<8x128xf32>
    %389 = arith.subf %1, %388 : vector<8x128xf32>
    %390 = arith.mulf %389, %389 : vector<8x128xf32>
    %391 = arith.addf %384, %390 : vector<8x128xf32>
    %392 = arith.mulf %3, %383 : vector<8x128xf32>
    %cst_93 = arith.constant dense<0.000000e+00> : vector<8xf32>
    %393 = vector.multi_reduction <add>, %392, %cst_93 [1] : vector<8x128xf32> to vector<8xf32>
    %394 = vector.shape_cast %393 : vector<8xf32> to vector<8x1xf32>
    %395 = vector.broadcast %394 : vector<8x1xf32> to vector<8x128xf32>
    %396 = arith.subf %3, %395 : vector<8x128xf32>
    %397 = arith.mulf %396, %396 : vector<8x128xf32>
    %398 = arith.addf %391, %397 : vector<8x128xf32>
    %399 = arith.mulf %5, %383 : vector<8x128xf32>
    %cst_94 = arith.constant dense<0.000000e+00> : vector<8xf32>
    %400 = vector.multi_reduction <add>, %399, %cst_94 [1] : vector<8x128xf32> to vector<8xf32>
    %401 = vector.shape_cast %400 : vector<8xf32> to vector<8x1xf32>
    %402 = vector.broadcast %401 : vector<8x1xf32> to vector<8x128xf32>
    %403 = arith.subf %5, %402 : vector<8x128xf32>
    %404 = arith.mulf %403, %403 : vector<8x128xf32>
    %405 = arith.addf %398, %404 : vector<8x128xf32>
    %cst_95 = arith.constant 9.99999984E+17 : f32
    %406 = vector.broadcast %cst_95 : f32 to vector<8x128xf32>
    %407 = arith.select %381, %406, %405 : vector<8x128xi1>, vector<8x128xf32>
    %408 = arith.minimumf %371, %405 : vector<8x128xf32>
    %cst_96 = arith.constant dense<0xFF800000> : vector<8xf32>
    %409 = vector.multi_reduction <maximumf>, %408, %cst_96 [1] : vector<8x128xf32> to vector<8xf32>
    %410 = vector.shape_cast %409 : vector<8xf32> to vector<8x1xf32>
    %411 = vector.broadcast %410 : vector<8x1xf32> to vector<8x128xf32>
    %412 = arith.cmpf oeq, %408, %411 : vector<8x128xf32>
    %c128_i32_97 = arith.constant 128 : i32
    %413 = vector.broadcast %c128_i32_97 : i32 to vector<8x128xi32>
    %414 = arith.select %412, %6, %413 : vector<8x128xi1>, vector<8x128xi32>
    %cst_98 = arith.constant dense<2147483647> : vector<8xi32>
    %415 = vector.multi_reduction <minsi>, %414, %cst_98 [1] : vector<8x128xi32> to vector<8xi32>
    %416 = vector.shape_cast %415 : vector<8xi32> to vector<8x1xi32>
    %417 = vector.broadcast %416 : vector<8x1xi32> to vector<8x128xi32>
    %418 = arith.cmpi eq, %6, %417 : vector<8x128xi32>
    %419 = arith.extui %418 : vector<8x128xi1> to vector<8x128xi32>
    %420 = arith.sitofp %419 : vector<8x128xi32> to vector<8x128xf32>
    %cst_99 = arith.constant 0.000000e+00 : f32
    %421 = vector.broadcast %cst_99 : f32 to vector<8x128xf32>
    %422 = arith.mulf %1, %420 : vector<8x128xf32>
    %cst_100 = arith.constant dense<0.000000e+00> : vector<8xf32>
    %423 = vector.multi_reduction <add>, %422, %cst_100 [1] : vector<8x128xf32> to vector<8xf32>
    %424 = vector.shape_cast %423 : vector<8xf32> to vector<8x1xf32>
    %425 = vector.broadcast %424 : vector<8x1xf32> to vector<8x128xf32>
    %426 = arith.subf %1, %425 : vector<8x128xf32>
    %427 = arith.mulf %426, %426 : vector<8x128xf32>
    %428 = arith.addf %421, %427 : vector<8x128xf32>
    %429 = arith.mulf %3, %420 : vector<8x128xf32>
    %cst_101 = arith.constant dense<0.000000e+00> : vector<8xf32>
    %430 = vector.multi_reduction <add>, %429, %cst_101 [1] : vector<8x128xf32> to vector<8xf32>
    %431 = vector.shape_cast %430 : vector<8xf32> to vector<8x1xf32>
    %432 = vector.broadcast %431 : vector<8x1xf32> to vector<8x128xf32>
    %433 = arith.subf %3, %432 : vector<8x128xf32>
    %434 = arith.mulf %433, %433 : vector<8x128xf32>
    %435 = arith.addf %428, %434 : vector<8x128xf32>
    %436 = arith.mulf %5, %420 : vector<8x128xf32>
    %cst_102 = arith.constant dense<0.000000e+00> : vector<8xf32>
    %437 = vector.multi_reduction <add>, %436, %cst_102 [1] : vector<8x128xf32> to vector<8xf32>
    %438 = vector.shape_cast %437 : vector<8xf32> to vector<8x1xf32>
    %439 = vector.broadcast %438 : vector<8x1xf32> to vector<8x128xf32>
    %440 = arith.subf %5, %439 : vector<8x128xf32>
    %441 = arith.mulf %440, %440 : vector<8x128xf32>
    %442 = arith.addf %435, %441 : vector<8x128xf32>
    %cst_103 = arith.constant 9.99999984E+17 : f32
    %443 = vector.broadcast %cst_103 : f32 to vector<8x128xf32>
    %444 = arith.select %418, %443, %442 : vector<8x128xi1>, vector<8x128xf32>
    %445 = arith.minimumf %408, %442 : vector<8x128xf32>
    %cst_104 = arith.constant dense<0xFF800000> : vector<8xf32>
    %446 = vector.multi_reduction <maximumf>, %445, %cst_104 [1] : vector<8x128xf32> to vector<8xf32>
    %447 = vector.shape_cast %446 : vector<8xf32> to vector<8x1xf32>
    %448 = vector.broadcast %447 : vector<8x1xf32> to vector<8x128xf32>
    %449 = arith.cmpf oeq, %445, %448 : vector<8x128xf32>
    %c128_i32_105 = arith.constant 128 : i32
    %450 = vector.broadcast %c128_i32_105 : i32 to vector<8x128xi32>
    %451 = arith.select %449, %6, %450 : vector<8x128xi1>, vector<8x128xi32>
    %cst_106 = arith.constant dense<2147483647> : vector<8xi32>
    %452 = vector.multi_reduction <minsi>, %451, %cst_106 [1] : vector<8x128xi32> to vector<8xi32>
    %453 = vector.shape_cast %452 : vector<8xi32> to vector<8x1xi32>
    %454 = vector.broadcast %453 : vector<8x1xi32> to vector<8x128xi32>
    %455 = arith.cmpi eq, %6, %454 : vector<8x128xi32>
    %456 = arith.extui %455 : vector<8x128xi1> to vector<8x128xi32>
    %457 = arith.sitofp %456 : vector<8x128xi32> to vector<8x128xf32>
    %cst_107 = arith.constant 0.000000e+00 : f32
    %458 = vector.broadcast %cst_107 : f32 to vector<8x128xf32>
    %459 = arith.mulf %1, %457 : vector<8x128xf32>
    %cst_108 = arith.constant dense<0.000000e+00> : vector<8xf32>
    %460 = vector.multi_reduction <add>, %459, %cst_108 [1] : vector<8x128xf32> to vector<8xf32>
    %461 = vector.shape_cast %460 : vector<8xf32> to vector<8x1xf32>
    %462 = vector.broadcast %461 : vector<8x1xf32> to vector<8x128xf32>
    %463 = arith.subf %1, %462 : vector<8x128xf32>
    %464 = arith.mulf %463, %463 : vector<8x128xf32>
    %465 = arith.addf %458, %464 : vector<8x128xf32>
    %466 = arith.mulf %3, %457 : vector<8x128xf32>
    %cst_109 = arith.constant dense<0.000000e+00> : vector<8xf32>
    %467 = vector.multi_reduction <add>, %466, %cst_109 [1] : vector<8x128xf32> to vector<8xf32>
    %468 = vector.shape_cast %467 : vector<8xf32> to vector<8x1xf32>
    %469 = vector.broadcast %468 : vector<8x1xf32> to vector<8x128xf32>
    %470 = arith.subf %3, %469 : vector<8x128xf32>
    %471 = arith.mulf %470, %470 : vector<8x128xf32>
    %472 = arith.addf %465, %471 : vector<8x128xf32>
    %473 = arith.mulf %5, %457 : vector<8x128xf32>
    %cst_110 = arith.constant dense<0.000000e+00> : vector<8xf32>
    %474 = vector.multi_reduction <add>, %473, %cst_110 [1] : vector<8x128xf32> to vector<8xf32>
    %475 = vector.shape_cast %474 : vector<8xf32> to vector<8x1xf32>
    %476 = vector.broadcast %475 : vector<8x1xf32> to vector<8x128xf32>
    %477 = arith.subf %5, %476 : vector<8x128xf32>
    %478 = arith.mulf %477, %477 : vector<8x128xf32>
    %479 = arith.addf %472, %478 : vector<8x128xf32>
    %cst_111 = arith.constant 9.99999984E+17 : f32
    %480 = vector.broadcast %cst_111 : f32 to vector<8x128xf32>
    %481 = arith.select %455, %480, %479 : vector<8x128xi1>, vector<8x128xf32>
    %482 = arith.minimumf %445, %479 : vector<8x128xf32>
    %cst_112 = arith.constant dense<0xFF800000> : vector<8xf32>
    %483 = vector.multi_reduction <maximumf>, %482, %cst_112 [1] : vector<8x128xf32> to vector<8xf32>
    %484 = vector.shape_cast %483 : vector<8xf32> to vector<8x1xf32>
    %485 = vector.broadcast %484 : vector<8x1xf32> to vector<8x128xf32>
    %486 = arith.cmpf oeq, %482, %485 : vector<8x128xf32>
    %c128_i32_113 = arith.constant 128 : i32
    %487 = vector.broadcast %c128_i32_113 : i32 to vector<8x128xi32>
    %488 = arith.select %486, %6, %487 : vector<8x128xi1>, vector<8x128xi32>
    %cst_114 = arith.constant dense<2147483647> : vector<8xi32>
    %489 = vector.multi_reduction <minsi>, %488, %cst_114 [1] : vector<8x128xi32> to vector<8xi32>
    %490 = vector.shape_cast %489 : vector<8xi32> to vector<8x1xi32>
    %491 = vector.broadcast %490 : vector<8x1xi32> to vector<8x128xi32>
    %492 = arith.cmpi eq, %6, %491 : vector<8x128xi32>
    %493 = arith.extui %492 : vector<8x128xi1> to vector<8x128xi32>
    %494 = arith.sitofp %493 : vector<8x128xi32> to vector<8x128xf32>
    %cst_115 = arith.constant 0.000000e+00 : f32
    %495 = vector.broadcast %cst_115 : f32 to vector<8x128xf32>
    %496 = arith.mulf %1, %494 : vector<8x128xf32>
    %cst_116 = arith.constant dense<0.000000e+00> : vector<8xf32>
    %497 = vector.multi_reduction <add>, %496, %cst_116 [1] : vector<8x128xf32> to vector<8xf32>
    %498 = vector.shape_cast %497 : vector<8xf32> to vector<8x1xf32>
    %499 = vector.broadcast %498 : vector<8x1xf32> to vector<8x128xf32>
    %500 = arith.subf %1, %499 : vector<8x128xf32>
    %501 = arith.mulf %500, %500 : vector<8x128xf32>
    %502 = arith.addf %495, %501 : vector<8x128xf32>
    %503 = arith.mulf %3, %494 : vector<8x128xf32>
    %cst_117 = arith.constant dense<0.000000e+00> : vector<8xf32>
    %504 = vector.multi_reduction <add>, %503, %cst_117 [1] : vector<8x128xf32> to vector<8xf32>
    %505 = vector.shape_cast %504 : vector<8xf32> to vector<8x1xf32>
    %506 = vector.broadcast %505 : vector<8x1xf32> to vector<8x128xf32>
    %507 = arith.subf %3, %506 : vector<8x128xf32>
    %508 = arith.mulf %507, %507 : vector<8x128xf32>
    %509 = arith.addf %502, %508 : vector<8x128xf32>
    %510 = arith.mulf %5, %494 : vector<8x128xf32>
    %cst_118 = arith.constant dense<0.000000e+00> : vector<8xf32>
    %511 = vector.multi_reduction <add>, %510, %cst_118 [1] : vector<8x128xf32> to vector<8xf32>
    %512 = vector.shape_cast %511 : vector<8xf32> to vector<8x1xf32>
    %513 = vector.broadcast %512 : vector<8x1xf32> to vector<8x128xf32>
    %514 = arith.subf %5, %513 : vector<8x128xf32>
    %515 = arith.mulf %514, %514 : vector<8x128xf32>
    %516 = arith.addf %509, %515 : vector<8x128xf32>
    %cst_119 = arith.constant 9.99999984E+17 : f32
    %517 = vector.broadcast %cst_119 : f32 to vector<8x128xf32>
    %518 = arith.select %492, %517, %516 : vector<8x128xi1>, vector<8x128xf32>
    %519 = arith.minimumf %482, %516 : vector<8x128xf32>
    %cst_120 = arith.constant dense<0xFF800000> : vector<8xf32>
    %520 = vector.multi_reduction <maximumf>, %519, %cst_120 [1] : vector<8x128xf32> to vector<8xf32>
    %521 = vector.shape_cast %520 : vector<8xf32> to vector<8x1xf32>
    %522 = vector.broadcast %521 : vector<8x1xf32> to vector<8x128xf32>
    %523 = arith.cmpf oeq, %519, %522 : vector<8x128xf32>
    %c128_i32_121 = arith.constant 128 : i32
    %524 = vector.broadcast %c128_i32_121 : i32 to vector<8x128xi32>
    %525 = arith.select %523, %6, %524 : vector<8x128xi1>, vector<8x128xi32>
    %cst_122 = arith.constant dense<2147483647> : vector<8xi32>
    %526 = vector.multi_reduction <minsi>, %525, %cst_122 [1] : vector<8x128xi32> to vector<8xi32>
    %527 = vector.shape_cast %526 : vector<8xi32> to vector<8x1xi32>
    %528 = vector.broadcast %527 : vector<8x1xi32> to vector<8x128xi32>
    %529 = arith.cmpi eq, %6, %528 : vector<8x128xi32>
    %530 = arith.extui %529 : vector<8x128xi1> to vector<8x128xi32>
    %531 = arith.sitofp %530 : vector<8x128xi32> to vector<8x128xf32>
    %cst_123 = arith.constant 0.000000e+00 : f32
    %532 = vector.broadcast %cst_123 : f32 to vector<8x128xf32>
    %533 = arith.mulf %1, %531 : vector<8x128xf32>
    %cst_124 = arith.constant dense<0.000000e+00> : vector<8xf32>
    %534 = vector.multi_reduction <add>, %533, %cst_124 [1] : vector<8x128xf32> to vector<8xf32>
    %535 = vector.shape_cast %534 : vector<8xf32> to vector<8x1xf32>
    %536 = vector.broadcast %535 : vector<8x1xf32> to vector<8x128xf32>
    %537 = arith.subf %1, %536 : vector<8x128xf32>
    %538 = arith.mulf %537, %537 : vector<8x128xf32>
    %539 = arith.addf %532, %538 : vector<8x128xf32>
    %540 = arith.mulf %3, %531 : vector<8x128xf32>
    %cst_125 = arith.constant dense<0.000000e+00> : vector<8xf32>
    %541 = vector.multi_reduction <add>, %540, %cst_125 [1] : vector<8x128xf32> to vector<8xf32>
    %542 = vector.shape_cast %541 : vector<8xf32> to vector<8x1xf32>
    %543 = vector.broadcast %542 : vector<8x1xf32> to vector<8x128xf32>
    %544 = arith.subf %3, %543 : vector<8x128xf32>
    %545 = arith.mulf %544, %544 : vector<8x128xf32>
    %546 = arith.addf %539, %545 : vector<8x128xf32>
    %547 = arith.mulf %5, %531 : vector<8x128xf32>
    %cst_126 = arith.constant dense<0.000000e+00> : vector<8xf32>
    %548 = vector.multi_reduction <add>, %547, %cst_126 [1] : vector<8x128xf32> to vector<8xf32>
    %549 = vector.shape_cast %548 : vector<8xf32> to vector<8x1xf32>
    %550 = vector.broadcast %549 : vector<8x1xf32> to vector<8x128xf32>
    %551 = arith.subf %5, %550 : vector<8x128xf32>
    %552 = arith.mulf %551, %551 : vector<8x128xf32>
    %553 = arith.addf %546, %552 : vector<8x128xf32>
    %cst_127 = arith.constant 9.99999984E+17 : f32
    %554 = vector.broadcast %cst_127 : f32 to vector<8x128xf32>
    %555 = arith.select %529, %554, %553 : vector<8x128xi1>, vector<8x128xf32>
    %556 = arith.minimumf %519, %553 : vector<8x128xf32>
    %cst_128 = arith.constant dense<0xFF800000> : vector<8xf32>
    %557 = vector.multi_reduction <maximumf>, %556, %cst_128 [1] : vector<8x128xf32> to vector<8xf32>
    %558 = vector.shape_cast %557 : vector<8xf32> to vector<8x1xf32>
    %559 = vector.broadcast %558 : vector<8x1xf32> to vector<8x128xf32>
    %560 = arith.cmpf oeq, %556, %559 : vector<8x128xf32>
    %c128_i32_129 = arith.constant 128 : i32
    %561 = vector.broadcast %c128_i32_129 : i32 to vector<8x128xi32>
    %562 = arith.select %560, %6, %561 : vector<8x128xi1>, vector<8x128xi32>
    %cst_130 = arith.constant dense<2147483647> : vector<8xi32>
    %563 = vector.multi_reduction <minsi>, %562, %cst_130 [1] : vector<8x128xi32> to vector<8xi32>
    %564 = vector.shape_cast %563 : vector<8xi32> to vector<8x1xi32>
    %565 = vector.broadcast %564 : vector<8x1xi32> to vector<8x128xi32>
    %566 = arith.cmpi eq, %6, %565 : vector<8x128xi32>
    %567 = arith.extui %566 : vector<8x128xi1> to vector<8x128xi32>
    %568 = arith.sitofp %567 : vector<8x128xi32> to vector<8x128xf32>
    %cst_131 = arith.constant 0.000000e+00 : f32
    %569 = vector.broadcast %cst_131 : f32 to vector<8x128xf32>
    %570 = arith.mulf %1, %568 : vector<8x128xf32>
    %cst_132 = arith.constant dense<0.000000e+00> : vector<8xf32>
    %571 = vector.multi_reduction <add>, %570, %cst_132 [1] : vector<8x128xf32> to vector<8xf32>
    %572 = vector.shape_cast %571 : vector<8xf32> to vector<8x1xf32>
    %573 = vector.broadcast %572 : vector<8x1xf32> to vector<8x128xf32>
    %574 = arith.subf %1, %573 : vector<8x128xf32>
    %575 = arith.mulf %574, %574 : vector<8x128xf32>
    %576 = arith.addf %569, %575 : vector<8x128xf32>
    %577 = arith.mulf %3, %568 : vector<8x128xf32>
    %cst_133 = arith.constant dense<0.000000e+00> : vector<8xf32>
    %578 = vector.multi_reduction <add>, %577, %cst_133 [1] : vector<8x128xf32> to vector<8xf32>
    %579 = vector.shape_cast %578 : vector<8xf32> to vector<8x1xf32>
    %580 = vector.broadcast %579 : vector<8x1xf32> to vector<8x128xf32>
    %581 = arith.subf %3, %580 : vector<8x128xf32>
    %582 = arith.mulf %581, %581 : vector<8x128xf32>
    %583 = arith.addf %576, %582 : vector<8x128xf32>
    %584 = arith.mulf %5, %568 : vector<8x128xf32>
    %cst_134 = arith.constant dense<0.000000e+00> : vector<8xf32>
    %585 = vector.multi_reduction <add>, %584, %cst_134 [1] : vector<8x128xf32> to vector<8xf32>
    %586 = vector.shape_cast %585 : vector<8xf32> to vector<8x1xf32>
    %587 = vector.broadcast %586 : vector<8x1xf32> to vector<8x128xf32>
    %588 = arith.subf %5, %587 : vector<8x128xf32>
    %589 = arith.mulf %588, %588 : vector<8x128xf32>
    %590 = arith.addf %583, %589 : vector<8x128xf32>
    %cst_135 = arith.constant 9.99999984E+17 : f32
    %591 = vector.broadcast %cst_135 : f32 to vector<8x128xf32>
    %592 = arith.select %566, %591, %590 : vector<8x128xi1>, vector<8x128xf32>
    %593 = arith.minimumf %556, %590 : vector<8x128xf32>
    %cst_136 = arith.constant dense<0xFF800000> : vector<8xf32>
    %594 = vector.multi_reduction <maximumf>, %593, %cst_136 [1] : vector<8x128xf32> to vector<8xf32>
    %595 = vector.shape_cast %594 : vector<8xf32> to vector<8x1xf32>
    %596 = vector.broadcast %595 : vector<8x1xf32> to vector<8x128xf32>
    %597 = arith.cmpf oeq, %593, %596 : vector<8x128xf32>
    %c128_i32_137 = arith.constant 128 : i32
    %598 = vector.broadcast %c128_i32_137 : i32 to vector<8x128xi32>
    %599 = arith.select %597, %6, %598 : vector<8x128xi1>, vector<8x128xi32>
    %cst_138 = arith.constant dense<2147483647> : vector<8xi32>
    %600 = vector.multi_reduction <minsi>, %599, %cst_138 [1] : vector<8x128xi32> to vector<8xi32>
    %601 = vector.shape_cast %600 : vector<8xi32> to vector<8x1xi32>
    %602 = vector.broadcast %601 : vector<8x1xi32> to vector<8x128xi32>
    %603 = arith.cmpi eq, %6, %602 : vector<8x128xi32>
    %604 = arith.extui %603 : vector<8x128xi1> to vector<8x128xi32>
    %605 = arith.sitofp %604 : vector<8x128xi32> to vector<8x128xf32>
    %cst_139 = arith.constant 0.000000e+00 : f32
    %606 = vector.broadcast %cst_139 : f32 to vector<8x128xf32>
    %607 = arith.mulf %1, %605 : vector<8x128xf32>
    %cst_140 = arith.constant dense<0.000000e+00> : vector<8xf32>
    %608 = vector.multi_reduction <add>, %607, %cst_140 [1] : vector<8x128xf32> to vector<8xf32>
    %609 = vector.shape_cast %608 : vector<8xf32> to vector<8x1xf32>
    %610 = vector.broadcast %609 : vector<8x1xf32> to vector<8x128xf32>
    %611 = arith.subf %1, %610 : vector<8x128xf32>
    %612 = arith.mulf %611, %611 : vector<8x128xf32>
    %613 = arith.addf %606, %612 : vector<8x128xf32>
    %614 = arith.mulf %3, %605 : vector<8x128xf32>
    %cst_141 = arith.constant dense<0.000000e+00> : vector<8xf32>
    %615 = vector.multi_reduction <add>, %614, %cst_141 [1] : vector<8x128xf32> to vector<8xf32>
    %616 = vector.shape_cast %615 : vector<8xf32> to vector<8x1xf32>
    %617 = vector.broadcast %616 : vector<8x1xf32> to vector<8x128xf32>
    %618 = arith.subf %3, %617 : vector<8x128xf32>
    %619 = arith.mulf %618, %618 : vector<8x128xf32>
    %620 = arith.addf %613, %619 : vector<8x128xf32>
    %621 = arith.mulf %5, %605 : vector<8x128xf32>
    %cst_142 = arith.constant dense<0.000000e+00> : vector<8xf32>
    %622 = vector.multi_reduction <add>, %621, %cst_142 [1] : vector<8x128xf32> to vector<8xf32>
    %623 = vector.shape_cast %622 : vector<8xf32> to vector<8x1xf32>
    %624 = vector.broadcast %623 : vector<8x1xf32> to vector<8x128xf32>
    %625 = arith.subf %5, %624 : vector<8x128xf32>
    %626 = arith.mulf %625, %625 : vector<8x128xf32>
    %627 = arith.addf %620, %626 : vector<8x128xf32>
    %cst_143 = arith.constant 9.99999984E+17 : f32
    %628 = vector.broadcast %cst_143 : f32 to vector<8x128xf32>
    %629 = arith.select %603, %628, %627 : vector<8x128xi1>, vector<8x128xf32>
    %630 = arith.minimumf %593, %627 : vector<8x128xf32>
    %cst_144 = arith.constant dense<0xFF800000> : vector<8xf32>
    %631 = vector.multi_reduction <maximumf>, %630, %cst_144 [1] : vector<8x128xf32> to vector<8xf32>
    %632 = vector.shape_cast %631 : vector<8xf32> to vector<8x1xf32>
    %633 = vector.broadcast %632 : vector<8x1xf32> to vector<8x128xf32>
    %634 = arith.cmpf oeq, %630, %633 : vector<8x128xf32>
    %c128_i32_145 = arith.constant 128 : i32
    %635 = vector.broadcast %c128_i32_145 : i32 to vector<8x128xi32>
    %636 = arith.select %634, %6, %635 : vector<8x128xi1>, vector<8x128xi32>
    %cst_146 = arith.constant dense<2147483647> : vector<8xi32>
    %637 = vector.multi_reduction <minsi>, %636, %cst_146 [1] : vector<8x128xi32> to vector<8xi32>
    %638 = vector.shape_cast %637 : vector<8xi32> to vector<8x1xi32>
    %639 = vector.broadcast %638 : vector<8x1xi32> to vector<8x128xi32>
    %640 = arith.cmpi eq, %6, %639 : vector<8x128xi32>
    %641 = arith.extui %640 : vector<8x128xi1> to vector<8x128xi32>
    %642 = arith.sitofp %641 : vector<8x128xi32> to vector<8x128xf32>
    %cst_147 = arith.constant 0.000000e+00 : f32
    %643 = vector.broadcast %cst_147 : f32 to vector<8x128xf32>
    %644 = arith.mulf %1, %642 : vector<8x128xf32>
    %cst_148 = arith.constant dense<0.000000e+00> : vector<8xf32>
    %645 = vector.multi_reduction <add>, %644, %cst_148 [1] : vector<8x128xf32> to vector<8xf32>
    %646 = vector.shape_cast %645 : vector<8xf32> to vector<8x1xf32>
    %647 = vector.broadcast %646 : vector<8x1xf32> to vector<8x128xf32>
    %648 = arith.subf %1, %647 : vector<8x128xf32>
    %649 = arith.mulf %648, %648 : vector<8x128xf32>
    %650 = arith.addf %643, %649 : vector<8x128xf32>
    %651 = arith.mulf %3, %642 : vector<8x128xf32>
    %cst_149 = arith.constant dense<0.000000e+00> : vector<8xf32>
    %652 = vector.multi_reduction <add>, %651, %cst_149 [1] : vector<8x128xf32> to vector<8xf32>
    %653 = vector.shape_cast %652 : vector<8xf32> to vector<8x1xf32>
    %654 = vector.broadcast %653 : vector<8x1xf32> to vector<8x128xf32>
    %655 = arith.subf %3, %654 : vector<8x128xf32>
    %656 = arith.mulf %655, %655 : vector<8x128xf32>
    %657 = arith.addf %650, %656 : vector<8x128xf32>
    %658 = arith.mulf %5, %642 : vector<8x128xf32>
    %cst_150 = arith.constant dense<0.000000e+00> : vector<8xf32>
    %659 = vector.multi_reduction <add>, %658, %cst_150 [1] : vector<8x128xf32> to vector<8xf32>
    %660 = vector.shape_cast %659 : vector<8xf32> to vector<8x1xf32>
    %661 = vector.broadcast %660 : vector<8x1xf32> to vector<8x128xf32>
    %662 = arith.subf %5, %661 : vector<8x128xf32>
    %663 = arith.mulf %662, %662 : vector<8x128xf32>
    %664 = arith.addf %657, %663 : vector<8x128xf32>
    %cst_151 = arith.constant 9.99999984E+17 : f32
    %665 = vector.broadcast %cst_151 : f32 to vector<8x128xf32>
    %666 = arith.select %640, %665, %664 : vector<8x128xi1>, vector<8x128xf32>
    %667 = arith.minimumf %630, %664 : vector<8x128xf32>
    %cst_152 = arith.constant dense<0xFF800000> : vector<8xf32>
    %668 = vector.multi_reduction <maximumf>, %667, %cst_152 [1] : vector<8x128xf32> to vector<8xf32>
    %669 = vector.shape_cast %668 : vector<8xf32> to vector<8x1xf32>
    %670 = vector.broadcast %669 : vector<8x1xf32> to vector<8x128xf32>
    %671 = arith.cmpf oeq, %667, %670 : vector<8x128xf32>
    %c128_i32_153 = arith.constant 128 : i32
    %672 = vector.broadcast %c128_i32_153 : i32 to vector<8x128xi32>
    %673 = arith.select %671, %6, %672 : vector<8x128xi1>, vector<8x128xi32>
    %cst_154 = arith.constant dense<2147483647> : vector<8xi32>
    %674 = vector.multi_reduction <minsi>, %673, %cst_154 [1] : vector<8x128xi32> to vector<8xi32>
    %675 = vector.shape_cast %674 : vector<8xi32> to vector<8x1xi32>
    %676 = vector.broadcast %675 : vector<8x1xi32> to vector<8x128xi32>
    %677 = arith.cmpi eq, %6, %676 : vector<8x128xi32>
    %678 = arith.extui %677 : vector<8x128xi1> to vector<8x128xi32>
    %679 = arith.sitofp %678 : vector<8x128xi32> to vector<8x128xf32>
    %cst_155 = arith.constant 0.000000e+00 : f32
    %680 = vector.broadcast %cst_155 : f32 to vector<8x128xf32>
    %681 = arith.mulf %1, %679 : vector<8x128xf32>
    %cst_156 = arith.constant dense<0.000000e+00> : vector<8xf32>
    %682 = vector.multi_reduction <add>, %681, %cst_156 [1] : vector<8x128xf32> to vector<8xf32>
    %683 = vector.shape_cast %682 : vector<8xf32> to vector<8x1xf32>
    %684 = vector.broadcast %683 : vector<8x1xf32> to vector<8x128xf32>
    %685 = arith.subf %1, %684 : vector<8x128xf32>
    %686 = arith.mulf %685, %685 : vector<8x128xf32>
    %687 = arith.addf %680, %686 : vector<8x128xf32>
    %688 = arith.mulf %3, %679 : vector<8x128xf32>
    %cst_157 = arith.constant dense<0.000000e+00> : vector<8xf32>
    %689 = vector.multi_reduction <add>, %688, %cst_157 [1] : vector<8x128xf32> to vector<8xf32>
    %690 = vector.shape_cast %689 : vector<8xf32> to vector<8x1xf32>
    %691 = vector.broadcast %690 : vector<8x1xf32> to vector<8x128xf32>
    %692 = arith.subf %3, %691 : vector<8x128xf32>
    %693 = arith.mulf %692, %692 : vector<8x128xf32>
    %694 = arith.addf %687, %693 : vector<8x128xf32>
    %695 = arith.mulf %5, %679 : vector<8x128xf32>
    %cst_158 = arith.constant dense<0.000000e+00> : vector<8xf32>
    %696 = vector.multi_reduction <add>, %695, %cst_158 [1] : vector<8x128xf32> to vector<8xf32>
    %697 = vector.shape_cast %696 : vector<8xf32> to vector<8x1xf32>
    %698 = vector.broadcast %697 : vector<8x1xf32> to vector<8x128xf32>
    %699 = arith.subf %5, %698 : vector<8x128xf32>
    %700 = arith.mulf %699, %699 : vector<8x128xf32>
    %701 = arith.addf %694, %700 : vector<8x128xf32>
    %cst_159 = arith.constant 9.99999984E+17 : f32
    %702 = vector.broadcast %cst_159 : f32 to vector<8x128xf32>
    %703 = arith.select %677, %702, %701 : vector<8x128xi1>, vector<8x128xf32>
    %704 = arith.minimumf %667, %701 : vector<8x128xf32>
    %cst_160 = arith.constant dense<0xFF800000> : vector<8xf32>
    %705 = vector.multi_reduction <maximumf>, %704, %cst_160 [1] : vector<8x128xf32> to vector<8xf32>
    %706 = vector.shape_cast %705 : vector<8xf32> to vector<8x1xf32>
    %707 = vector.broadcast %706 : vector<8x1xf32> to vector<8x128xf32>
    %708 = arith.cmpf oeq, %704, %707 : vector<8x128xf32>
    %c128_i32_161 = arith.constant 128 : i32
    %709 = vector.broadcast %c128_i32_161 : i32 to vector<8x128xi32>
    %710 = arith.select %708, %6, %709 : vector<8x128xi1>, vector<8x128xi32>
    %cst_162 = arith.constant dense<2147483647> : vector<8xi32>
    %711 = vector.multi_reduction <minsi>, %710, %cst_162 [1] : vector<8x128xi32> to vector<8xi32>
    %712 = vector.shape_cast %711 : vector<8xi32> to vector<8x1xi32>
    %713 = vector.broadcast %712 : vector<8x1xi32> to vector<8x128xi32>
    %714 = arith.cmpi eq, %6, %713 : vector<8x128xi32>
    %715 = arith.extui %714 : vector<8x128xi1> to vector<8x128xi32>
    %716 = arith.sitofp %715 : vector<8x128xi32> to vector<8x128xf32>
    %cst_163 = arith.constant 0.000000e+00 : f32
    %717 = vector.broadcast %cst_163 : f32 to vector<8x128xf32>
    %718 = arith.mulf %1, %716 : vector<8x128xf32>
    %cst_164 = arith.constant dense<0.000000e+00> : vector<8xf32>
    %719 = vector.multi_reduction <add>, %718, %cst_164 [1] : vector<8x128xf32> to vector<8xf32>
    %720 = vector.shape_cast %719 : vector<8xf32> to vector<8x1xf32>
    %721 = vector.broadcast %720 : vector<8x1xf32> to vector<8x128xf32>
    %722 = arith.subf %1, %721 : vector<8x128xf32>
    %723 = arith.mulf %722, %722 : vector<8x128xf32>
    %724 = arith.addf %717, %723 : vector<8x128xf32>
    %725 = arith.mulf %3, %716 : vector<8x128xf32>
    %cst_165 = arith.constant dense<0.000000e+00> : vector<8xf32>
    %726 = vector.multi_reduction <add>, %725, %cst_165 [1] : vector<8x128xf32> to vector<8xf32>
    %727 = vector.shape_cast %726 : vector<8xf32> to vector<8x1xf32>
    %728 = vector.broadcast %727 : vector<8x1xf32> to vector<8x128xf32>
    %729 = arith.subf %3, %728 : vector<8x128xf32>
    %730 = arith.mulf %729, %729 : vector<8x128xf32>
    %731 = arith.addf %724, %730 : vector<8x128xf32>
    %732 = arith.mulf %5, %716 : vector<8x128xf32>
    %cst_166 = arith.constant dense<0.000000e+00> : vector<8xf32>
    %733 = vector.multi_reduction <add>, %732, %cst_166 [1] : vector<8x128xf32> to vector<8xf32>
    %734 = vector.shape_cast %733 : vector<8xf32> to vector<8x1xf32>
    %735 = vector.broadcast %734 : vector<8x1xf32> to vector<8x128xf32>
    %736 = arith.subf %5, %735 : vector<8x128xf32>
    %737 = arith.mulf %736, %736 : vector<8x128xf32>
    %738 = arith.addf %731, %737 : vector<8x128xf32>
    %cst_167 = arith.constant 9.99999984E+17 : f32
    %739 = vector.broadcast %cst_167 : f32 to vector<8x128xf32>
    %740 = arith.select %714, %739, %738 : vector<8x128xi1>, vector<8x128xf32>
    %741 = vector.shape_cast %37 : vector<8x128xf32> to vector<1x8x128xf32>
    %742 = vector.shape_cast %74 : vector<8x128xf32> to vector<1x8x128xf32>
    %743 = vector.shape_cast %111 : vector<8x128xf32> to vector<1x8x128xf32>
    %744 = vector.shape_cast %148 : vector<8x128xf32> to vector<1x8x128xf32>
    %745 = vector.shape_cast %185 : vector<8x128xf32> to vector<1x8x128xf32>
    %746 = vector.shape_cast %222 : vector<8x128xf32> to vector<1x8x128xf32>
    %747 = vector.shape_cast %259 : vector<8x128xf32> to vector<1x8x128xf32>
    %748 = vector.shape_cast %296 : vector<8x128xf32> to vector<1x8x128xf32>
    %749 = vector.shape_cast %333 : vector<8x128xf32> to vector<1x8x128xf32>
    %750 = vector.shape_cast %370 : vector<8x128xf32> to vector<1x8x128xf32>
    %751 = vector.shape_cast %407 : vector<8x128xf32> to vector<1x8x128xf32>
    %752 = vector.shape_cast %444 : vector<8x128xf32> to vector<1x8x128xf32>
    %753 = vector.shape_cast %481 : vector<8x128xf32> to vector<1x8x128xf32>
    %754 = vector.shape_cast %518 : vector<8x128xf32> to vector<1x8x128xf32>
    %755 = vector.shape_cast %555 : vector<8x128xf32> to vector<1x8x128xf32>
    %756 = vector.shape_cast %592 : vector<8x128xf32> to vector<1x8x128xf32>
    %757 = vector.shape_cast %629 : vector<8x128xf32> to vector<1x8x128xf32>
    %758 = vector.shape_cast %666 : vector<8x128xf32> to vector<1x8x128xf32>
    %759 = vector.shape_cast %703 : vector<8x128xf32> to vector<1x8x128xf32>
    %760 = vector.shape_cast %740 : vector<8x128xf32> to vector<1x8x128xf32>
    %761 = tpu.concatenate %741, %742, %743, %744, %745, %746, %747, %748, %749, %750, %751, %752, %753, %754, %755, %756 in 0 : vector<1x8x128xf32>, vector<1x8x128xf32>, vector<1x8x128xf32>, vector<1x8x128xf32>, vector<1x8x128xf32>, vector<1x8x128xf32>, vector<1x8x128xf32>, vector<1x8x128xf32>, vector<1x8x128xf32>, vector<1x8x128xf32>, vector<1x8x128xf32>, vector<1x8x128xf32>, vector<1x8x128xf32>, vector<1x8x128xf32>, vector<1x8x128xf32>, vector<1x8x128xf32> -> vector<16x8x128xf32>
    %762 = tpu.concatenate %757, %758, %759, %760 in 0 : vector<1x8x128xf32>, vector<1x8x128xf32>, vector<1x8x128xf32>, vector<1x8x128xf32> -> vector<4x8x128xf32>
    %763 = tpu.concatenate %761, %762 in 0 : vector<16x8x128xf32>, vector<4x8x128xf32> -> vector<20x8x128xf32>
    %cst_168 = arith.constant 0.000000e+00 : f32
    %764 = vector.broadcast %cst_168 : f32 to vector<20x8x1xf32>
    %cst_169 = arith.constant dense<0x7F800000> : vector<20x8xf32>
    %765 = vector.multi_reduction <minimumf>, %763, %cst_169 [2] : vector<20x8x128xf32> to vector<20x8xf32>
    %766 = vector.shape_cast %765 : vector<20x8xf32> to vector<20x8x1xf32>
    %767 = math.sqrt %766 : vector<20x8x1xf32>
    %cst_170 = arith.constant 0.000000e+00 : f32
    %cst_171 = arith.constant 1.000000e+04 : f32
    %768 = arith.subf %cst_170, %cst_171 : f32
    %769 = vector.broadcast %768 : f32 to vector<20x8x1xf32>
    %770 = arith.mulf %766, %769 : vector<20x8x1xf32>
    %771 = math.exp %770 : vector<20x8x1xf32>
    %772 = arith.mulf %767, %771 : vector<20x8x1xf32>
    %773 = arith.subf %764, %772 : vector<20x8x1xf32>
    %774 = vector.broadcast %766 : vector<20x8x1xf32> to vector<20x8x128xf32>
    %775 = arith.cmpf oeq, %763, %774 : vector<20x8x128xf32>
    %cst_172 = arith.constant 9.99999984E+17 : f32
    %776 = vector.broadcast %cst_172 : f32 to vector<20x8x128xf32>
    %777 = arith.select %775, %776, %763 : vector<20x8x128xi1>, vector<20x8x128xf32>
    %cst_173 = arith.constant dense<0x7F800000> : vector<20x8xf32>
    %778 = vector.multi_reduction <minimumf>, %777, %cst_173 [2] : vector<20x8x128xf32> to vector<20x8xf32>
    %779 = vector.shape_cast %778 : vector<20x8xf32> to vector<20x8x1xf32>
    %780 = math.sqrt %779 : vector<20x8x1xf32>
    %cst_174 = arith.constant 0.000000e+00 : f32
    %cst_175 = arith.constant 1.000000e+04 : f32
    %781 = arith.subf %cst_174, %cst_175 : f32
    %782 = vector.broadcast %781 : f32 to vector<20x8x1xf32>
    %783 = arith.mulf %779, %782 : vector<20x8x1xf32>
    %784 = math.exp %783 : vector<20x8x1xf32>
    %785 = arith.mulf %780, %784 : vector<20x8x1xf32>
    %786 = arith.subf %773, %785 : vector<20x8x1xf32>
    %787 = vector.broadcast %779 : vector<20x8x1xf32> to vector<20x8x128xf32>
    %788 = arith.cmpf oeq, %777, %787 : vector<20x8x128xf32>
    %cst_176 = arith.constant 9.99999984E+17 : f32
    %789 = vector.broadcast %cst_176 : f32 to vector<20x8x128xf32>
    %790 = arith.select %788, %789, %777 : vector<20x8x128xi1>, vector<20x8x128xf32>
    %cst_177 = arith.constant dense<0x7F800000> : vector<20x8xf32>
    %791 = vector.multi_reduction <minimumf>, %790, %cst_177 [2] : vector<20x8x128xf32> to vector<20x8xf32>
    %792 = vector.shape_cast %791 : vector<20x8xf32> to vector<20x8x1xf32>
    %793 = math.sqrt %792 : vector<20x8x1xf32>
    %cst_178 = arith.constant 0.000000e+00 : f32
    %cst_179 = arith.constant 1.000000e+04 : f32
    %794 = arith.subf %cst_178, %cst_179 : f32
    %795 = vector.broadcast %794 : f32 to vector<20x8x1xf32>
    %796 = arith.mulf %792, %795 : vector<20x8x1xf32>
    %797 = math.exp %796 : vector<20x8x1xf32>
    %798 = arith.mulf %793, %797 : vector<20x8x1xf32>
    %799 = arith.subf %786, %798 : vector<20x8x1xf32>
    %800 = vector.broadcast %792 : vector<20x8x1xf32> to vector<20x8x128xf32>
    %801 = arith.cmpf oeq, %790, %800 : vector<20x8x128xf32>
    %cst_180 = arith.constant 9.99999984E+17 : f32
    %802 = vector.broadcast %cst_180 : f32 to vector<20x8x128xf32>
    %803 = arith.select %801, %802, %790 : vector<20x8x128xi1>, vector<20x8x128xf32>
    %cst_181 = arith.constant dense<0x7F800000> : vector<20x8xf32>
    %804 = vector.multi_reduction <minimumf>, %803, %cst_181 [2] : vector<20x8x128xf32> to vector<20x8xf32>
    %805 = vector.shape_cast %804 : vector<20x8xf32> to vector<20x8x1xf32>
    %806 = math.sqrt %805 : vector<20x8x1xf32>
    %cst_182 = arith.constant 0.000000e+00 : f32
    %cst_183 = arith.constant 1.000000e+04 : f32
    %807 = arith.subf %cst_182, %cst_183 : f32
    %808 = vector.broadcast %807 : f32 to vector<20x8x1xf32>
    %809 = arith.mulf %805, %808 : vector<20x8x1xf32>
    %810 = math.exp %809 : vector<20x8x1xf32>
    %811 = arith.mulf %806, %810 : vector<20x8x1xf32>
    %812 = arith.subf %799, %811 : vector<20x8x1xf32>
    %813 = vector.broadcast %805 : vector<20x8x1xf32> to vector<20x8x128xf32>
    %814 = arith.cmpf oeq, %803, %813 : vector<20x8x128xf32>
    %cst_184 = arith.constant 9.99999984E+17 : f32
    %815 = vector.broadcast %cst_184 : f32 to vector<20x8x128xf32>
    %816 = arith.select %814, %815, %803 : vector<20x8x128xi1>, vector<20x8x128xf32>
    %cst_185 = arith.constant dense<0x7F800000> : vector<20x8xf32>
    %817 = vector.multi_reduction <minimumf>, %816, %cst_185 [2] : vector<20x8x128xf32> to vector<20x8xf32>
    %818 = vector.shape_cast %817 : vector<20x8xf32> to vector<20x8x1xf32>
    %819 = math.sqrt %818 : vector<20x8x1xf32>
    %cst_186 = arith.constant 0.000000e+00 : f32
    %cst_187 = arith.constant 1.000000e+04 : f32
    %820 = arith.subf %cst_186, %cst_187 : f32
    %821 = vector.broadcast %820 : f32 to vector<20x8x1xf32>
    %822 = arith.mulf %818, %821 : vector<20x8x1xf32>
    %823 = math.exp %822 : vector<20x8x1xf32>
    %824 = arith.mulf %819, %823 : vector<20x8x1xf32>
    %825 = arith.subf %812, %824 : vector<20x8x1xf32>
    %826 = vector.broadcast %818 : vector<20x8x1xf32> to vector<20x8x128xf32>
    %827 = arith.cmpf oeq, %816, %826 : vector<20x8x128xf32>
    %cst_188 = arith.constant 9.99999984E+17 : f32
    %828 = vector.broadcast %cst_188 : f32 to vector<20x8x128xf32>
    %829 = arith.select %827, %828, %816 : vector<20x8x128xi1>, vector<20x8x128xf32>
    %cst_189 = arith.constant dense<0x7F800000> : vector<20x8xf32>
    %830 = vector.multi_reduction <minimumf>, %829, %cst_189 [2] : vector<20x8x128xf32> to vector<20x8xf32>
    %831 = vector.shape_cast %830 : vector<20x8xf32> to vector<20x8x1xf32>
    %832 = math.sqrt %831 : vector<20x8x1xf32>
    %cst_190 = arith.constant 0.000000e+00 : f32
    %cst_191 = arith.constant 1.000000e+04 : f32
    %833 = arith.subf %cst_190, %cst_191 : f32
    %834 = vector.broadcast %833 : f32 to vector<20x8x1xf32>
    %835 = arith.mulf %831, %834 : vector<20x8x1xf32>
    %836 = math.exp %835 : vector<20x8x1xf32>
    %837 = arith.mulf %832, %836 : vector<20x8x1xf32>
    %838 = arith.subf %825, %837 : vector<20x8x1xf32>
    %839 = vector.broadcast %831 : vector<20x8x1xf32> to vector<20x8x128xf32>
    %840 = arith.cmpf oeq, %829, %839 : vector<20x8x128xf32>
    %cst_192 = arith.constant 9.99999984E+17 : f32
    %841 = vector.broadcast %cst_192 : f32 to vector<20x8x128xf32>
    %842 = arith.select %840, %841, %829 : vector<20x8x128xi1>, vector<20x8x128xf32>
    %cst_193 = arith.constant dense<0x7F800000> : vector<20x8xf32>
    %843 = vector.multi_reduction <minimumf>, %842, %cst_193 [2] : vector<20x8x128xf32> to vector<20x8xf32>
    %844 = vector.shape_cast %843 : vector<20x8xf32> to vector<20x8x1xf32>
    %845 = math.sqrt %844 : vector<20x8x1xf32>
    %cst_194 = arith.constant 0.000000e+00 : f32
    %cst_195 = arith.constant 1.000000e+04 : f32
    %846 = arith.subf %cst_194, %cst_195 : f32
    %847 = vector.broadcast %846 : f32 to vector<20x8x1xf32>
    %848 = arith.mulf %844, %847 : vector<20x8x1xf32>
    %849 = math.exp %848 : vector<20x8x1xf32>
    %850 = arith.mulf %845, %849 : vector<20x8x1xf32>
    %851 = arith.subf %838, %850 : vector<20x8x1xf32>
    %852 = vector.broadcast %844 : vector<20x8x1xf32> to vector<20x8x128xf32>
    %853 = arith.cmpf oeq, %842, %852 : vector<20x8x128xf32>
    %cst_196 = arith.constant 9.99999984E+17 : f32
    %854 = vector.broadcast %cst_196 : f32 to vector<20x8x128xf32>
    %855 = arith.select %853, %854, %842 : vector<20x8x128xi1>, vector<20x8x128xf32>
    %cst_197 = arith.constant dense<0x7F800000> : vector<20x8xf32>
    %856 = vector.multi_reduction <minimumf>, %855, %cst_197 [2] : vector<20x8x128xf32> to vector<20x8xf32>
    %857 = vector.shape_cast %856 : vector<20x8xf32> to vector<20x8x1xf32>
    %858 = math.sqrt %857 : vector<20x8x1xf32>
    %cst_198 = arith.constant 0.000000e+00 : f32
    %cst_199 = arith.constant 1.000000e+04 : f32
    %859 = arith.subf %cst_198, %cst_199 : f32
    %860 = vector.broadcast %859 : f32 to vector<20x8x1xf32>
    %861 = arith.mulf %857, %860 : vector<20x8x1xf32>
    %862 = math.exp %861 : vector<20x8x1xf32>
    %863 = arith.mulf %858, %862 : vector<20x8x1xf32>
    %864 = arith.subf %851, %863 : vector<20x8x1xf32>
    %865 = vector.broadcast %857 : vector<20x8x1xf32> to vector<20x8x128xf32>
    %866 = arith.cmpf oeq, %855, %865 : vector<20x8x128xf32>
    %cst_200 = arith.constant 9.99999984E+17 : f32
    %867 = vector.broadcast %cst_200 : f32 to vector<20x8x128xf32>
    %868 = arith.select %866, %867, %855 : vector<20x8x128xi1>, vector<20x8x128xf32>
    %cst_201 = arith.constant dense<0x7F800000> : vector<20x8xf32>
    %869 = vector.multi_reduction <minimumf>, %868, %cst_201 [2] : vector<20x8x128xf32> to vector<20x8xf32>
    %870 = vector.shape_cast %869 : vector<20x8xf32> to vector<20x8x1xf32>
    %871 = math.sqrt %870 : vector<20x8x1xf32>
    %cst_202 = arith.constant 0.000000e+00 : f32
    %cst_203 = arith.constant 1.000000e+04 : f32
    %872 = arith.subf %cst_202, %cst_203 : f32
    %873 = vector.broadcast %872 : f32 to vector<20x8x1xf32>
    %874 = arith.mulf %870, %873 : vector<20x8x1xf32>
    %875 = math.exp %874 : vector<20x8x1xf32>
    %876 = arith.mulf %871, %875 : vector<20x8x1xf32>
    %877 = arith.subf %864, %876 : vector<20x8x1xf32>
    %878 = vector.broadcast %870 : vector<20x8x1xf32> to vector<20x8x128xf32>
    %879 = arith.cmpf oeq, %868, %878 : vector<20x8x128xf32>
    %cst_204 = arith.constant 9.99999984E+17 : f32
    %880 = vector.broadcast %cst_204 : f32 to vector<20x8x128xf32>
    %881 = arith.select %879, %880, %868 : vector<20x8x128xi1>, vector<20x8x128xf32>
    %cst_205 = arith.constant dense<0x7F800000> : vector<20x8xf32>
    %882 = vector.multi_reduction <minimumf>, %881, %cst_205 [2] : vector<20x8x128xf32> to vector<20x8xf32>
    %883 = vector.shape_cast %882 : vector<20x8xf32> to vector<20x8x1xf32>
    %884 = math.sqrt %883 : vector<20x8x1xf32>
    %cst_206 = arith.constant 0.000000e+00 : f32
    %cst_207 = arith.constant 1.000000e+04 : f32
    %885 = arith.subf %cst_206, %cst_207 : f32
    %886 = vector.broadcast %885 : f32 to vector<20x8x1xf32>
    %887 = arith.mulf %883, %886 : vector<20x8x1xf32>
    %888 = math.exp %887 : vector<20x8x1xf32>
    %889 = arith.mulf %884, %888 : vector<20x8x1xf32>
    %890 = arith.subf %877, %889 : vector<20x8x1xf32>
    %cst_208 = arith.constant dense<0.000000e+00> : vector<8x1xf32>
    %891 = vector.multi_reduction <add>, %890, %cst_208 [0] : vector<20x8x1xf32> to vector<8x1xf32>
    %892 = vector.shape_cast %891 : vector<8x1xf32> to vector<8x1xf32>
    %893 = vector.broadcast %892 : vector<8x1xf32> to vector<8x128xf32>
    %c0_209 = arith.constant 0 : index
    %c0_210 = arith.constant 0 : index
    %c0_211 = arith.constant 0 : index
    %894 = vector.load %arg3[%c0_209, %c0_210, %c0_211] : memref<1x8x128xf32, #tpu.memory_space<vmem>>, vector<1x8x128xf32>
    %895 = vector.shape_cast %894 : vector<1x8x128xf32> to vector<8x128xf32>
    %896 = vector.shape_cast %893 : vector<8x128xf32> to vector<1x8x128xf32>
    tpu.vector_store %arg3[%c0_209, %c0_210, %c0_211], %896 {strides = array<i32>} : memref<1x8x128xf32, #tpu.memory_space<vmem>>, vector<1x8x128xf32>,
    return
  }
  func.func @transform_0(%arg0: i32) -> (i32, i32, i32, i32) {
    %c0_i32 = arith.constant 0 : i32
    %c0_i32_0 = arith.constant 0 : i32
    %c0_i32_1 = arith.constant 0 : i32
    %c0_i32_2 = arith.constant 0 : i32
    return %arg0, %c0_i32, %c0_i32_0, %c0_i32_1 : i32, i32, i32, i32
  }
  func.func @transform_1(%arg0: i32) -> (i32, i32, i32) {
    %c0_i32 = arith.constant 0 : i32
    %c0_i32_0 = arith.constant 0 : i32
    %c0_i32_1 = arith.constant 0 : i32
    return %arg0, %c0_i32, %c0_i32_0 : i32, i32, i32
  }
  func.func @transform_2(%arg0: i32) -> (i32, i32, i32) {
    %c0_i32 = arith.constant 0 : i32
    %c0_i32_0 = arith.constant 0 : i32
    %c0_i32_1 = arith.constant 0 : i32
    return %arg0, %c0_i32, %c0_i32_0 : i32, i32, i32
  }
}

</mosaic_0001>

<llo_original>
// kernel: tpu_custom_call.1
$region0: #{tpu_custom_call.1}
  #allocation0 [shape = 'u32[]', space=smem, size = 0x4, offset = 0x4, fixed_abs, tag = 'smem constant byte address 0x4 - core index']
  #allocation1 [shape = 'u32[144,128]{1,0:T(1,128)}', space=vmem, size = 0x12000, scoped, tag = 'internal scratch']
  %s0 = inlined_call_operand.hbm [shape: f32[2,3,8,128], index: 0, kind: input, shape index: {}]
  %s1 = inlined_call_operand.vmem [shape: s32[2,8,1], index: 1, kind: input, shape index: {}]
  %s2 = inlined_call_operand.hbm [shape: f32[2,8,128], index: 2, kind: output, shape index: {}]
  %s3 = sld [smem:[#allocation0]]
  $region45: #{tpu_custom_call.1} parent=0
    _
  %s5 = ssub.s32 1, %s3
  %s6 = scalar_select 0, %s5, %s3
  $region1: #{tpu_custom_call.1} parent=0
    #allocation2 [shape = 'u8[24576]{0}', space=vmem, size = 0x6000, scoped, tag = 'input window, operand 0']
    #allocation3 [shape = 's32[2]{0}', space=sflag, size = 0x8, scoped, tag = 'scoped memory for tpu_custom_call.1']
    #allocation4 [shape = 's32[2]{0}', space=sflag, size = 0x8, scoped, tag = 'scoped memory for tpu_custom_call.1']
    #allocation5 [shape = 'u8[8192]{0}', space=vmem, size = 0x2000, scoped, tag = 'output window, operand 0']
    %7 = vsyncpa [#allocation3], 0
    %s8 = scalar_lea.sflag [#allocation3], 1
    %9 = vsyncpa %s8, 0
    %10 = vsyncpa [#allocation4], 0
    %s11 = scalar_lea.sflag [#allocation4], 1
    %12 = vsyncpa %s11, 0
    loop: start=0, step=1, limit=4
    $region2: #{tpu_custom_call.1} parent=1 // loop_pre_header
      _
    $region3: #{tpu_custom_call.1} parent=1 // loop_header
      %s14 = sphi 0, %s18
      %p15 = scmp.ge.s32.totalorder %s14, 4
      %s24 = sphi 0, %s26
      %s27 = sphi 0, %s24
      %s28 = sphi 0, %s27
      %s44 = sphi 0, %s28
      %s50 = sphi 0, %s52
      %s53 = sphi 0, %s50
      %s54 = sphi 0, %s53
      %s70 = sphi 0, %s54
      %s76 = sphi 0, %s78
      %s79 = sphi 0, %s76
      %s80 = sphi 0, %s79
      %s96 = sphi 0, %s80
    $region4: #{tpu_custom_call.1} parent=1 // loop_header_branch
      %17 = sbr.rel (%p15) target = $region8
    $region5: #{tpu_custom_call.1} parent=1 // loop_body
      %s19 = ssub.s32 %s14, 1
      %s20 = ssub.s32 %s14, 2
      %s21 = sadd.s32 %s14, 1
      %s22 = ssub.s32 %s14, %s21
      %p23 = scmp.eq.s32.totalorder %s22, 0
      %s25 = sadd.s32 %s24, 1
      %s26 = scalar_select %p23, %s24, %s25
      %p29 = pneg %p23
      %p30 = scmp.eq.s32.totalorder %s14, 1
      %p31 = por %p29, %p30
      %p32 = scmp.ne.s32.totalorder %s24, %s27
      %p33 = scmp.eq.s32.totalorder %s14, 0
      %p34 = por %p32, %p33
      %p35 = scmp.ne.s32.totalorder %s24, %s27
      %p36 = scmp.eq.s32.totalorder %s19, 1
      %p37 = por %p35, %p36
      %p38 = scmp.ne.s32.totalorder %s27, %s28
      %p39 = scmp.eq.s32.totalorder %s19, 0
      %p40 = por %p38, %p39
      %p41 = scmp.ne.s32.totalorder %s27, %s28
      %p42 = scmp.eq.s32.totalorder %s20, 1
      %p43 = por %p41, %p42
      %p45 = scmp.ne.s32.totalorder %s28, %s44
      %p46 = scmp.eq.s32.totalorder %s20, 0
      %p47 = por %p45, %p46
      %s48 = ssub.s32 %s14, %s21
      %p49 = scmp.eq.s32.totalorder %s48, 0
      %s51 = sadd.s32 %s50, 1
      %s52 = scalar_select %p49, %s50, %s51
      %p55 = pneg %p49
      %p56 = scmp.eq.s32.totalorder %s14, 1
      %p57 = por %p55, %p56
      %p58 = scmp.ne.s32.totalorder %s50, %s53
      %p59 = scmp.eq.s32.totalorder %s14, 0
      %p60 = por %p58, %p59
      %p61 = scmp.ne.s32.totalorder %s50, %s53
      %p62 = scmp.eq.s32.totalorder %s19, 1
      %p63 = por %p61, %p62
      %p64 = scmp.ne.s32.totalorder %s53, %s54
      %p65 = scmp.eq.s32.totalorder %s19, 0
      %p66 = por %p64, %p65
      %p67 = scmp.ne.s32.totalorder %s53, %s54
      %p68 = scmp.eq.s32.totalorder %s20, 1
      %p69 = por %p67, %p68
      %p71 = scmp.ne.s32.totalorder %s54, %s70
      %p72 = scmp.eq.s32.totalorder %s20, 0
      %p73 = por %p71, %p72
      %s74 = ssub.s32 %s14, %s21
      %p75 = scmp.eq.s32.totalorder %s74, 0
      %s77 = sadd.s32 %s76, 1
      %s78 = scalar_select %p75, %s76, %s77
      %p81 = pneg %p75
      %p82 = scmp.eq.s32.totalorder %s14, 1
      %p83 = por %p81, %p82
      %p84 = scmp.ne.s32.totalorder %s76, %s79
      %p85 = scmp.eq.s32.totalorder %s14, 0
      %p86 = por %p84, %p85
      %p87 = scmp.ne.s32.totalorder %s76, %s79
      %p88 = scmp.eq.s32.totalorder %s19, 1
      %p89 = por %p87, %p88
      %p90 = scmp.ne.s32.totalorder %s79, %s80
      %p91 = scmp.eq.s32.totalorder %s19, 0
      %p92 = por %p90, %p91
      %p93 = scmp.ne.s32.totalorder %s79, %s80
      %p94 = scmp.eq.s32.totalorder %s20, 1
      %p95 = por %p93, %p94
      %p97 = scmp.ne.s32.totalorder %s80, %s96
      %p98 = scmp.eq.s32.totalorder %s20, 0
      %p99 = por %p97, %p98
      %p100 = scmp.le.s32.totalorder 1, %s14
      %p101 = scmp.lt.s32.totalorder %s14, 3
      %p102 = pnand %p100, %p101
      %p103 = pneg %p102
      // Predicated region
      $region9: #{tpu_custom_call.1} parent=5 // pred_check
        _
      $region10: #{tpu_custom_call.1} parent=5 // pred_check_branch
        %105 = sbr.rel (%p102) target = $region12
      $region11: #{tpu_custom_call.1} parent=5 // pred_region
        %s106 = ssub.s32 %s14, 1
      $region12: #{tpu_custom_call.1} parent=5 // pred_fallthru
        _
      %p107 = scmp.lt.s32.totalorder %s14, 2
      // Predicated region
      $region13: #{tpu_custom_call.1} parent=5 // pred_check
        %p108 = pneg %p107
      $region14: #{tpu_custom_call.1} parent=5 // pred_check_branch
        %110 = sbr.rel (%p108) target = $region16
      $region15: #{tpu_custom_call.1} parent=5 // pred_region
        // Predicated region
        $region17: #{tpu_custom_call.1} parent=15 // pred_check
          %p111 = pneg %p34
        $region18: #{tpu_custom_call.1} parent=15 // pred_check_branch
          %113 = sbr.rel (%p111) target = $region20
        $region19: #{tpu_custom_call.1} parent=15 // pred_region
          %s114 = sand.u32 %s24, 1
          %s115 = scalar_lea.sflag [#allocation3], %s114
          %s116 = sand.u32 %s24, 1
          %s117 = smul.addr %s116, 24
          %s118 = scalar_lea.vmem [#allocation2], %s117
          %s120 = ssub.s32 384, 384
          %121 = vsyncadd %s115, %s120
          %s122 = smul.addr %s14, 3
          %s123 = smul.addr %s122, 128
          %s124 = scalar_lea.hbm %s0, %s123
          %s125 = sshll.u32 %s118, 4
          %s126 = int_to_ptr.vmem [resolvable:$true] %s125
          %131 = dma.hbm_to_vmem [thread:$0]  %s124, 384, %s126, %s115, 128, 128, 8
        $region20: #{tpu_custom_call.1} parent=15 // pred_fallthru
          _
        // Predicated region
        $region21: #{tpu_custom_call.1} parent=15 // pred_check
          %p132 = pneg %p60
        $region22: #{tpu_custom_call.1} parent=15 // pred_check_branch
          %134 = sbr.rel (%p132) target = $region24
        $region23: #{tpu_custom_call.1} parent=15 // pred_region
          %p135 = scmp.lt.s32.totalorder %s14, 1
          %s136 = scalar_select %p135, %s14, 1
          %s137 = smul.addr %s136, 8
          %s138 = scalar_lea.vmem %s1, %s137
        $region24: #{tpu_custom_call.1} parent=15 // pred_fallthru
          _
      $region16: #{tpu_custom_call.1} parent=5 // pred_fallthru
        _
      %p139 = scmp.le.s32.totalorder 1, %s14
      %p140 = scmp.lt.s32.totalorder %s14, 3
      %p141 = pnand %p139, %p140
      %p142 = pneg %p141
      // Predicated region
      $region25: #{tpu_custom_call.1} parent=5 // pred_check
        _
      $region26: #{tpu_custom_call.1} parent=5 // pred_check_branch
        %144 = sbr.rel (%p141) target = $region28
      $region27: #{tpu_custom_call.1} parent=5 // pred_region
        %s145 = ssub.s32 %s14, 1
        %s146 = sand.u32 %s27, 1
        %s147 = scalar_lea.sflag [#allocation3], %s146
        %s148 = sand.u32 %s27, 1
        %s149 = smul.addr %s148, 24
        %s150 = scalar_lea.vmem [#allocation2], %s149
        // Predicated region
        $region29: #{tpu_custom_call.1} parent=27 // pred_check
          %p151 = pneg %p40
        $region30: #{tpu_custom_call.1} parent=27 // pred_check_branch
          %153 = sbr.rel (%p151) target = $region32
        $region31: #{tpu_custom_call.1} parent=27 // pred_region
          %154 = dma.done %s147, 384
        $region32: #{tpu_custom_call.1} parent=27 // pred_fallthru
          _
        %s155 = sand.u32 %s27, 1
        %s156 = scalar_lea.sflag [#allocation3], %s155
        %s157 = sand.u32 %s27, 1
        %s158 = smul.addr %s157, 24
        %s159 = scalar_lea.vmem [#allocation2], %s158
        %p160 = pneg %p40
        %p161 = pneg %p37
        %p162 = scmp.lt.s32.totalorder %s19, 1
        %s163 = scalar_select %p162, %s19, 1
        %s164 = smul.addr %s163, 8
        %s165 = scalar_lea.vmem %s1, %s164
        %p166 = pneg %p66
        %p167 = pneg %p63
        %p168 = pneg %p92
        %p169 = pneg %p89
        %s170 = sand.u32 %s79, 1
        %s171 = scalar_lea.sflag [#allocation4], %s170
        %s172 = sand.u32 %s79, 1
        %s173 = smul.addr %s172, 8
        %s174 = scalar_lea.vmem [#allocation5], %s173
        %p175 = scmp.lt.s32.totalorder %s19, 1
        %s176 = scalar_select %p175, %s19, 1
        %s177 = smul.addr %s176, 8
        %s178 = scalar_lea.vmem %s1, %s177
        %v179 = vld [vmem:[%s150] sm:$0xff]
        %s180 = scalar_lea.vmem %s150, 8 [#allocation2]
        %v181 = vld [vmem:[%s180] sm:$0xff]
        %s182 = scalar_lea.vmem %s150, 16 [#allocation2]
        %v183 = vld [vmem:[%s182] sm:$0xff]
        %v184 = vlaneseq
        %v185 = vand.u32 %v184, 127
        %v186 = vld [vmem:[%s178] sm:$0xff]
        %187 = vset.pattern.permute.xlu0 0
        %188 = vperm.xlu0 %187, %v186
        %v189 = vpop.permute.xlu0 %188
        %vm190 = vcmp.eq.s32.totalorder %v185, %v189
        %v191 = vsel %vm190, 1, 0
        %v192 = vcvt.s32.f32 %v191
        %v193 = vmul.f32 %v179, %v192
        %194 = vadd.xlane.f32.xlu0 %v193
        %v195 = vpop.xlane.xlu0 %194
        %v196 = vsub.f32 %v179, %v195
        %v197 = vmul.f32 %v196, %v196
        %v198 = vadd.f32 %v197, 0.0
        %v199 = vmul.f32 %v181, %v192
        %200 = vadd.xlane.f32.xlu0 %v199
        %v201 = vpop.xlane.xlu0 %200
        %v202 = vsub.f32 %v181, %v201
        %v203 = vmul.f32 %v202, %v202
        %v204 = vadd.f32 %v198, %v203
        %v205 = vmul.f32 %v183, %v192
        %206 = vadd.xlane.f32.xlu0 %v205
        %v207 = vpop.xlane.xlu0 %206
        %v208 = vsub.f32 %v183, %v207
        %v209 = vmul.f32 %v208, %v208
        %v210 = vadd.f32 %v204, %v209
        %v211 = vsel %vm190, 1e+18, %v210
        %v212 = vmin.f32 %v210, 1e+10
        %213 = vmax.xlane.f32.xlu0 %v212
        %v214 = vpop.xlane.xlu0 %213
        %vm215 = vcmp.eq.f32.partialorder %v212, %v214
        %v216 = vsel %vm215, %v185, 128
        %v217 = vand.u32 %v216, 65535
        %v218 = vshra.s32 %v216, 16
        %v219 = vcvt.s32.f32 %v217
        %v220 = vcvt.s32.f32 %v218
        %221 = vmin.xlane.f32.xlu0 %v220
        %v222 = vpop.xlane.xlu0 %221
        %vm223 = vcmp.eq.f32.partialorder %v220, %v222
        %v224 = vsel %vm223, %v219, inf
        %225 = vmin.xlane.f32.xlu0 %v224
        %v226 = vpop.xlane.xlu0 %225
        %v227 = vcvt.f32.s32 %v226
        %v228 = vcvt.f32.s32 %v222
        %v229 = vshll.u32 %v228, 16
        %v230 = vadd.s32 %v229, %v227
        %vm231 = vcmp.eq.s32.totalorder %v185, %v230
        %v232 = vsel %vm231, 1, 0
        %v233 = vcvt.s32.f32 %v232
        %v234 = vmul.f32 %v179, %v233
        %235 = vadd.xlane.f32.xlu0 %v234
        %v236 = vpop.xlane.xlu0 %235
        %v237 = vsub.f32 %v179, %v236
        %v238 = vmul.f32 %v237, %v237
        %v239 = vadd.f32 %v238, 0.0
        %v240 = vmul.f32 %v181, %v233
        %241 = vadd.xlane.f32.xlu0 %v240
        %v242 = vpop.xlane.xlu0 %241
        %v243 = vsub.f32 %v181, %v242
        %v244 = vmul.f32 %v243, %v243
        %v245 = vadd.f32 %v239, %v244
        %v246 = vmul.f32 %v183, %v233
        %247 = vadd.xlane.f32.xlu0 %v246
        %v248 = vpop.xlane.xlu0 %247
        %v249 = vsub.f32 %v183, %v248
        %v250 = vmul.f32 %v249, %v249
        %v251 = vadd.f32 %v245, %v250
        %v252 = vsel %vm231, 1e+18, %v251
        %v253 = vmin.f32 %v212, %v251
        %254 = vmax.xlane.f32.xlu0 %v253
        %v255 = vpop.xlane.xlu0 %254
        %vm256 = vcmp.eq.f32.partialorder %v253, %v255
        %v257 = vsel %vm256, %v185, 128
        %v258 = vand.u32 %v257, 65535
        %v259 = vshra.s32 %v257, 16
        %v260 = vcvt.s32.f32 %v258
        %v261 = vcvt.s32.f32 %v259
        %262 = vmin.xlane.f32.xlu0 %v261
        %v263 = vpop.xlane.xlu0 %262
        %vm264 = vcmp.eq.f32.partialorder %v261, %v263
        %v265 = vsel %vm264, %v260, inf
        %266 = vmin.xlane.f32.xlu0 %v265
        %v267 = vpop.xlane.xlu0 %266
        %v268 = vcvt.f32.s32 %v267
        %v269 = vcvt.f32.s32 %v263
        %v270 = vshll.u32 %v269, 16
        %v271 = vadd.s32 %v270, %v268
        %vm272 = vcmp.eq.s32.totalorder %v185, %v271
        %v273 = vsel %vm272, 1, 0
        %v274 = vcvt.s32.f32 %v273
        %v275 = vmul.f32 %v179, %v274
        %276 = vadd.xlane.f32.xlu0 %v275
        %v277 = vpop.xlane.xlu0 %276
        %v278 = vsub.f32 %v179, %v277
        %v279 = vmul.f32 %v278, %v278
        %v280 = vadd.f32 %v279, 0.0
        %v281 = vmul.f32 %v181, %v274
        %282 = vadd.xlane.f32.xlu0 %v281
        %v283 = vpop.xlane.xlu0 %282
        %v284 = vsub.f32 %v181, %v283
        %v285 = vmul.f32 %v284, %v284
        %v286 = vadd.f32 %v280, %v285
        %v287 = vmul.f32 %v183, %v274
        %288 = vadd.xlane.f32.xlu0 %v287
        %v289 = vpop.xlane.xlu0 %288
        %v290 = vsub.f32 %v183, %v289
        %v291 = vmul.f32 %v290, %v290
        %v292 = vadd.f32 %v286, %v291
        %v293 = vsel %vm272, 1e+18, %v292
        %v294 = vmin.f32 %v253, %v292
        %295 = vmax.xlane.f32.xlu0 %v294
        %v296 = vpop.xlane.xlu0 %295
        %vm297 = vcmp.eq.f32.partialorder %v294, %v296
        %v298 = vsel %vm297, %v185, 128
        %v299 = vand.u32 %v298, 65535
        %v300 = vshra.s32 %v298, 16
        %v301 = vcvt.s32.f32 %v299
        %v302 = vcvt.s32.f32 %v300
        %303 = vmin.xlane.f32.xlu0 %v302
        %v304 = vpop.xlane.xlu0 %303
        %vm305 = vcmp.eq.f32.partialorder %v302, %v304
        %v306 = vsel %vm305, %v301, inf
        %307 = vmin.xlane.f32.xlu0 %v306
        %v308 = vpop.xlane.xlu0 %307
        %v309 = vcvt.f32.s32 %v308
        %v310 = vcvt.f32.s32 %v304
        %v311 = vshll.u32 %v310, 16
        %v312 = vadd.s32 %v311, %v309
        %vm313 = vcmp.eq.s32.totalorder %v185, %v312
        %v314 = vsel %vm313, 1, 0
        %v315 = vcvt.s32.f32 %v314
        %v316 = vmul.f32 %v179, %v315
        %317 = vadd.xlane.f32.xlu0 %v316
        %v318 = vpop.xlane.xlu0 %317
        %v319 = vsub.f32 %v179, %v318
        %v320 = vmul.f32 %v319, %v319
        %v321 = vadd.f32 %v320, 0.0
        %v322 = vmul.f32 %v181, %v315
        %323 = vadd.xlane.f32.xlu0 %v322
        %v324 = vpop.xlane.xlu0 %323
        %v325 = vsub.f32 %v181, %v324
        %v326 = vmul.f32 %v325, %v325
        %v327 = vadd.f32 %v321, %v326
        %v328 = vmul.f32 %v183, %v315
        %329 = vadd.xlane.f32.xlu0 %v328
        %v330 = vpop.xlane.xlu0 %329
        %v331 = vsub.f32 %v183, %v330
        %v332 = vmul.f32 %v331, %v331
        %v333 = vadd.f32 %v327, %v332
        %v334 = vsel %vm313, 1e+18, %v333
        %v335 = vmin.f32 %v294, %v333
        %336 = vmax.xlane.f32.xlu0 %v335
        %v337 = vpop.xlane.xlu0 %336
        %vm338 = vcmp.eq.f32.partialorder %v335, %v337
        %v339 = vsel %vm338, %v185, 128
        %v340 = vand.u32 %v339, 65535
        %v341 = vshra.s32 %v339, 16
        %v342 = vcvt.s32.f32 %v340
        %v343 = vcvt.s32.f32 %v341
        %344 = vmin.xlane.f32.xlu0 %v343
        %v345 = vpop.xlane.xlu0 %344
        %vm346 = vcmp.eq.f32.partialorder %v343, %v345
        %v347 = vsel %vm346, %v342, inf
        %348 = vmin.xlane.f32.xlu0 %v347
        %v349 = vpop.xlane.xlu0 %348
        %v350 = vcvt.f32.s32 %v349
        %v351 = vcvt.f32.s32 %v345
        %v352 = vshll.u32 %v351, 16
        %v353 = vadd.s32 %v352, %v350
        %vm354 = vcmp.eq.s32.totalorder %v185, %v353
        %v355 = vsel %vm354, 1, 0
        %v356 = vcvt.s32.f32 %v355
        %v357 = vmul.f32 %v179, %v356
        %358 = vadd.xlane.f32.xlu0 %v357
        %v359 = vpop.xlane.xlu0 %358
        %v360 = vsub.f32 %v179, %v359
        %v361 = vmul.f32 %v360, %v360
        %v362 = vadd.f32 %v361, 0.0
        %v363 = vmul.f32 %v181, %v356
        %364 = vadd.xlane.f32.xlu0 %v363
        %v365 = vpop.xlane.xlu0 %364
        %v366 = vsub.f32 %v181, %v365
        %v367 = vmul.f32 %v366, %v366
        %v368 = vadd.f32 %v362, %v367
        %v369 = vmul.f32 %v183, %v356
        %370 = vadd.xlane.f32.xlu0 %v369
        %v371 = vpop.xlane.xlu0 %370
        %v372 = vsub.f32 %v183, %v371
        %v373 = vmul.f32 %v372, %v372
        %v374 = vadd.f32 %v368, %v373
        %v375 = vsel %vm354, 1e+18, %v374
        %v376 = vmin.f32 %v335, %v374
        %377 = vmax.xlane.f32.xlu0 %v376
        %v378 = vpop.xlane.xlu0 %377
        %vm379 = vcmp.eq.f32.partialorder %v376, %v378
        %v380 = vsel %vm379, %v185, 128
        %v381 = vand.u32 %v380, 65535
        %v382 = vshra.s32 %v380, 16
        %v383 = vcvt.s32.f32 %v381
        %v384 = vcvt.s32.f32 %v382
        %385 = vmin.xlane.f32.xlu0 %v384
        %v386 = vpop.xlane.xlu0 %385
        %vm387 = vcmp.eq.f32.partialorder %v384, %v386
        %v388 = vsel %vm387, %v383, inf
        %389 = vmin.xlane.f32.xlu0 %v388
        %v390 = vpop.xlane.xlu0 %389
        %v391 = vcvt.f32.s32 %v390
        %v392 = vcvt.f32.s32 %v386
        %v393 = vshll.u32 %v392, 16
        %v394 = vadd.s32 %v393, %v391
        %vm395 = vcmp.eq.s32.totalorder %v185, %v394
        %v396 = vsel %vm395, 1, 0
        %v397 = vcvt.s32.f32 %v396
        %v398 = vmul.f32 %v179, %v397
        %399 = vadd.xlane.f32.xlu0 %v398
        %v400 = vpop.xlane.xlu0 %399
        %v401 = vsub.f32 %v179, %v400
        %v402 = vmul.f32 %v401, %v401
        %v403 = vadd.f32 %v402, 0.0
        %v404 = vmul.f32 %v181, %v397
        %405 = vadd.xlane.f32.xlu0 %v404
        %v406 = vpop.xlane.xlu0 %405
        %v407 = vsub.f32 %v181, %v406
        %v408 = vmul.f32 %v407, %v407
        %v409 = vadd.f32 %v403, %v408
        %v410 = vmul.f32 %v183, %v397
        %411 = vadd.xlane.f32.xlu0 %v410
        %v412 = vpop.xlane.xlu0 %411
        %v413 = vsub.f32 %v183, %v412
        %v414 = vmul.f32 %v413, %v413
        %v415 = vadd.f32 %v409, %v414
        %v416 = vsel %vm395, 1e+18, %v415
        %v417 = vmin.f32 %v376, %v415
        %418 = vmax.xlane.f32.xlu0 %v417
        %v419 = vpop.xlane.xlu0 %418
        %vm420 = vcmp.eq.f32.partialorder %v417, %v419
        %v421 = vsel %vm420, %v185, 128
        %v422 = vand.u32 %v421, 65535
        %v423 = vshra.s32 %v421, 16
        %v424 = vcvt.s32.f32 %v422
        %v425 = vcvt.s32.f32 %v423
        %426 = vmin.xlane.f32.xlu0 %v425
        %v427 = vpop.xlane.xlu0 %426
        %vm428 = vcmp.eq.f32.partialorder %v425, %v427
        %v429 = vsel %vm428, %v424, inf
        %430 = vmin.xlane.f32.xlu0 %v429
        %v431 = vpop.xlane.xlu0 %430
        %v432 = vcvt.f32.s32 %v431
        %v433 = vcvt.f32.s32 %v427
        %v434 = vshll.u32 %v433, 16
        %v435 = vadd.s32 %v434, %v432
        %vm436 = vcmp.eq.s32.totalorder %v185, %v435
        %v437 = vsel %vm436, 1, 0
        %v438 = vcvt.s32.f32 %v437
        %v439 = vmul.f32 %v179, %v438
        %440 = vadd.xlane.f32.xlu0 %v439
        %v441 = vpop.xlane.xlu0 %440
        %v442 = vsub.f32 %v179, %v441
        %v443 = vmul.f32 %v442, %v442
        %v444 = vadd.f32 %v443, 0.0
        %v445 = vmul.f32 %v181, %v438
        %446 = vadd.xlane.f32.xlu0 %v445
        %v447 = vpop.xlane.xlu0 %446
        %v448 = vsub.f32 %v181, %v447
        %v449 = vmul.f32 %v448, %v448
        %v450 = vadd.f32 %v444, %v449
        %v451 = vmul.f32 %v183, %v438
        %452 = vadd.xlane.f32.xlu0 %v451
        %v453 = vpop.xlane.xlu0 %452
        %v454 = vsub.f32 %v183, %v453
        %v455 = vmul.f32 %v454, %v454
        %v456 = vadd.f32 %v450, %v455
        %v457 = vsel %vm436, 1e+18, %v456
        %v458 = vmin.f32 %v417, %v456
        %459 = vmax.xlane.f32.xlu0 %v458
        %v460 = vpop.xlane.xlu0 %459
        %vm461 = vcmp.eq.f32.partialorder %v458, %v460
        %v462 = vsel %vm461, %v185, 128
        %v463 = vand.u32 %v462, 65535
        %v464 = vshra.s32 %v462, 16
        %v465 = vcvt.s32.f32 %v463
        %v466 = vcvt.s32.f32 %v464
        %467 = vmin.xlane.f32.xlu0 %v466
        %v468 = vpop.xlane.xlu0 %467
        %vm469 = vcmp.eq.f32.partialorder %v466, %v468
        %v470 = vsel %vm469, %v465, inf
        %471 = vmin.xlane.f32.xlu0 %v470
        %v472 = vpop.xlane.xlu0 %471
        %v473 = vcvt.f32.s32 %v472
        %v474 = vcvt.f32.s32 %v468
        %v475 = vshll.u32 %v474, 16
        %v476 = vadd.s32 %v475, %v473
        %vm477 = vcmp.eq.s32.totalorder %v185, %v476
        %v478 = vsel %vm477, 1, 0
        %v479 = vcvt.s32.f32 %v478
        %v480 = vmul.f32 %v179, %v479
        %481 = vadd.xlane.f32.xlu0 %v480
        %v482 = vpop.xlane.xlu0 %481
        %v483 = vsub.f32 %v179, %v482
        %v484 = vmul.f32 %v483, %v483
        %v485 = vadd.f32 %v484, 0.0
        %v486 = vmul.f32 %v181, %v479
        %487 = vadd.xlane.f32.xlu0 %v486
        %v488 = vpop.xlane.xlu0 %487
        %v489 = vsub.f32 %v181, %v488
        %v490 = vmul.f32 %v489, %v489
        %v491 = vadd.f32 %v485, %v490
        %v492 = vmul.f32 %v183, %v479
        %493 = vadd.xlane.f32.xlu0 %v492
        %v494 = vpop.xlane.xlu0 %493
        %v495 = vsub.f32 %v183, %v494
        %v496 = vmul.f32 %v495, %v495
        %v497 = vadd.f32 %v491, %v496
        %v498 = vsel %vm477, 1e+18, %v497
        %v499 = vmin.f32 %v458, %v497
        %500 = vmax.xlane.f32.xlu0 %v499
        %v501 = vpop.xlane.xlu0 %500
        %vm502 = vcmp.eq.f32.partialorder %v499, %v501
        %v503 = vsel %vm502, %v185, 128
        %v504 = vand.u32 %v503, 65535
        %v505 = vshra.s32 %v503, 16
        %v506 = vcvt.s32.f32 %v504
        %v507 = vcvt.s32.f32 %v505
        %508 = vmin.xlane.f32.xlu0 %v507
        %v509 = vpop.xlane.xlu0 %508
        %vm510 = vcmp.eq.f32.partialorder %v507, %v509
        %v511 = vsel %vm510, %v506, inf
        %512 = vmin.xlane.f32.xlu0 %v511
        %v513 = vpop.xlane.xlu0 %512
        %v514 = vcvt.f32.s32 %v513
        %v515 = vcvt.f32.s32 %v509
        %v516 = vshll.u32 %v515, 16
        %v517 = vadd.s32 %v516, %v514
        %vm518 = vcmp.eq.s32.totalorder %v185, %v517
        %v519 = vsel %vm518, 1, 0
        %v520 = vcvt.s32.f32 %v519
        %v521 = vmul.f32 %v179, %v520
        %522 = vadd.xlane.f32.xlu0 %v521
        %v523 = vpop.xlane.xlu0 %522
        %v524 = vsub.f32 %v179, %v523
        %v525 = vmul.f32 %v524, %v524
        %v526 = vadd.f32 %v525, 0.0
        %v527 = vmul.f32 %v181, %v520
        %528 = vadd.xlane.f32.xlu0 %v527
        %v529 = vpop.xlane.xlu0 %528
        %v530 = vsub.f32 %v181, %v529
        %v531 = vmul.f32 %v530, %v530
        %v532 = vadd.f32 %v526, %v531
        %v533 = vmul.f32 %v183, %v520
        %534 = vadd.xlane.f32.xlu0 %v533
        %v535 = vpop.xlane.xlu0 %534
        %v536 = vsub.f32 %v183, %v535
        %v537 = vmul.f32 %v536, %v536
        %v538 = vadd.f32 %v532, %v537
        %v539 = vsel %vm518, 1e+18, %v538
        %v540 = vmin.f32 %v499, %v538
        %541 = vmax.xlane.f32.xlu0 %v540
        %v542 = vpop.xlane.xlu0 %541
        %vm543 = vcmp.eq.f32.partialorder %v540, %v542
        %v544 = vsel %vm543, %v185, 128
        %v545 = vand.u32 %v544, 65535
        %v546 = vshra.s32 %v544, 16
        %v547 = vcvt.s32.f32 %v545
        %v548 = vcvt.s32.f32 %v546
        %549 = vmin.xlane.f32.xlu0 %v548
        %v550 = vpop.xlane.xlu0 %549
        %vm551 = vcmp.eq.f32.partialorder %v548, %v550
        %v552 = vsel %vm551, %v547, inf
        %553 = vmin.xlane.f32.xlu0 %v552
        %v554 = vpop.xlane.xlu0 %553
        %v555 = vcvt.f32.s32 %v554
        %v556 = vcvt.f32.s32 %v550
        %v557 = vshll.u32 %v556, 16
        %v558 = vadd.s32 %v557, %v555
        %vm559 = vcmp.eq.s32.totalorder %v185, %v558
        %v560 = vsel %vm559, 1, 0
        %v561 = vcvt.s32.f32 %v560
        %v562 = vmul.f32 %v179, %v561
        %563 = vadd.xlane.f32.xlu0 %v562
        %v564 = vpop.xlane.xlu0 %563
        %v565 = vsub.f32 %v179, %v564
        %v566 = vmul.f32 %v565, %v565
        %v567 = vadd.f32 %v566, 0.0
        %v568 = vmul.f32 %v181, %v561
        %569 = vadd.xlane.f32.xlu0 %v568
        %v570 = vpop.xlane.xlu0 %569
        %v571 = vsub.f32 %v181, %v570
        %v572 = vmul.f32 %v571, %v571
        %v573 = vadd.f32 %v567, %v572
        %v574 = vmul.f32 %v183, %v561
        %575 = vadd.xlane.f32.xlu0 %v574
        %v576 = vpop.xlane.xlu0 %575
        %v577 = vsub.f32 %v183, %v576
        %v578 = vmul.f32 %v577, %v577
        %v579 = vadd.f32 %v573, %v578
        %v580 = vsel %vm559, 1e+18, %v579
        %v581 = vmin.f32 %v540, %v579
        %582 = vmax.xlane.f32.xlu0 %v581
        %v583 = vpop.xlane.xlu0 %582
        %vm584 = vcmp.eq.f32.partialorder %v581, %v583
        %v585 = vsel %vm584, %v185, 128
        %v586 = vand.u32 %v585, 65535
        %v587 = vshra.s32 %v585, 16
        %v588 = vcvt.s32.f32 %v586
        %v589 = vcvt.s32.f32 %v587
        %590 = vmin.xlane.f32.xlu0 %v589
        %v591 = vpop.xlane.xlu0 %590
        %vm592 = vcmp.eq.f32.partialorder %v589, %v591
        %v593 = vsel %vm592, %v588, inf
        %594 = vmin.xlane.f32.xlu0 %v593
        %v595 = vpop.xlane.xlu0 %594
        %v596 = vcvt.f32.s32 %v595
        %v597 = vcvt.f32.s32 %v591
        %v598 = vshll.u32 %v597, 16
        %v599 = vadd.s32 %v598, %v596
        %vm600 = vcmp.eq.s32.totalorder %v185, %v599
        %v601 = vsel %vm600, 1, 0
        %v602 = vcvt.s32.f32 %v601
        %v603 = vmul.f32 %v179, %v602
        %604 = vadd.xlane.f32.xlu0 %v603
        %v605 = vpop.xlane.xlu0 %604
        %v606 = vsub.f32 %v179, %v605
        %v607 = vmul.f32 %v606, %v606
        %v608 = vadd.f32 %v607, 0.0
        %v609 = vmul.f32 %v181, %v602
        %610 = vadd.xlane.f32.xlu0 %v609
        %v611 = vpop.xlane.xlu0 %610
        %v612 = vsub.f32 %v181, %v611
        %v613 = vmul.f32 %v612, %v612
        %v614 = vadd.f32 %v608, %v613
        %v615 = vmul.f32 %v183, %v602
        %616 = vadd.xlane.f32.xlu0 %v615
        %v617 = vpop.xlane.xlu0 %616
        %v618 = vsub.f32 %v183, %v617
        %v619 = vmul.f32 %v618, %v618
        %v620 = vadd.f32 %v614, %v619
        %v621 = vsel %vm600, 1e+18, %v620
        %v622 = vmin.f32 %v581, %v620
        %623 = vmax.xlane.f32.xlu0 %v622
        %v624 = vpop.xlane.xlu0 %623
        %vm625 = vcmp.eq.f32.partialorder %v622, %v624
        %v626 = vsel %vm625, %v185, 128
        %v627 = vand.u32 %v626, 65535
        %v628 = vshra.s32 %v626, 16
        %v629 = vcvt.s32.f32 %v627
        %v630 = vcvt.s32.f32 %v628
        %631 = vmin.xlane.f32.xlu0 %v630
        %v632 = vpop.xlane.xlu0 %631
        %vm633 = vcmp.eq.f32.partialorder %v630, %v632
        %v634 = vsel %vm633, %v629, inf
        %635 = vmin.xlane.f32.xlu0 %v634
        %v636 = vpop.xlane.xlu0 %635
        %v637 = vcvt.f32.s32 %v636
        %v638 = vcvt.f32.s32 %v632
        %v639 = vshll.u32 %v638, 16
        %v640 = vadd.s32 %v639, %v637
        %vm641 = vcmp.eq.s32.totalorder %v185, %v640
        %v642 = vsel %vm641, 1, 0
        %v643 = vcvt.s32.f32 %v642
        %v644 = vmul.f32 %v179, %v643
        %645 = vadd.xlane.f32.xlu0 %v644
        %v646 = vpop.xlane.xlu0 %645
        %v647 = vsub.f32 %v179, %v646
        %v648 = vmul.f32 %v647, %v647
        %v649 = vadd.f32 %v648, 0.0
        %v650 = vmul.f32 %v181, %v643
        %651 = vadd.xlane.f32.xlu0 %v650
        %v652 = vpop.xlane.xlu0 %651
        %v653 = vsub.f32 %v181, %v652
        %v654 = vmul.f32 %v653, %v653
        %v655 = vadd.f32 %v649, %v654
        %v656 = vmul.f32 %v183, %v643
        %657 = vadd.xlane.f32.xlu0 %v656
        %v658 = vpop.xlane.xlu0 %657
        %v659 = vsub.f32 %v183, %v658
        %v660 = vmul.f32 %v659, %v659
        %v661 = vadd.f32 %v655, %v660
        %v662 = vsel %vm641, 1e+18, %v661
        %v663 = vmin.f32 %v622, %v661
        %664 = vmax.xlane.f32.xlu0 %v663
        %v665 = vpop.xlane.xlu0 %664
        %vm666 = vcmp.eq.f32.partialorder %v663, %v665
        %v667 = vsel %vm666, %v185, 128
        %v668 = vand.u32 %v667, 65535
        %v669 = vshra.s32 %v667, 16
        %v670 = vcvt.s32.f32 %v668
        %v671 = vcvt.s32.f32 %v669
        %672 = vmin.xlane.f32.xlu0 %v671
        %v673 = vpop.xlane.xlu0 %672
        %vm674 = vcmp.eq.f32.partialorder %v671, %v673
        %v675 = vsel %vm674, %v670, inf
        %676 = vmin.xlane.f32.xlu0 %v675
        %v677 = vpop.xlane.xlu0 %676
        %v678 = vcvt.f32.s32 %v677
        %v679 = vcvt.f32.s32 %v673
        %v680 = vshll.u32 %v679, 16
        %v681 = vadd.s32 %v680, %v678
        %vm682 = vcmp.eq.s32.totalorder %v185, %v681
        %v683 = vsel %vm682, 1, 0
        %v684 = vcvt.s32.f32 %v683
        %v685 = vmul.f32 %v179, %v684
        %686 = vadd.xlane.f32.xlu0 %v685
        %v687 = vpop.xlane.xlu0 %686
        %v688 = vsub.f32 %v179, %v687
        %v689 = vmul.f32 %v688, %v688
        %v690 = vadd.f32 %v689, 0.0
        %v691 = vmul.f32 %v181, %v684
        %692 = vadd.xlane.f32.xlu0 %v691
        %v693 = vpop.xlane.xlu0 %692
        %v694 = vsub.f32 %v181, %v693
        %v695 = vmul.f32 %v694, %v694
        %v696 = vadd.f32 %v690, %v695
        %v697 = vmul.f32 %v183, %v684
        %698 = vadd.xlane.f32.xlu0 %v697
        %v699 = vpop.xlane.xlu0 %698
        %v700 = vsub.f32 %v183, %v699
        %v701 = vmul.f32 %v700, %v700
        %v702 = vadd.f32 %v696, %v701
        %v703 = vsel %vm682, 1e+18, %v702
        %v704 = vmin.f32 %v663, %v702
        %705 = vmax.xlane.f32.xlu0 %v704
        %v706 = vpop.xlane.xlu0 %705
        %vm707 = vcmp.eq.f32.partialorder %v704, %v706
        %v708 = vsel %vm707, %v185, 128
        %v709 = vand.u32 %v708, 65535
        %v710 = vshra.s32 %v708, 16
        %v711 = vcvt.s32.f32 %v709
        %v712 = vcvt.s32.f32 %v710
        %713 = vmin.xlane.f32.xlu0 %v712
        %v714 = vpop.xlane.xlu0 %713
        %vm715 = vcmp.eq.f32.partialorder %v712, %v714
        %v716 = vsel %vm715, %v711, inf
        %717 = vmin.xlane.f32.xlu0 %v716
        %v718 = vpop.xlane.xlu0 %717
        %v719 = vcvt.f32.s32 %v718
        %v720 = vcvt.f32.s32 %v714
        %v721 = vshll.u32 %v720, 16
        %v722 = vadd.s32 %v721, %v719
        %vm723 = vcmp.eq.s32.totalorder %v185, %v722
        %v724 = vsel %vm723, 1, 0
        %v725 = vcvt.s32.f32 %v724
        %v726 = vmul.f32 %v179, %v725
        %727 = vadd.xlane.f32.xlu0 %v726
        %v728 = vpop.xlane.xlu0 %727
        %v729 = vsub.f32 %v179, %v728
        %v730 = vmul.f32 %v729, %v729
        %v731 = vadd.f32 %v730, 0.0
        %v732 = vmul.f32 %v181, %v725
        %733 = vadd.xlane.f32.xlu0 %v732
        %v734 = vpop.xlane.xlu0 %733
        %v735 = vsub.f32 %v181, %v734
        %v736 = vmul.f32 %v735, %v735
        %v737 = vadd.f32 %v731, %v736
        %v738 = vmul.f32 %v183, %v725
        %739 = vadd.xlane.f32.xlu0 %v738
        %v740 = vpop.xlane.xlu0 %739
        %v741 = vsub.f32 %v183, %v740
        %v742 = vmul.f32 %v741, %v741
        %v743 = vadd.f32 %v737, %v742
        %v744 = vsel %vm723, 1e+18, %v743
        %v745 = vmin.f32 %v704, %v743
        %746 = vmax.xlane.f32.xlu0 %v745
        %v747 = vpop.xlane.xlu0 %746
        %vm748 = vcmp.eq.f32.partialorder %v745, %v747
        %v749 = vsel %vm748, %v185, 128
        %v750 = vand.u32 %v749, 65535
        %v751 = vshra.s32 %v749, 16
        %v752 = vcvt.s32.f32 %v750
        %v753 = vcvt.s32.f32 %v751
        %754 = vmin.xlane.f32.xlu0 %v753
        %v755 = vpop.xlane.xlu0 %754
        %vm756 = vcmp.eq.f32.partialorder %v753, %v755
        %v757 = vsel %vm756, %v752, inf
        %758 = vmin.xlane.f32.xlu0 %v757
        %v759 = vpop.xlane.xlu0 %758
        %v760 = vcvt.f32.s32 %v759
        %v761 = vcvt.f32.s32 %v755
        %v762 = vshll.u32 %v761, 16
        %v763 = vadd.s32 %v762, %v760
        %vm764 = vcmp.eq.s32.totalorder %v185, %v763
        %v765 = vsel %vm764, 1, 0
        %v766 = vcvt.s32.f32 %v765
        %v767 = vmul.f32 %v179, %v766
        %768 = vadd.xlane.f32.xlu0 %v767
        %v769 = vpop.xlane.xlu0 %768
        %v770 = vsub.f32 %v179, %v769
        %v771 = vmul.f32 %v770, %v770
        %v772 = vadd.f32 %v771, 0.0
        %v773 = vmul.f32 %v181, %v766
        %774 = vadd.xlane.f32.xlu0 %v773
        %v775 = vpop.xlane.xlu0 %774
        %v776 = vsub.f32 %v181, %v775
        %v777 = vmul.f32 %v776, %v776
        %v778 = vadd.f32 %v772, %v777
        %v779 = vmul.f32 %v183, %v766
        %780 = vadd.xlane.f32.xlu0 %v779
        %v781 = vpop.xlane.xlu0 %780
        %v782 = vsub.f32 %v183, %v781
        %v783 = vmul.f32 %v782, %v782
        %v784 = vadd.f32 %v778, %v783
        %v785 = vsel %vm764, 1e+18, %v784
        %v786 = vmin.f32 %v745, %v784
        %787 = vmax.xlane.f32.xlu0 %v786
        %v788 = vpop.xlane.xlu0 %787
        %vm789 = vcmp.eq.f32.partialorder %v786, %v788
        %v790 = vsel %vm789, %v185, 128
        %v791 = vand.u32 %v790, 65535
        %v792 = vshra.s32 %v790, 16
        %v793 = vcvt.s32.f32 %v791
        %v794 = vcvt.s32.f32 %v792
        %795 = vmin.xlane.f32.xlu0 %v794
        %v796 = vpop.xlane.xlu0 %795
        %vm797 = vcmp.eq.f32.partialorder %v794, %v796
        %v798 = vsel %vm797, %v793, inf
        %799 = vmin.xlane.f32.xlu0 %v798
        %v800 = vpop.xlane.xlu0 %799
        %v801 = vcvt.f32.s32 %v800
        %v802 = vcvt.f32.s32 %v796
        %v803 = vshll.u32 %v802, 16
        %v804 = vadd.s32 %v803, %v801
        %vm805 = vcmp.eq.s32.totalorder %v185, %v804
        %v806 = vsel %vm805, 1, 0
        %v807 = vcvt.s32.f32 %v806
        %v808 = vmul.f32 %v179, %v807
        %809 = vadd.xlane.f32.xlu0 %v808
        %v810 = vpop.xlane.xlu0 %809
        %v811 = vsub.f32 %v179, %v810
        %v812 = vmul.f32 %v811, %v811
        %v813 = vadd.f32 %v812, 0.0
        %v814 = vmul.f32 %v181, %v807
        %815 = vadd.xlane.f32.xlu0 %v814
        %v816 = vpop.xlane.xlu0 %815
        %v817 = vsub.f32 %v181, %v816
        %v818 = vmul.f32 %v817, %v817
        %v819 = vadd.f32 %v813, %v818
        %v820 = vmul.f32 %v183, %v807
        %821 = vadd.xlane.f32.xlu0 %v820
        %v822 = vpop.xlane.xlu0 %821
        %v823 = vsub.f32 %v183, %v822
        %v824 = vmul.f32 %v823, %v823
        %v825 = vadd.f32 %v819, %v824
        %v826 = vsel %vm805, 1e+18, %v825
        %v827 = vmin.f32 %v786, %v825
        %828 = vmax.xlane.f32.xlu0 %v827
        %v829 = vpop.xlane.xlu0 %828
        %vm830 = vcmp.eq.f32.partialorder %v827, %v829
        %v831 = vsel %vm830, %v185, 128
        %v832 = vand.u32 %v831, 65535
        %v833 = vshra.s32 %v831, 16
        %v834 = vcvt.s32.f32 %v832
        %v835 = vcvt.s32.f32 %v833
        %836 = vmin.xlane.f32.xlu0 %v835
        %v837 = vpop.xlane.xlu0 %836
        %vm838 = vcmp.eq.f32.partialorder %v835, %v837
        %v839 = vsel %vm838, %v834, inf
        %840 = vmin.xlane.f32.xlu0 %v839
        %v841 = vpop.xlane.xlu0 %840
        %v842 = vcvt.f32.s32 %v841
        %v843 = vcvt.f32.s32 %v837
        %v844 = vshll.u32 %v843, 16
        %v845 = vadd.s32 %v844, %v842
        %vm846 = vcmp.eq.s32.totalorder %v185, %v845
        %v847 = vsel %vm846, 1, 0
        %v848 = vcvt.s32.f32 %v847
        %v849 = vmul.f32 %v179, %v848
        %850 = vadd.xlane.f32.xlu0 %v849
        %v851 = vpop.xlane.xlu0 %850
        %v852 = vsub.f32 %v179, %v851
        %v853 = vmul.f32 %v852, %v852
        %v854 = vadd.f32 %v853, 0.0
        %v855 = vmul.f32 %v181, %v848
        %856 = vadd.xlane.f32.xlu0 %v855
        %v857 = vpop.xlane.xlu0 %856
        %v858 = vsub.f32 %v181, %v857
        %v859 = vmul.f32 %v858, %v858
        %v860 = vadd.f32 %v854, %v859
        %v861 = vmul.f32 %v183, %v848
        %862 = vadd.xlane.f32.xlu0 %v861
        %v863 = vpop.xlane.xlu0 %862
        %v864 = vsub.f32 %v183, %v863
        %v865 = vmul.f32 %v864, %v864
        %v866 = vadd.f32 %v860, %v865
        %v867 = vsel %vm846, 1e+18, %v866
        %v868 = vmin.f32 %v827, %v866
        %869 = vmax.xlane.f32.xlu0 %v868
        %v870 = vpop.xlane.xlu0 %869
        %vm871 = vcmp.eq.f32.partialorder %v868, %v870
        %v872 = vsel %vm871, %v185, 128
        %v873 = vand.u32 %v872, 65535
        %v874 = vshra.s32 %v872, 16
        %v875 = vcvt.s32.f32 %v873
        %v876 = vcvt.s32.f32 %v874
        %877 = vmin.xlane.f32.xlu0 %v876
        %v878 = vpop.xlane.xlu0 %877
        %vm879 = vcmp.eq.f32.partialorder %v876, %v878
        %v880 = vsel %vm879, %v875, inf
        %881 = vmin.xlane.f32.xlu0 %v880
        %v882 = vpop.xlane.xlu0 %881
        %v883 = vcvt.f32.s32 %v882
        %v884 = vcvt.f32.s32 %v878
        %v885 = vshll.u32 %v884, 16
        %v886 = vadd.s32 %v885, %v883
        %vm887 = vcmp.eq.s32.totalorder %v185, %v886
        %v888 = vsel %vm887, 1, 0
        %v889 = vcvt.s32.f32 %v888
        %v890 = vmul.f32 %v179, %v889
        %891 = vadd.xlane.f32.xlu0 %v890
        %v892 = vpop.xlane.xlu0 %891
        %v893 = vsub.f32 %v179, %v892
        %v894 = vmul.f32 %v893, %v893
        %v895 = vadd.f32 %v894, 0.0
        %v896 = vmul.f32 %v181, %v889
        %897 = vadd.xlane.f32.xlu0 %v896
        %v898 = vpop.xlane.xlu0 %897
        %v899 = vsub.f32 %v181, %v898
        %v900 = vmul.f32 %v899, %v899
        %v901 = vadd.f32 %v895, %v900
        %v902 = vmul.f32 %v183, %v889
        %903 = vadd.xlane.f32.xlu0 %v902
        %v904 = vpop.xlane.xlu0 %903
        %v905 = vsub.f32 %v183, %v904
        %v906 = vmul.f32 %v905, %v905
        %v907 = vadd.f32 %v901, %v906
        %v908 = vsel %vm887, 1e+18, %v907
        %v909 = vmin.f32 %v868, %v907
        %910 = vmax.xlane.f32.xlu0 %v909
        %v911 = vpop.xlane.xlu0 %910
        %vm912 = vcmp.eq.f32.partialorder %v909, %v911
        %v913 = vsel %vm912, %v185, 128
        %v914 = vand.u32 %v913, 65535
        %v915 = vshra.s32 %v913, 16
        %v916 = vcvt.s32.f32 %v914
        %v917 = vcvt.s32.f32 %v915
        %918 = vmin.xlane.f32.xlu0 %v917
        %v919 = vpop.xlane.xlu0 %918
        %vm920 = vcmp.eq.f32.partialorder %v917, %v919
        %v921 = vsel %vm920, %v916, inf
        %922 = vmin.xlane.f32.xlu0 %v921
        %v923 = vpop.xlane.xlu0 %922
        %v924 = vcvt.f32.s32 %v923
        %v925 = vcvt.f32.s32 %v919
        %v926 = vshll.u32 %v925, 16
        %v927 = vadd.s32 %v926, %v924
        %vm928 = vcmp.eq.s32.totalorder %v185, %v927
        %v929 = vsel %vm928, 1, 0
        %v930 = vcvt.s32.f32 %v929
        %v931 = vmul.f32 %v179, %v930
        %932 = vadd.xlane.f32.xlu0 %v931
        %v933 = vpop.xlane.xlu0 %932
        %v934 = vsub.f32 %v179, %v933
        %v935 = vmul.f32 %v934, %v934
        %v936 = vadd.f32 %v935, 0.0
        %v937 = vmul.f32 %v181, %v930
        %938 = vadd.xlane.f32.xlu0 %v937
        %v939 = vpop.xlane.xlu0 %938
        %v940 = vsub.f32 %v181, %v939
        %v941 = vmul.f32 %v940, %v940
        %v942 = vadd.f32 %v936, %v941
        %v943 = vmul.f32 %v183, %v930
        %944 = vadd.xlane.f32.xlu0 %v943
        %v945 = vpop.xlane.xlu0 %944
        %v946 = vsub.f32 %v183, %v945
        %v947 = vmul.f32 %v946, %v946
        %v948 = vadd.f32 %v942, %v947
        %v949 = vsel %vm928, 1e+18, %v948
        %v950 = vmin.f32 %v909, %v948
        %951 = vmax.xlane.f32.xlu0 %v950
        %v952 = vpop.xlane.xlu0 %951
        %vm953 = vcmp.eq.f32.partialorder %v950, %v952
        %v954 = vsel %vm953, %v185, 128
        %v955 = vand.u32 %v954, 65535
        %v956 = vshra.s32 %v954, 16
        %v957 = vcvt.s32.f32 %v955
        %v958 = vcvt.s32.f32 %v956
        %959 = vmin.xlane.f32.xlu0 %v958
        %v960 = vpop.xlane.xlu0 %959
        %vm961 = vcmp.eq.f32.partialorder %v958, %v960
        %v962 = vsel %vm961, %v957, inf
        %963 = vmin.xlane.f32.xlu0 %v962
        %v964 = vpop.xlane.xlu0 %963
        %v965 = vcvt.f32.s32 %v964
        %v966 = vcvt.f32.s32 %v960
        %v967 = vshll.u32 %v966, 16
        %v968 = vadd.s32 %v967, %v965
        %vm969 = vcmp.eq.s32.totalorder %v185, %v968
        %v970 = vsel %vm969, 1, 0
        %v971 = vcvt.s32.f32 %v970
        %v972 = vmul.f32 %v179, %v971
        %973 = vadd.xlane.f32.xlu0 %v972
        %v974 = vpop.xlane.xlu0 %973
        %v975 = vsub.f32 %v179, %v974
        %v976 = vmul.f32 %v975, %v975
        %v977 = vadd.f32 %v976, 0.0
        %v978 = vmul.f32 %v181, %v971
        %979 = vadd.xlane.f32.xlu0 %v978
        %v980 = vpop.xlane.xlu0 %979
        %v981 = vsub.f32 %v181, %v980
        %v982 = vmul.f32 %v981, %v981
        %v983 = vadd.f32 %v977, %v982
        %v984 = vmul.f32 %v183, %v971
        %985 = vadd.xlane.f32.xlu0 %v984
        %v986 = vpop.xlane.xlu0 %985
        %v987 = vsub.f32 %v183, %v986
        %v988 = vmul.f32 %v987, %v987
        %v989 = vadd.f32 %v983, %v988
        %v990 = vsel %vm969, 1e+18, %v989
        %991 = vmin.xlane.f32.xlu0 %v211
        %v992 = vpop.xlane.xlu0 %991
        %993 = vmin.xlane.f32.xlu0 %v252
        %v994 = vpop.xlane.xlu0 %993
        %995 = vmin.xlane.f32.xlu0 %v293
        %v996 = vpop.xlane.xlu0 %995
        %997 = vmin.xlane.f32.xlu0 %v334
        %v998 = vpop.xlane.xlu0 %997
        %999 = vmin.xlane.f32.xlu0 %v375
        %v1000 = vpop.xlane.xlu0 %999
        %1001 = vmin.xlane.f32.xlu0 %v416
        %v1002 = vpop.xlane.xlu0 %1001
        %1003 = vmin.xlane.f32.xlu0 %v457
        %v1004 = vpop.xlane.xlu0 %1003
        %1005 = vmin.xlane.f32.xlu0 %v498
        %v1006 = vpop.xlane.xlu0 %1005
        %1007 = vmin.xlane.f32.xlu0 %v539
        %v1008 = vpop.xlane.xlu0 %1007
        %1009 = vmin.xlane.f32.xlu0 %v580
        %v1010 = vpop.xlane.xlu0 %1009
        %1011 = vmin.xlane.f32.xlu0 %v621
        %v1012 = vpop.xlane.xlu0 %1011
        %1013 = vmin.xlane.f32.xlu0 %v662
        %v1014 = vpop.xlane.xlu0 %1013
        %1015 = vmin.xlane.f32.xlu0 %v703
        %v1016 = vpop.xlane.xlu0 %1015
        %1017 = vmin.xlane.f32.xlu0 %v744
        %v1018 = vpop.xlane.xlu0 %1017
        %1019 = vmin.xlane.f32.xlu0 %v785
        %v1020 = vpop.xlane.xlu0 %1019
        %1021 = vmin.xlane.f32.xlu0 %v826
        %v1022 = vpop.xlane.xlu0 %1021
        %1023 = vmin.xlane.f32.xlu0 %v867
        %v1024 = vpop.xlane.xlu0 %1023
        %1025 = vmin.xlane.f32.xlu0 %v908
        %v1026 = vpop.xlane.xlu0 %1025
        %1027 = vmin.xlane.f32.xlu0 %v949
        %v1028 = vpop.xlane.xlu0 %1027
        %1029 = vmin.xlane.f32.xlu0 %v990
        %v1030 = vpop.xlane.xlu0 %1029
        %v1031 = vrsqrt.pop %v992
        %v1032 = vmul.f32 %v992, %v1031
        %vm1033 = vcmp.eq.f32.partialorder %v992, inf
        %v1034 = vsel %vm1033, %v992, %v1032
        %vm1035 = vcmp.eq.f32.partialorder %v992, 0.0
        %v1036 = vand.u32 %v992, 2147483648
        %v1037 = vsel %vm1035, %v1036, %v1034
        %v1038 = vrsqrt.pop %v994
        %v1039 = vmul.f32 %v994, %v1038
        %vm1040 = vcmp.eq.f32.partialorder %v994, inf
        %v1041 = vsel %vm1040, %v994, %v1039
        %vm1042 = vcmp.eq.f32.partialorder %v994, 0.0
        %v1043 = vand.u32 %v994, 2147483648
        %v1044 = vsel %vm1042, %v1043, %v1041
        %v1045 = vrsqrt.pop %v996
        %v1046 = vmul.f32 %v996, %v1045
        %vm1047 = vcmp.eq.f32.partialorder %v996, inf
        %v1048 = vsel %vm1047, %v996, %v1046
        %vm1049 = vcmp.eq.f32.partialorder %v996, 0.0
        %v1050 = vand.u32 %v996, 2147483648
        %v1051 = vsel %vm1049, %v1050, %v1048
        %v1052 = vrsqrt.pop %v998
        %v1053 = vmul.f32 %v998, %v1052
        %vm1054 = vcmp.eq.f32.partialorder %v998, inf
        %v1055 = vsel %vm1054, %v998, %v1053
        %vm1056 = vcmp.eq.f32.partialorder %v998, 0.0
        %v1057 = vand.u32 %v998, 2147483648
        %v1058 = vsel %vm1056, %v1057, %v1055
        %v1059 = vrsqrt.pop %v1000
        %v1060 = vmul.f32 %v1000, %v1059
        %vm1061 = vcmp.eq.f32.partialorder %v1000, inf
        %v1062 = vsel %vm1061, %v1000, %v1060
        %vm1063 = vcmp.eq.f32.partialorder %v1000, 0.0
        %v1064 = vand.u32 %v1000, 2147483648
        %v1065 = vsel %vm1063, %v1064, %v1062
        %v1066 = vrsqrt.pop %v1002
        %v1067 = vmul.f32 %v1002, %v1066
        %vm1068 = vcmp.eq.f32.partialorder %v1002, inf
        %v1069 = vsel %vm1068, %v1002, %v1067
        %vm1070 = vcmp.eq.f32.partialorder %v1002, 0.0
        %v1071 = vand.u32 %v1002, 2147483648
        %v1072 = vsel %vm1070, %v1071, %v1069
        %v1073 = vrsqrt.pop %v1004
        %v1074 = vmul.f32 %v1004, %v1073
        %vm1075 = vcmp.eq.f32.partialorder %v1004, inf
        %v1076 = vsel %vm1075, %v1004, %v1074
        %vm1077 = vcmp.eq.f32.partialorder %v1004, 0.0
        %v1078 = vand.u32 %v1004, 2147483648
        %v1079 = vsel %vm1077, %v1078, %v1076
        %v1080 = vrsqrt.pop %v1006
        %v1081 = vmul.f32 %v1006, %v1080
        %vm1082 = vcmp.eq.f32.partialorder %v1006, inf
        %v1083 = vsel %vm1082, %v1006, %v1081
        %vm1084 = vcmp.eq.f32.partialorder %v1006, 0.0
        %v1085 = vand.u32 %v1006, 2147483648
        %v1086 = vsel %vm1084, %v1085, %v1083
        %v1087 = vrsqrt.pop %v1008
        %v1088 = vmul.f32 %v1008, %v1087
        %vm1089 = vcmp.eq.f32.partialorder %v1008, inf
        %v1090 = vsel %vm1089, %v1008, %v1088
        %vm1091 = vcmp.eq.f32.partialorder %v1008, 0.0
        %v1092 = vand.u32 %v1008, 2147483648
        %v1093 = vsel %vm1091, %v1092, %v1090
        %v1094 = vrsqrt.pop %v1010
        %v1095 = vmul.f32 %v1010, %v1094
        %vm1096 = vcmp.eq.f32.partialorder %v1010, inf
        %v1097 = vsel %vm1096, %v1010, %v1095
        %vm1098 = vcmp.eq.f32.partialorder %v1010, 0.0
        %v1099 = vand.u32 %v1010, 2147483648
        %v1100 = vsel %vm1098, %v1099, %v1097
        %v1101 = vrsqrt.pop %v1012
        %v1102 = vmul.f32 %v1012, %v1101
        %vm1103 = vcmp.eq.f32.partialorder %v1012, inf
        %v1104 = vsel %vm1103, %v1012, %v1102
        %vm1105 = vcmp.eq.f32.partialorder %v1012, 0.0
        %v1106 = vand.u32 %v1012, 2147483648
        %v1107 = vsel %vm1105, %v1106, %v1104
        %v1108 = vrsqrt.pop %v1014
        %v1109 = vmul.f32 %v1014, %v1108
        %vm1110 = vcmp.eq.f32.partialorder %v1014, inf
        %v1111 = vsel %vm1110, %v1014, %v1109
        %vm1112 = vcmp.eq.f32.partialorder %v1014, 0.0
        %v1113 = vand.u32 %v1014, 2147483648
        %v1114 = vsel %vm1112, %v1113, %v1111
        %v1115 = vrsqrt.pop %v1016
        %v1116 = vmul.f32 %v1016, %v1115
        %vm1117 = vcmp.eq.f32.partialorder %v1016, inf
        %v1118 = vsel %vm1117, %v1016, %v1116
        %vm1119 = vcmp.eq.f32.partialorder %v1016, 0.0
        %v1120 = vand.u32 %v1016, 2147483648
        %v1121 = vsel %vm1119, %v1120, %v1118
        %v1122 = vrsqrt.pop %v1018
        %v1123 = vmul.f32 %v1018, %v1122
        %vm1124 = vcmp.eq.f32.partialorder %v1018, inf
        %v1125 = vsel %vm1124, %v1018, %v1123
        %vm1126 = vcmp.eq.f32.partialorder %v1018, 0.0
        %v1127 = vand.u32 %v1018, 2147483648
        %v1128 = vsel %vm1126, %v1127, %v1125
        %v1129 = vrsqrt.pop %v1020
        %v1130 = vmul.f32 %v1020, %v1129
        %vm1131 = vcmp.eq.f32.partialorder %v1020, inf
        %v1132 = vsel %vm1131, %v1020, %v1130
        %vm1133 = vcmp.eq.f32.partialorder %v1020, 0.0
        %v1134 = vand.u32 %v1020, 2147483648
        %v1135 = vsel %vm1133, %v1134, %v1132
        %v1136 = vrsqrt.pop %v1022
        %v1137 = vmul.f32 %v1022, %v1136
        %vm1138 = vcmp.eq.f32.partialorder %v1022, inf
        %v1139 = vsel %vm1138, %v1022, %v1137
        %vm1140 = vcmp.eq.f32.partialorder %v1022, 0.0
        %v1141 = vand.u32 %v1022, 2147483648
        %v1142 = vsel %vm1140, %v1141, %v1139
        %v1143 = vrsqrt.pop %v1024
        %v1144 = vmul.f32 %v1024, %v1143
        %vm1145 = vcmp.eq.f32.partialorder %v1024, inf
        %v1146 = vsel %vm1145, %v1024, %v1144
        %vm1147 = vcmp.eq.f32.partialorder %v1024, 0.0
        %v1148 = vand.u32 %v1024, 2147483648
        %v1149 = vsel %vm1147, %v1148, %v1146
        %v1150 = vrsqrt.pop %v1026
        %v1151 = vmul.f32 %v1026, %v1150
        %vm1152 = vcmp.eq.f32.partialorder %v1026, inf
        %v1153 = vsel %vm1152, %v1026, %v1151
        %vm1154 = vcmp.eq.f32.partialorder %v1026, 0.0
        %v1155 = vand.u32 %v1026, 2147483648
        %v1156 = vsel %vm1154, %v1155, %v1153
        %v1157 = vrsqrt.pop %v1028
        %v1158 = vmul.f32 %v1028, %v1157
        %vm1159 = vcmp.eq.f32.partialorder %v1028, inf
        %v1160 = vsel %vm1159, %v1028, %v1158
        %vm1161 = vcmp.eq.f32.partialorder %v1028, 0.0
        %v1162 = vand.u32 %v1028, 2147483648
        %v1163 = vsel %vm1161, %v1162, %v1160
        %v1164 = vrsqrt.pop %v1030
        %v1165 = vmul.f32 %v1030, %v1164
        %vm1166 = vcmp.eq.f32.partialorder %v1030, inf
        %v1167 = vsel %vm1166, %v1030, %v1165
        %vm1168 = vcmp.eq.f32.partialorder %v1030, 0.0
        %v1169 = vand.u32 %v1030, 2147483648
        %v1170 = vsel %vm1168, %v1169, %v1167
        %v1171 = vmul.f32 %v992, -10000.0
        %v1172 = vmul.f32 %v994, -10000.0
        %v1173 = vmul.f32 %v996, -10000.0
        %v1174 = vmul.f32 %v998, -10000.0
        %v1175 = vmul.f32 %v1000, -10000.0
        %v1176 = vmul.f32 %v1002, -10000.0
        %v1177 = vmul.f32 %v1004, -10000.0
        %v1178 = vmul.f32 %v1006, -10000.0
        %v1179 = vmul.f32 %v1008, -10000.0
        %v1180 = vmul.f32 %v1010, -10000.0
        %v1181 = vmul.f32 %v1012, -10000.0
        %v1182 = vmul.f32 %v1014, -10000.0
        %v1183 = vmul.f32 %v1016, -10000.0
        %v1184 = vmul.f32 %v1018, -10000.0
        %v1185 = vmul.f32 %v1020, -10000.0
        %v1186 = vmul.f32 %v1022, -10000.0
        %v1187 = vmul.f32 %v1024, -10000.0
        %v1188 = vmul.f32 %v1026, -10000.0
        %v1189 = vmul.f32 %v1028, -10000.0
        %v1190 = vmul.f32 %v1030, -10000.0
        %v1191 = vmul.f32 %v1171, 1.442695
        %v1192 = vpow.pop %v1191
        %v1193 = vmul.f32 %v1172, 1.442695
        %v1194 = vpow.pop %v1193
        %v1195 = vmul.f32 %v1173, 1.442695
        %v1196 = vpow.pop %v1195
        %v1197 = vmul.f32 %v1174, 1.442695
        %v1198 = vpow.pop %v1197
        %v1199 = vmul.f32 %v1175, 1.442695
        %v1200 = vpow.pop %v1199
        %v1201 = vmul.f32 %v1176, 1.442695
        %v1202 = vpow.pop %v1201
        %v1203 = vmul.f32 %v1177, 1.442695
        %v1204 = vpow.pop %v1203
        %v1205 = vmul.f32 %v1178, 1.442695
        %v1206 = vpow.pop %v1205
        %v1207 = vmul.f32 %v1179, 1.442695
        %v1208 = vpow.pop %v1207
        %v1209 = vmul.f32 %v1180, 1.442695
        %v1210 = vpow.pop %v1209
        %v1211 = vmul.f32 %v1181, 1.442695
        %v1212 = vpow.pop %v1211
        %v1213 = vmul.f32 %v1182, 1.442695
        %v1214 = vpow.pop %v1213
        %v1215 = vmul.f32 %v1183, 1.442695
        %v1216 = vpow.pop %v1215
        %v1217 = vmul.f32 %v1184, 1.442695
        %v1218 = vpow.pop %v1217
        %v1219 = vmul.f32 %v1185, 1.442695
        %v1220 = vpow.pop %v1219
        %v1221 = vmul.f32 %v1186, 1.442695
        %v1222 = vpow.pop %v1221
        %v1223 = vmul.f32 %v1187, 1.442695
        %v1224 = vpow.pop %v1223
        %v1225 = vmul.f32 %v1188, 1.442695
        %v1226 = vpow.pop %v1225
        %v1227 = vmul.f32 %v1189, 1.442695
        %v1228 = vpow.pop %v1227
        %v1229 = vmul.f32 %v1190, 1.442695
        %v1230 = vpow.pop %v1229
        %v1231 = vmul.f32 %v1037, %v1192
        %v1232 = vmul.f32 %v1044, %v1194
        %v1233 = vmul.f32 %v1051, %v1196
        %v1234 = vmul.f32 %v1058, %v1198
        %v1235 = vmul.f32 %v1065, %v1200
        %v1236 = vmul.f32 %v1072, %v1202
        %v1237 = vmul.f32 %v1079, %v1204
        %v1238 = vmul.f32 %v1086, %v1206
        %v1239 = vmul.f32 %v1093, %v1208
        %v1240 = vmul.f32 %v1100, %v1210
        %v1241 = vmul.f32 %v1107, %v1212
        %v1242 = vmul.f32 %v1114, %v1214
        %v1243 = vmul.f32 %v1121, %v1216
        %v1244 = vmul.f32 %v1128, %v1218
        %v1245 = vmul.f32 %v1135, %v1220
        %v1246 = vmul.f32 %v1142, %v1222
        %v1247 = vmul.f32 %v1149, %v1224
        %v1248 = vmul.f32 %v1156, %v1226
        %v1249 = vmul.f32 %v1163, %v1228
        %v1250 = vmul.f32 %v1170, %v1230
        %v1251 = vsub.f32 0.0, %v1231
        %v1252 = vsub.f32 0.0, %v1232
        %v1253 = vsub.f32 0.0, %v1233
        %v1254 = vsub.f32 0.0, %v1234
        %v1255 = vsub.f32 0.0, %v1235
        %v1256 = vsub.f32 0.0, %v1236
        %v1257 = vsub.f32 0.0, %v1237
        %v1258 = vsub.f32 0.0, %v1238
        %v1259 = vsub.f32 0.0, %v1239
        %v1260 = vsub.f32 0.0, %v1240
        %v1261 = vsub.f32 0.0, %v1241
        %v1262 = vsub.f32 0.0, %v1242
        %v1263 = vsub.f32 0.0, %v1243
        %v1264 = vsub.f32 0.0, %v1244
        %v1265 = vsub.f32 0.0, %v1245
        %v1266 = vsub.f32 0.0, %v1246
        %v1267 = vsub.f32 0.0, %v1247
        %v1268 = vsub.f32 0.0, %v1248
        %v1269 = vsub.f32 0.0, %v1249
        %v1270 = vsub.f32 0.0, %v1250
        %vm1271 = vcmp.eq.f32.partialorder %v211, %v992
        %vm1272 = vcmp.eq.f32.partialorder %v252, %v994
        %vm1273 = vcmp.eq.f32.partialorder %v293, %v996
        %vm1274 = vcmp.eq.f32.partialorder %v334, %v998
        %vm1275 = vcmp.eq.f32.partialorder %v375, %v1000
        %vm1276 = vcmp.eq.f32.partialorder %v416, %v1002
        %vm1277 = vcmp.eq.f32.partialorder %v457, %v1004
        %vm1278 = vcmp.eq.f32.partialorder %v498, %v1006
        %vm1279 = vcmp.eq.f32.partialorder %v539, %v1008
        %vm1280 = vcmp.eq.f32.partialorder %v580, %v1010
        %vm1281 = vcmp.eq.f32.partialorder %v621, %v1012
        %vm1282 = vcmp.eq.f32.partialorder %v662, %v1014
        %vm1283 = vcmp.eq.f32.partialorder %v703, %v1016
        %vm1284 = vcmp.eq.f32.partialorder %v744, %v1018
        %vm1285 = vcmp.eq.f32.partialorder %v785, %v1020
        %vm1286 = vcmp.eq.f32.partialorder %v826, %v1022
        %vm1287 = vcmp.eq.f32.partialorder %v867, %v1024
        %vm1288 = vcmp.eq.f32.partialorder %v908, %v1026
        %vm1289 = vcmp.eq.f32.partialorder %v949, %v1028
        %vm1290 = vcmp.eq.f32.partialorder %v990, %v1030
        %v1291 = vsel %vm1271, 1e+18, %v211
        %v1292 = vsel %vm1272, 1e+18, %v252
        %v1293 = vsel %vm1273, 1e+18, %v293
        %v1294 = vsel %vm1274, 1e+18, %v334
        %v1295 = vsel %vm1275, 1e+18, %v375
        %v1296 = vsel %vm1276, 1e+18, %v416
        %v1297 = vsel %vm1277, 1e+18, %v457
        %v1298 = vsel %vm1278, 1e+18, %v498
        %v1299 = vsel %vm1279, 1e+18, %v539
        %v1300 = vsel %vm1280, 1e+18, %v580
        %v1301 = vsel %vm1281, 1e+18, %v621
        %v1302 = vsel %vm1282, 1e+18, %v662
        %v1303 = vsel %vm1283, 1e+18, %v703
        %v1304 = vsel %vm1284, 1e+18, %v744
        %v1305 = vsel %vm1285, 1e+18, %v785
        %v1306 = vsel %vm1286, 1e+18, %v826
        %v1307 = vsel %vm1287, 1e+18, %v867
        %v1308 = vsel %vm1288, 1e+18, %v908
        %v1309 = vsel %vm1289, 1e+18, %v949
        %v1310 = vsel %vm1290, 1e+18, %v990
        %1311 = vmin.xlane.f32.xlu0 %v1291
        %v1312 = vpop.xlane.xlu0 %1311
        %1313 = vmin.xlane.f32.xlu0 %v1292
        %v1314 = vpop.xlane.xlu0 %1313
        %1315 = vmin.xlane.f32.xlu0 %v1293
        %v1316 = vpop.xlane.xlu0 %1315
        %1317 = vmin.xlane.f32.xlu0 %v1294
        %v1318 = vpop.xlane.xlu0 %1317
        %1319 = vmin.xlane.f32.xlu0 %v1295
        %v1320 = vpop.xlane.xlu0 %1319
        %1321 = vmin.xlane.f32.xlu0 %v1296
        %v1322 = vpop.xlane.xlu0 %1321
        %1323 = vmin.xlane.f32.xlu0 %v1297
        %v1324 = vpop.xlane.xlu0 %1323
        %1325 = vmin.xlane.f32.xlu0 %v1298
        %v1326 = vpop.xlane.xlu0 %1325
        %1327 = vmin.xlane.f32.xlu0 %v1299
        %v1328 = vpop.xlane.xlu0 %1327
        %1329 = vmin.xlane.f32.xlu0 %v1300
        %v1330 = vpop.xlane.xlu0 %1329
        %1331 = vmin.xlane.f32.xlu0 %v1301
        %v1332 = vpop.xlane.xlu0 %1331
        %1333 = vmin.xlane.f32.xlu0 %v1302
        %v1334 = vpop.xlane.xlu0 %1333
        %1335 = vmin.xlane.f32.xlu0 %v1303
        %v1336 = vpop.xlane.xlu0 %1335
        %1337 = vmin.xlane.f32.xlu0 %v1304
        %v1338 = vpop.xlane.xlu0 %1337
        %1339 = vmin.xlane.f32.xlu0 %v1305
        %v1340 = vpop.xlane.xlu0 %1339
        %1341 = vmin.xlane.f32.xlu0 %v1306
        %v1342 = vpop.xlane.xlu0 %1341
        %1343 = vmin.xlane.f32.xlu0 %v1307
        %v1344 = vpop.xlane.xlu0 %1343
        %1345 = vmin.xlane.f32.xlu0 %v1308
        %v1346 = vpop.xlane.xlu0 %1345
        %1347 = vmin.xlane.f32.xlu0 %v1309
        %v1348 = vpop.xlane.xlu0 %1347
        %1349 = vmin.xlane.f32.xlu0 %v1310
        %v1350 = vpop.xlane.xlu0 %1349
        %v1351 = vrsqrt.pop %v1312
        %v1352 = vmul.f32 %v1312, %v1351
        %vm1353 = vcmp.eq.f32.partialorder %v1312, inf
        %v1354 = vsel %vm1353, %v1312, %v1352
        %vm1355 = vcmp.eq.f32.partialorder %v1312, 0.0
        %v1356 = vand.u32 %v1312, 2147483648
        %v1357 = vsel %vm1355, %v1356, %v1354
        %v1358 = vrsqrt.pop %v1314
        %v1359 = vmul.f32 %v1314, %v1358
        %vm1360 = vcmp.eq.f32.partialorder %v1314, inf
        %v1361 = vsel %vm1360, %v1314, %v1359
        %vm1362 = vcmp.eq.f32.partialorder %v1314, 0.0
        %v1363 = vand.u32 %v1314, 2147483648
        %v1364 = vsel %vm1362, %v1363, %v1361
        %v1365 = vrsqrt.pop %v1316
        %v1366 = vmul.f32 %v1316, %v1365
        %vm1367 = vcmp.eq.f32.partialorder %v1316, inf
        %v1368 = vsel %vm1367, %v1316, %v1366
        %vm1369 = vcmp.eq.f32.partialorder %v1316, 0.0
        %v1370 = vand.u32 %v1316, 2147483648
        %v1371 = vsel %vm1369, %v1370, %v1368
        %v1372 = vrsqrt.pop %v1318
        %v1373 = vmul.f32 %v1318, %v1372
        %vm1374 = vcmp.eq.f32.partialorder %v1318, inf
        %v1375 = vsel %vm1374, %v1318, %v1373
        %vm1376 = vcmp.eq.f32.partialorder %v1318, 0.0
        %v1377 = vand.u32 %v1318, 2147483648
        %v1378 = vsel %vm1376, %v1377, %v1375
        %v1379 = vrsqrt.pop %v1320
        %v1380 = vmul.f32 %v1320, %v1379
        %vm1381 = vcmp.eq.f32.partialorder %v1320, inf
        %v1382 = vsel %vm1381, %v1320, %v1380
        %vm1383 = vcmp.eq.f32.partialorder %v1320, 0.0
        %v1384 = vand.u32 %v1320, 2147483648
        %v1385 = vsel %vm1383, %v1384, %v1382
        %v1386 = vrsqrt.pop %v1322
        %v1387 = vmul.f32 %v1322, %v1386
        %vm1388 = vcmp.eq.f32.partialorder %v1322, inf
        %v1389 = vsel %vm1388, %v1322, %v1387
        %vm1390 = vcmp.eq.f32.partialorder %v1322, 0.0
        %v1391 = vand.u32 %v1322, 2147483648
        %v1392 = vsel %vm1390, %v1391, %v1389
        %v1393 = vrsqrt.pop %v1324
        %v1394 = vmul.f32 %v1324, %v1393
        %vm1395 = vcmp.eq.f32.partialorder %v1324, inf
        %v1396 = vsel %vm1395, %v1324, %v1394
        %vm1397 = vcmp.eq.f32.partialorder %v1324, 0.0
        %v1398 = vand.u32 %v1324, 2147483648
        %v1399 = vsel %vm1397, %v1398, %v1396
        %v1400 = vrsqrt.pop %v1326
        %v1401 = vmul.f32 %v1326, %v1400
        %vm1402 = vcmp.eq.f32.partialorder %v1326, inf
        %v1403 = vsel %vm1402, %v1326, %v1401
        %vm1404 = vcmp.eq.f32.partialorder %v1326, 0.0
        %v1405 = vand.u32 %v1326, 2147483648
        %v1406 = vsel %vm1404, %v1405, %v1403
        %v1407 = vrsqrt.pop %v1328
        %v1408 = vmul.f32 %v1328, %v1407
        %vm1409 = vcmp.eq.f32.partialorder %v1328, inf
        %v1410 = vsel %vm1409, %v1328, %v1408
        %vm1411 = vcmp.eq.f32.partialorder %v1328, 0.0
        %v1412 = vand.u32 %v1328, 2147483648
        %v1413 = vsel %vm1411, %v1412, %v1410
        %v1414 = vrsqrt.pop %v1330
        %v1415 = vmul.f32 %v1330, %v1414
        %vm1416 = vcmp.eq.f32.partialorder %v1330, inf
        %v1417 = vsel %vm1416, %v1330, %v1415
        %vm1418 = vcmp.eq.f32.partialorder %v1330, 0.0
        %v1419 = vand.u32 %v1330, 2147483648
        %v1420 = vsel %vm1418, %v1419, %v1417
        %v1421 = vrsqrt.pop %v1332
        %v1422 = vmul.f32 %v1332, %v1421
        %vm1423 = vcmp.eq.f32.partialorder %v1332, inf
        %v1424 = vsel %vm1423, %v1332, %v1422
        %vm1425 = vcmp.eq.f32.partialorder %v1332, 0.0
        %v1426 = vand.u32 %v1332, 2147483648
        %v1427 = vsel %vm1425, %v1426, %v1424
        %v1428 = vrsqrt.pop %v1334
        %v1429 = vmul.f32 %v1334, %v1428
        %vm1430 = vcmp.eq.f32.partialorder %v1334, inf
        %v1431 = vsel %vm1430, %v1334, %v1429
        %vm1432 = vcmp.eq.f32.partialorder %v1334, 0.0
        %v1433 = vand.u32 %v1334, 2147483648
        %v1434 = vsel %vm1432, %v1433, %v1431
        %v1435 = vrsqrt.pop %v1336
        %v1436 = vmul.f32 %v1336, %v1435
        %vm1437 = vcmp.eq.f32.partialorder %v1336, inf
        %v1438 = vsel %vm1437, %v1336, %v1436
        %vm1439 = vcmp.eq.f32.partialorder %v1336, 0.0
        %v1440 = vand.u32 %v1336, 2147483648
        %v1441 = vsel %vm1439, %v1440, %v1438
        %v1442 = vrsqrt.pop %v1338
        %v1443 = vmul.f32 %v1338, %v1442
        %vm1444 = vcmp.eq.f32.partialorder %v1338, inf
        %v1445 = vsel %vm1444, %v1338, %v1443
        %vm1446 = vcmp.eq.f32.partialorder %v1338, 0.0
        %v1447 = vand.u32 %v1338, 2147483648
        %v1448 = vsel %vm1446, %v1447, %v1445
        %v1449 = vrsqrt.pop %v1340
        %v1450 = vmul.f32 %v1340, %v1449
        %vm1451 = vcmp.eq.f32.partialorder %v1340, inf
        %v1452 = vsel %vm1451, %v1340, %v1450
        %vm1453 = vcmp.eq.f32.partialorder %v1340, 0.0
        %v1454 = vand.u32 %v1340, 2147483648
        %v1455 = vsel %vm1453, %v1454, %v1452
        %v1456 = vrsqrt.pop %v1342
        %v1457 = vmul.f32 %v1342, %v1456
        %vm1458 = vcmp.eq.f32.partialorder %v1342, inf
        %v1459 = vsel %vm1458, %v1342, %v1457
        %vm1460 = vcmp.eq.f32.partialorder %v1342, 0.0
        %v1461 = vand.u32 %v1342, 2147483648
        %v1462 = vsel %vm1460, %v1461, %v1459
        %v1463 = vrsqrt.pop %v1344
        %v1464 = vmul.f32 %v1344, %v1463
        %vm1465 = vcmp.eq.f32.partialorder %v1344, inf
        %v1466 = vsel %vm1465, %v1344, %v1464
        %vm1467 = vcmp.eq.f32.partialorder %v1344, 0.0
        %v1468 = vand.u32 %v1344, 2147483648
        %v1469 = vsel %vm1467, %v1468, %v1466
        %v1470 = vrsqrt.pop %v1346
        %v1471 = vmul.f32 %v1346, %v1470
        %vm1472 = vcmp.eq.f32.partialorder %v1346, inf
        %v1473 = vsel %vm1472, %v1346, %v1471
        %vm1474 = vcmp.eq.f32.partialorder %v1346, 0.0
        %v1475 = vand.u32 %v1346, 2147483648
        %v1476 = vsel %vm1474, %v1475, %v1473
        %v1477 = vrsqrt.pop %v1348
        %v1478 = vmul.f32 %v1348, %v1477
        %vm1479 = vcmp.eq.f32.partialorder %v1348, inf
        %v1480 = vsel %vm1479, %v1348, %v1478
        %vm1481 = vcmp.eq.f32.partialorder %v1348, 0.0
        %v1482 = vand.u32 %v1348, 2147483648
        %v1483 = vsel %vm1481, %v1482, %v1480
        %v1484 = vrsqrt.pop %v1350
        %v1485 = vmul.f32 %v1350, %v1484
        %vm1486 = vcmp.eq.f32.partialorder %v1350, inf
        %v1487 = vsel %vm1486, %v1350, %v1485
        %vm1488 = vcmp.eq.f32.partialorder %v1350, 0.0
        %v1489 = vand.u32 %v1350, 2147483648
        %v1490 = vsel %vm1488, %v1489, %v1487
        %v1491 = vmul.f32 %v1312, -10000.0
        %v1492 = vmul.f32 %v1314, -10000.0
        %v1493 = vmul.f32 %v1316, -10000.0
        %v1494 = vmul.f32 %v1318, -10000.0
        %v1495 = vmul.f32 %v1320, -10000.0
        %v1496 = vmul.f32 %v1322, -10000.0
        %v1497 = vmul.f32 %v1324, -10000.0
        %v1498 = vmul.f32 %v1326, -10000.0
        %v1499 = vmul.f32 %v1328, -10000.0
        %v1500 = vmul.f32 %v1330, -10000.0
        %v1501 = vmul.f32 %v1332, -10000.0
        %v1502 = vmul.f32 %v1334, -10000.0
        %v1503 = vmul.f32 %v1336, -10000.0
        %v1504 = vmul.f32 %v1338, -10000.0
        %v1505 = vmul.f32 %v1340, -10000.0
        %v1506 = vmul.f32 %v1342, -10000.0
        %v1507 = vmul.f32 %v1344, -10000.0
        %v1508 = vmul.f32 %v1346, -10000.0
        %v1509 = vmul.f32 %v1348, -10000.0
        %v1510 = vmul.f32 %v1350, -10000.0
        %v1511 = vmul.f32 %v1491, 1.442695
        %v1512 = vpow.pop %v1511
        %v1513 = vmul.f32 %v1492, 1.442695
        %v1514 = vpow.pop %v1513
        %v1515 = vmul.f32 %v1493, 1.442695
        %v1516 = vpow.pop %v1515
        %v1517 = vmul.f32 %v1494, 1.442695
        %v1518 = vpow.pop %v1517
        %v1519 = vmul.f32 %v1495, 1.442695
        %v1520 = vpow.pop %v1519
        %v1521 = vmul.f32 %v1496, 1.442695
        %v1522 = vpow.pop %v1521
        %v1523 = vmul.f32 %v1497, 1.442695
        %v1524 = vpow.pop %v1523
        %v1525 = vmul.f32 %v1498, 1.442695
        %v1526 = vpow.pop %v1525
        %v1527 = vmul.f32 %v1499, 1.442695
        %v1528 = vpow.pop %v1527
        %v1529 = vmul.f32 %v1500, 1.442695
        %v1530 = vpow.pop %v1529
        %v1531 = vmul.f32 %v1501, 1.442695
        %v1532 = vpow.pop %v1531
        %v1533 = vmul.f32 %v1502, 1.442695
        %v1534 = vpow.pop %v1533
        %v1535 = vmul.f32 %v1503, 1.442695
        %v1536 = vpow.pop %v1535
        %v1537 = vmul.f32 %v1504, 1.442695
        %v1538 = vpow.pop %v1537
        %v1539 = vmul.f32 %v1505, 1.442695
        %v1540 = vpow.pop %v1539
        %v1541 = vmul.f32 %v1506, 1.442695
        %v1542 = vpow.pop %v1541
        %v1543 = vmul.f32 %v1507, 1.442695
        %v1544 = vpow.pop %v1543
        %v1545 = vmul.f32 %v1508, 1.442695
        %v1546 = vpow.pop %v1545
        %v1547 = vmul.f32 %v1509, 1.442695
        %v1548 = vpow.pop %v1547
        %v1549 = vmul.f32 %v1510, 1.442695
        %v1550 = vpow.pop %v1549
        %v1551 = vmul.f32 %v1357, %v1512
        %v1552 = vmul.f32 %v1364, %v1514
        %v1553 = vmul.f32 %v1371, %v1516
        %v1554 = vmul.f32 %v1378, %v1518
        %v1555 = vmul.f32 %v1385, %v1520
        %v1556 = vmul.f32 %v1392, %v1522
        %v1557 = vmul.f32 %v1399, %v1524
        %v1558 = vmul.f32 %v1406, %v1526
        %v1559 = vmul.f32 %v1413, %v1528
        %v1560 = vmul.f32 %v1420, %v1530
        %v1561 = vmul.f32 %v1427, %v1532
        %v1562 = vmul.f32 %v1434, %v1534
        %v1563 = vmul.f32 %v1441, %v1536
        %v1564 = vmul.f32 %v1448, %v1538
        %v1565 = vmul.f32 %v1455, %v1540
        %v1566 = vmul.f32 %v1462, %v1542
        %v1567 = vmul.f32 %v1469, %v1544
        %v1568 = vmul.f32 %v1476, %v1546
        %v1569 = vmul.f32 %v1483, %v1548
        %v1570 = vmul.f32 %v1490, %v1550
        %v1571 = vsub.f32 %v1251, %v1551
        %v1572 = vsub.f32 %v1252, %v1552
        %v1573 = vsub.f32 %v1253, %v1553
        %v1574 = vsub.f32 %v1254, %v1554
        %v1575 = vsub.f32 %v1255, %v1555
        %v1576 = vsub.f32 %v1256, %v1556
        %v1577 = vsub.f32 %v1257, %v1557
        %v1578 = vsub.f32 %v1258, %v1558
        %v1579 = vsub.f32 %v1259, %v1559
        %v1580 = vsub.f32 %v1260, %v1560
        %v1581 = vsub.f32 %v1261, %v1561
        %v1582 = vsub.f32 %v1262, %v1562
        %v1583 = vsub.f32 %v1263, %v1563
        %v1584 = vsub.f32 %v1264, %v1564
        %v1585 = vsub.f32 %v1265, %v1565
        %v1586 = vsub.f32 %v1266, %v1566
        %v1587 = vsub.f32 %v1267, %v1567
        %v1588 = vsub.f32 %v1268, %v1568
        %v1589 = vsub.f32 %v1269, %v1569
        %v1590 = vsub.f32 %v1270, %v1570
        %vm1591 = vcmp.eq.f32.partialorder %v1291, %v1312
        %vm1592 = vcmp.eq.f32.partialorder %v1292, %v1314
        %vm1593 = vcmp.eq.f32.partialorder %v1293, %v1316
        %vm1594 = vcmp.eq.f32.partialorder %v1294, %v1318
        %vm1595 = vcmp.eq.f32.partialorder %v1295, %v1320
        %vm1596 = vcmp.eq.f32.partialorder %v1296, %v1322
        %vm1597 = vcmp.eq.f32.partialorder %v1297, %v1324
        %vm1598 = vcmp.eq.f32.partialorder %v1298, %v1326
        %vm1599 = vcmp.eq.f32.partialorder %v1299, %v1328
        %vm1600 = vcmp.eq.f32.partialorder %v1300, %v1330
        %vm1601 = vcmp.eq.f32.partialorder %v1301, %v1332
        %vm1602 = vcmp.eq.f32.partialorder %v1302, %v1334
        %vm1603 = vcmp.eq.f32.partialorder %v1303, %v1336
        %vm1604 = vcmp.eq.f32.partialorder %v1304, %v1338
        %vm1605 = vcmp.eq.f32.partialorder %v1305, %v1340
        %vm1606 = vcmp.eq.f32.partialorder %v1306, %v1342
        %vm1607 = vcmp.eq.f32.partialorder %v1307, %v1344
        %vm1608 = vcmp.eq.f32.partialorder %v1308, %v1346
        %vm1609 = vcmp.eq.f32.partialorder %v1309, %v1348
        %vm1610 = vcmp.eq.f32.partialorder %v1310, %v1350
        %v1611 = vsel %vm1591, 1e+18, %v1291
        %v1612 = vsel %vm1592, 1e+18, %v1292
        %v1613 = vsel %vm1593, 1e+18, %v1293
        %v1614 = vsel %vm1594, 1e+18, %v1294
        %v1615 = vsel %vm1595, 1e+18, %v1295
        %v1616 = vsel %vm1596, 1e+18, %v1296
        %v1617 = vsel %vm1597, 1e+18, %v1297
        %v1618 = vsel %vm1598, 1e+18, %v1298
        %v1619 = vsel %vm1599, 1e+18, %v1299
        %v1620 = vsel %vm1600, 1e+18, %v1300
        %v1621 = vsel %vm1601, 1e+18, %v1301
        %v1622 = vsel %vm1602, 1e+18, %v1302
        %v1623 = vsel %vm1603, 1e+18, %v1303
        %v1624 = vsel %vm1604, 1e+18, %v1304
        %v1625 = vsel %vm1605, 1e+18, %v1305
        %v1626 = vsel %vm1606, 1e+18, %v1306
        %v1627 = vsel %vm1607, 1e+18, %v1307
        %v1628 = vsel %vm1608, 1e+18, %v1308
        %v1629 = vsel %vm1609, 1e+18, %v1309
        %v1630 = vsel %vm1610, 1e+18, %v1310
        %1631 = vmin.xlane.f32.xlu0 %v1611
        %v1632 = vpop.xlane.xlu0 %1631
        %1633 = vmin.xlane.f32.xlu0 %v1612
        %v1634 = vpop.xlane.xlu0 %1633
        %1635 = vmin.xlane.f32.xlu0 %v1613
        %v1636 = vpop.xlane.xlu0 %1635
        %1637 = vmin.xlane.f32.xlu0 %v1614
        %v1638 = vpop.xlane.xlu0 %1637
        %1639 = vmin.xlane.f32.xlu0 %v1615
        %v1640 = vpop.xlane.xlu0 %1639
        %1641 = vmin.xlane.f32.xlu0 %v1616
        %v1642 = vpop.xlane.xlu0 %1641
        %1643 = vmin.xlane.f32.xlu0 %v1617
        %v1644 = vpop.xlane.xlu0 %1643
        %1645 = vmin.xlane.f32.xlu0 %v1618
        %v1646 = vpop.xlane.xlu0 %1645
        %1647 = vmin.xlane.f32.xlu0 %v1619
        %v1648 = vpop.xlane.xlu0 %1647
        %1649 = vmin.xlane.f32.xlu0 %v1620
        %v1650 = vpop.xlane.xlu0 %1649
        %1651 = vmin.xlane.f32.xlu0 %v1621
        %v1652 = vpop.xlane.xlu0 %1651
        %1653 = vmin.xlane.f32.xlu0 %v1622
        %v1654 = vpop.xlane.xlu0 %1653
        %1655 = vmin.xlane.f32.xlu0 %v1623
        %v1656 = vpop.xlane.xlu0 %1655
        %1657 = vmin.xlane.f32.xlu0 %v1624
        %v1658 = vpop.xlane.xlu0 %1657
        %1659 = vmin.xlane.f32.xlu0 %v1625
        %v1660 = vpop.xlane.xlu0 %1659
        %1661 = vmin.xlane.f32.xlu0 %v1626
        %v1662 = vpop.xlane.xlu0 %1661
        %1663 = vmin.xlane.f32.xlu0 %v1627
        %v1664 = vpop.xlane.xlu0 %1663
        %1665 = vmin.xlane.f32.xlu0 %v1628
        %v1666 = vpop.xlane.xlu0 %1665
        %1667 = vmin.xlane.f32.xlu0 %v1629
        %v1668 = vpop.xlane.xlu0 %1667
        %1669 = vmin.xlane.f32.xlu0 %v1630
        %v1670 = vpop.xlane.xlu0 %1669
        %v1671 = vrsqrt.pop %v1632
        %v1672 = vmul.f32 %v1632, %v1671
        %vm1673 = vcmp.eq.f32.partialorder %v1632, inf
        %v1674 = vsel %vm1673, %v1632, %v1672
        %vm1675 = vcmp.eq.f32.partialorder %v1632, 0.0
        %v1676 = vand.u32 %v1632, 2147483648
        %v1677 = vsel %vm1675, %v1676, %v1674
        %v1678 = vrsqrt.pop %v1634
        %v1679 = vmul.f32 %v1634, %v1678
        %vm1680 = vcmp.eq.f32.partialorder %v1634, inf
        %v1681 = vsel %vm1680, %v1634, %v1679
        %vm1682 = vcmp.eq.f32.partialorder %v1634, 0.0
        %v1683 = vand.u32 %v1634, 2147483648
        %v1684 = vsel %vm1682, %v1683, %v1681
        %v1685 = vrsqrt.pop %v1636
        %v1686 = vmul.f32 %v1636, %v1685
        %vm1687 = vcmp.eq.f32.partialorder %v1636, inf
        %v1688 = vsel %vm1687, %v1636, %v1686
        %vm1689 = vcmp.eq.f32.partialorder %v1636, 0.0
        %v1690 = vand.u32 %v1636, 2147483648
        %v1691 = vsel %vm1689, %v1690, %v1688
        %v1692 = vrsqrt.pop %v1638
        %v1693 = vmul.f32 %v1638, %v1692
        %vm1694 = vcmp.eq.f32.partialorder %v1638, inf
        %v1695 = vsel %vm1694, %v1638, %v1693
        %vm1696 = vcmp.eq.f32.partialorder %v1638, 0.0
        %v1697 = vand.u32 %v1638, 2147483648
        %v1698 = vsel %vm1696, %v1697, %v1695
        %v1699 = vrsqrt.pop %v1640
        %v1700 = vmul.f32 %v1640, %v1699
        %vm1701 = vcmp.eq.f32.partialorder %v1640, inf
        %v1702 = vsel %vm1701, %v1640, %v1700
        %vm1703 = vcmp.eq.f32.partialorder %v1640, 0.0
        %v1704 = vand.u32 %v1640, 2147483648
        %v1705 = vsel %vm1703, %v1704, %v1702
        %v1706 = vrsqrt.pop %v1642
        %v1707 = vmul.f32 %v1642, %v1706
        %vm1708 = vcmp.eq.f32.partialorder %v1642, inf
        %v1709 = vsel %vm1708, %v1642, %v1707
        %vm1710 = vcmp.eq.f32.partialorder %v1642, 0.0
        %v1711 = vand.u32 %v1642, 2147483648
        %v1712 = vsel %vm1710, %v1711, %v1709
        %v1713 = vrsqrt.pop %v1644
        %v1714 = vmul.f32 %v1644, %v1713
        %vm1715 = vcmp.eq.f32.partialorder %v1644, inf
        %v1716 = vsel %vm1715, %v1644, %v1714
        %vm1717 = vcmp.eq.f32.partialorder %v1644, 0.0
        %v1718 = vand.u32 %v1644, 2147483648
        %v1719 = vsel %vm1717, %v1718, %v1716
        %v1720 = vrsqrt.pop %v1646
        %v1721 = vmul.f32 %v1646, %v1720
        %vm1722 = vcmp.eq.f32.partialorder %v1646, inf
        %v1723 = vsel %vm1722, %v1646, %v1721
        %vm1724 = vcmp.eq.f32.partialorder %v1646, 0.0
        %v1725 = vand.u32 %v1646, 2147483648
        %v1726 = vsel %vm1724, %v1725, %v1723
        %v1727 = vrsqrt.pop %v1648
        %v1728 = vmul.f32 %v1648, %v1727
        %vm1729 = vcmp.eq.f32.partialorder %v1648, inf
        %v1730 = vsel %vm1729, %v1648, %v1728
        %vm1731 = vcmp.eq.f32.partialorder %v1648, 0.0
        %v1732 = vand.u32 %v1648, 2147483648
        %v1733 = vsel %vm1731, %v1732, %v1730
        %v1734 = vrsqrt.pop %v1650
        %v1735 = vmul.f32 %v1650, %v1734
        %vm1736 = vcmp.eq.f32.partialorder %v1650, inf
        %v1737 = vsel %vm1736, %v1650, %v1735
        %vm1738 = vcmp.eq.f32.partialorder %v1650, 0.0
        %v1739 = vand.u32 %v1650, 2147483648
        %v1740 = vsel %vm1738, %v1739, %v1737
        %v1741 = vrsqrt.pop %v1652
        %v1742 = vmul.f32 %v1652, %v1741
        %vm1743 = vcmp.eq.f32.partialorder %v1652, inf
        %v1744 = vsel %vm1743, %v1652, %v1742
        %vm1745 = vcmp.eq.f32.partialorder %v1652, 0.0
        %v1746 = vand.u32 %v1652, 2147483648
        %v1747 = vsel %vm1745, %v1746, %v1744
        %v1748 = vrsqrt.pop %v1654
        %v1749 = vmul.f32 %v1654, %v1748
        %vm1750 = vcmp.eq.f32.partialorder %v1654, inf
        %v1751 = vsel %vm1750, %v1654, %v1749
        %vm1752 = vcmp.eq.f32.partialorder %v1654, 0.0
        %v1753 = vand.u32 %v1654, 2147483648
        %v1754 = vsel %vm1752, %v1753, %v1751
        %v1755 = vrsqrt.pop %v1656
        %v1756 = vmul.f32 %v1656, %v1755
        %vm1757 = vcmp.eq.f32.partialorder %v1656, inf
        %v1758 = vsel %vm1757, %v1656, %v1756
        %vm1759 = vcmp.eq.f32.partialorder %v1656, 0.0
        %v1760 = vand.u32 %v1656, 2147483648
        %v1761 = vsel %vm1759, %v1760, %v1758
        %v1762 = vrsqrt.pop %v1658
        %v1763 = vmul.f32 %v1658, %v1762
        %vm1764 = vcmp.eq.f32.partialorder %v1658, inf
        %v1765 = vsel %vm1764, %v1658, %v1763
        %vm1766 = vcmp.eq.f32.partialorder %v1658, 0.0
        %v1767 = vand.u32 %v1658, 2147483648
        %v1768 = vsel %vm1766, %v1767, %v1765
        %v1769 = vrsqrt.pop %v1660
        %v1770 = vmul.f32 %v1660, %v1769
        %vm1771 = vcmp.eq.f32.partialorder %v1660, inf
        %v1772 = vsel %vm1771, %v1660, %v1770
        %vm1773 = vcmp.eq.f32.partialorder %v1660, 0.0
        %v1774 = vand.u32 %v1660, 2147483648
        %v1775 = vsel %vm1773, %v1774, %v1772
        %v1776 = vrsqrt.pop %v1662
        %v1777 = vmul.f32 %v1662, %v1776
        %vm1778 = vcmp.eq.f32.partialorder %v1662, inf
        %v1779 = vsel %vm1778, %v1662, %v1777
        %vm1780 = vcmp.eq.f32.partialorder %v1662, 0.0
        %v1781 = vand.u32 %v1662, 2147483648
        %v1782 = vsel %vm1780, %v1781, %v1779
        %v1783 = vrsqrt.pop %v1664
        %v1784 = vmul.f32 %v1664, %v1783
        %vm1785 = vcmp.eq.f32.partialorder %v1664, inf
        %v1786 = vsel %vm1785, %v1664, %v1784
        %vm1787 = vcmp.eq.f32.partialorder %v1664, 0.0
        %v1788 = vand.u32 %v1664, 2147483648
        %v1789 = vsel %vm1787, %v1788, %v1786
        %v1790 = vrsqrt.pop %v1666
        %v1791 = vmul.f32 %v1666, %v1790
        %vm1792 = vcmp.eq.f32.partialorder %v1666, inf
        %v1793 = vsel %vm1792, %v1666, %v1791
        %vm1794 = vcmp.eq.f32.partialorder %v1666, 0.0
        %v1795 = vand.u32 %v1666, 2147483648
        %v1796 = vsel %vm1794, %v1795, %v1793
        %v1797 = vrsqrt.pop %v1668
        %v1798 = vmul.f32 %v1668, %v1797
        %vm1799 = vcmp.eq.f32.partialorder %v1668, inf
        %v1800 = vsel %vm1799, %v1668, %v1798
        %vm1801 = vcmp.eq.f32.partialorder %v1668, 0.0
        %v1802 = vand.u32 %v1668, 2147483648
        %v1803 = vsel %vm1801, %v1802, %v1800
        %v1804 = vrsqrt.pop %v1670
        %v1805 = vmul.f32 %v1670, %v1804
        %vm1806 = vcmp.eq.f32.partialorder %v1670, inf
        %v1807 = vsel %vm1806, %v1670, %v1805
        %vm1808 = vcmp.eq.f32.partialorder %v1670, 0.0
        %v1809 = vand.u32 %v1670, 2147483648
        %v1810 = vsel %vm1808, %v1809, %v1807
        %v1811 = vmul.f32 %v1632, -10000.0
        %v1812 = vmul.f32 %v1634, -10000.0
        %v1813 = vmul.f32 %v1636, -10000.0
        %v1814 = vmul.f32 %v1638, -10000.0
        %v1815 = vmul.f32 %v1640, -10000.0
        %v1816 = vmul.f32 %v1642, -10000.0
        %v1817 = vmul.f32 %v1644, -10000.0
        %v1818 = vmul.f32 %v1646, -10000.0
        %v1819 = vmul.f32 %v1648, -10000.0
        %v1820 = vmul.f32 %v1650, -10000.0
        %v1821 = vmul.f32 %v1652, -10000.0
        %v1822 = vmul.f32 %v1654, -10000.0
        %v1823 = vmul.f32 %v1656, -10000.0
        %v1824 = vmul.f32 %v1658, -10000.0
        %v1825 = vmul.f32 %v1660, -10000.0
        %v1826 = vmul.f32 %v1662, -10000.0
        %v1827 = vmul.f32 %v1664, -10000.0
        %v1828 = vmul.f32 %v1666, -10000.0
        %v1829 = vmul.f32 %v1668, -10000.0
        %v1830 = vmul.f32 %v1670, -10000.0
        %v1831 = vmul.f32 %v1811, 1.442695
        %v1832 = vpow.pop %v1831
        %v1833 = vmul.f32 %v1812, 1.442695
        %v1834 = vpow.pop %v1833
        %v1835 = vmul.f32 %v1813, 1.442695
        %v1836 = vpow.pop %v1835
        %v1837 = vmul.f32 %v1814, 1.442695
        %v1838 = vpow.pop %v1837
        %v1839 = vmul.f32 %v1815, 1.442695
        %v1840 = vpow.pop %v1839
        %v1841 = vmul.f32 %v1816, 1.442695
        %v1842 = vpow.pop %v1841
        %v1843 = vmul.f32 %v1817, 1.442695
        %v1844 = vpow.pop %v1843
        %v1845 = vmul.f32 %v1818, 1.442695
        %v1846 = vpow.pop %v1845
        %v1847 = vmul.f32 %v1819, 1.442695
        %v1848 = vpow.pop %v1847
        %v1849 = vmul.f32 %v1820, 1.442695
        %v1850 = vpow.pop %v1849
        %v1851 = vmul.f32 %v1821, 1.442695
        %v1852 = vpow.pop %v1851
        %v1853 = vmul.f32 %v1822, 1.442695
        %v1854 = vpow.pop %v1853
        %v1855 = vmul.f32 %v1823, 1.442695
        %v1856 = vpow.pop %v1855
        %v1857 = vmul.f32 %v1824, 1.442695
        %v1858 = vpow.pop %v1857
        %v1859 = vmul.f32 %v1825, 1.442695
        %v1860 = vpow.pop %v1859
        %v1861 = vmul.f32 %v1826, 1.442695
        %v1862 = vpow.pop %v1861
        %v1863 = vmul.f32 %v1827, 1.442695
        %v1864 = vpow.pop %v1863
        %v1865 = vmul.f32 %v1828, 1.442695
        %v1866 = vpow.pop %v1865
        %v1867 = vmul.f32 %v1829, 1.442695
        %v1868 = vpow.pop %v1867
        %v1869 = vmul.f32 %v1830, 1.442695
        %v1870 = vpow.pop %v1869
        %v1871 = vmul.f32 %v1677, %v1832
        %v1872 = vmul.f32 %v1684, %v1834
        %v1873 = vmul.f32 %v1691, %v1836
        %v1874 = vmul.f32 %v1698, %v1838
        %v1875 = vmul.f32 %v1705, %v1840
        %v1876 = vmul.f32 %v1712, %v1842
        %v1877 = vmul.f32 %v1719, %v1844
        %v1878 = vmul.f32 %v1726, %v1846
        %v1879 = vmul.f32 %v1733, %v1848
        %v1880 = vmul.f32 %v1740, %v1850
        %v1881 = vmul.f32 %v1747, %v1852
        %v1882 = vmul.f32 %v1754, %v1854
        %v1883 = vmul.f32 %v1761, %v1856
        %v1884 = vmul.f32 %v1768, %v1858
        %v1885 = vmul.f32 %v1775, %v1860
        %v1886 = vmul.f32 %v1782, %v1862
        %v1887 = vmul.f32 %v1789, %v1864
        %v1888 = vmul.f32 %v1796, %v1866
        %v1889 = vmul.f32 %v1803, %v1868
        %v1890 = vmul.f32 %v1810, %v1870
        %v1891 = vsub.f32 %v1571, %v1871
        %v1892 = vsub.f32 %v1572, %v1872
        %v1893 = vsub.f32 %v1573, %v1873
        %v1894 = vsub.f32 %v1574, %v1874
        %v1895 = vsub.f32 %v1575, %v1875
        %v1896 = vsub.f32 %v1576, %v1876
        %v1897 = vsub.f32 %v1577, %v1877
        %v1898 = vsub.f32 %v1578, %v1878
        %v1899 = vsub.f32 %v1579, %v1879
        %v1900 = vsub.f32 %v1580, %v1880
        %v1901 = vsub.f32 %v1581, %v1881
        %v1902 = vsub.f32 %v1582, %v1882
        %v1903 = vsub.f32 %v1583, %v1883
        %v1904 = vsub.f32 %v1584, %v1884
        %v1905 = vsub.f32 %v1585, %v1885
        %v1906 = vsub.f32 %v1586, %v1886
        %v1907 = vsub.f32 %v1587, %v1887
        %v1908 = vsub.f32 %v1588, %v1888
        %v1909 = vsub.f32 %v1589, %v1889
        %v1910 = vsub.f32 %v1590, %v1890
        %vm1911 = vcmp.eq.f32.partialorder %v1611, %v1632
        %vm1912 = vcmp.eq.f32.partialorder %v1612, %v1634
        %vm1913 = vcmp.eq.f32.partialorder %v1613, %v1636
        %vm1914 = vcmp.eq.f32.partialorder %v1614, %v1638
        %vm1915 = vcmp.eq.f32.partialorder %v1615, %v1640
        %vm1916 = vcmp.eq.f32.partialorder %v1616, %v1642
        %vm1917 = vcmp.eq.f32.partialorder %v1617, %v1644
        %vm1918 = vcmp.eq.f32.partialorder %v1618, %v1646
        %vm1919 = vcmp.eq.f32.partialorder %v1619, %v1648
        %vm1920 = vcmp.eq.f32.partialorder %v1620, %v1650
        %vm1921 = vcmp.eq.f32.partialorder %v1621, %v1652
        %vm1922 = vcmp.eq.f32.partialorder %v1622, %v1654
        %vm1923 = vcmp.eq.f32.partialorder %v1623, %v1656
        %vm1924 = vcmp.eq.f32.partialorder %v1624, %v1658
        %vm1925 = vcmp.eq.f32.partialorder %v1625, %v1660
        %vm1926 = vcmp.eq.f32.partialorder %v1626, %v1662
        %vm1927 = vcmp.eq.f32.partialorder %v1627, %v1664
        %vm1928 = vcmp.eq.f32.partialorder %v1628, %v1666
        %vm1929 = vcmp.eq.f32.partialorder %v1629, %v1668
        %vm1930 = vcmp.eq.f32.partialorder %v1630, %v1670
        %v1931 = vsel %vm1911, 1e+18, %v1611
        %v1932 = vsel %vm1912, 1e+18, %v1612
        %v1933 = vsel %vm1913, 1e+18, %v1613
        %v1934 = vsel %vm1914, 1e+18, %v1614
        %v1935 = vsel %vm1915, 1e+18, %v1615
        %v1936 = vsel %vm1916, 1e+18, %v1616
        %v1937 = vsel %vm1917, 1e+18, %v1617
        %v1938 = vsel %vm1918, 1e+18, %v1618
        %v1939 = vsel %vm1919, 1e+18, %v1619
        %v1940 = vsel %vm1920, 1e+18, %v1620
        %v1941 = vsel %vm1921, 1e+18, %v1621
        %v1942 = vsel %vm1922, 1e+18, %v1622
        %v1943 = vsel %vm1923, 1e+18, %v1623
        %v1944 = vsel %vm1924, 1e+18, %v1624
        %v1945 = vsel %vm1925, 1e+18, %v1625
        %v1946 = vsel %vm1926, 1e+18, %v1626
        %v1947 = vsel %vm1927, 1e+18, %v1627
        %v1948 = vsel %vm1928, 1e+18, %v1628
        %v1949 = vsel %vm1929, 1e+18, %v1629
        %v1950 = vsel %vm1930, 1e+18, %v1630
        %1951 = vmin.xlane.f32.xlu0 %v1931
        %v1952 = vpop.xlane.xlu0 %1951
        %1953 = vmin.xlane.f32.xlu0 %v1932
        %v1954 = vpop.xlane.xlu0 %1953
        %1955 = vmin.xlane.f32.xlu0 %v1933
        %v1956 = vpop.xlane.xlu0 %1955
        %1957 = vmin.xlane.f32.xlu0 %v1934
        %v1958 = vpop.xlane.xlu0 %1957
        %1959 = vmin.xlane.f32.xlu0 %v1935
        %v1960 = vpop.xlane.xlu0 %1959
        %1961 = vmin.xlane.f32.xlu0 %v1936
        %v1962 = vpop.xlane.xlu0 %1961
        %1963 = vmin.xlane.f32.xlu0 %v1937
        %v1964 = vpop.xlane.xlu0 %1963
        %1965 = vmin.xlane.f32.xlu0 %v1938
        %v1966 = vpop.xlane.xlu0 %1965
        %1967 = vmin.xlane.f32.xlu0 %v1939
        %v1968 = vpop.xlane.xlu0 %1967
        %1969 = vmin.xlane.f32.xlu0 %v1940
        %v1970 = vpop.xlane.xlu0 %1969
        %1971 = vmin.xlane.f32.xlu0 %v1941
        %v1972 = vpop.xlane.xlu0 %1971
        %1973 = vmin.xlane.f32.xlu0 %v1942
        %v1974 = vpop.xlane.xlu0 %1973
        %1975 = vmin.xlane.f32.xlu0 %v1943
        %v1976 = vpop.xlane.xlu0 %1975
        %1977 = vmin.xlane.f32.xlu0 %v1944
        %v1978 = vpop.xlane.xlu0 %1977
        %1979 = vmin.xlane.f32.xlu0 %v1945
        %v1980 = vpop.xlane.xlu0 %1979
        %1981 = vmin.xlane.f32.xlu0 %v1946
        %v1982 = vpop.xlane.xlu0 %1981
        %1983 = vmin.xlane.f32.xlu0 %v1947
        %v1984 = vpop.xlane.xlu0 %1983
        %1985 = vmin.xlane.f32.xlu0 %v1948
        %v1986 = vpop.xlane.xlu0 %1985
        %1987 = vmin.xlane.f32.xlu0 %v1949
        %v1988 = vpop.xlane.xlu0 %1987
        %1989 = vmin.xlane.f32.xlu0 %v1950
        %v1990 = vpop.xlane.xlu0 %1989
        %v1991 = vrsqrt.pop %v1952
        %v1992 = vmul.f32 %v1952, %v1991
        %vm1993 = vcmp.eq.f32.partialorder %v1952, inf
        %v1994 = vsel %vm1993, %v1952, %v1992
        %vm1995 = vcmp.eq.f32.partialorder %v1952, 0.0
        %v1996 = vand.u32 %v1952, 2147483648
        %v1997 = vsel %vm1995, %v1996, %v1994
        %v1998 = vrsqrt.pop %v1954
        %v1999 = vmul.f32 %v1954, %v1998
        %vm2000 = vcmp.eq.f32.partialorder %v1954, inf
        %v2001 = vsel %vm2000, %v1954, %v1999
        %vm2002 = vcmp.eq.f32.partialorder %v1954, 0.0
        %v2003 = vand.u32 %v1954, 2147483648
        %v2004 = vsel %vm2002, %v2003, %v2001
        %v2005 = vrsqrt.pop %v1956
        %v2006 = vmul.f32 %v1956, %v2005
        %vm2007 = vcmp.eq.f32.partialorder %v1956, inf
        %v2008 = vsel %vm2007, %v1956, %v2006
        %vm2009 = vcmp.eq.f32.partialorder %v1956, 0.0
        %v2010 = vand.u32 %v1956, 2147483648
        %v2011 = vsel %vm2009, %v2010, %v2008
        %v2012 = vrsqrt.pop %v1958
        %v2013 = vmul.f32 %v1958, %v2012
        %vm2014 = vcmp.eq.f32.partialorder %v1958, inf
        %v2015 = vsel %vm2014, %v1958, %v2013
        %vm2016 = vcmp.eq.f32.partialorder %v1958, 0.0
        %v2017 = vand.u32 %v1958, 2147483648
        %v2018 = vsel %vm2016, %v2017, %v2015
        %v2019 = vrsqrt.pop %v1960
        %v2020 = vmul.f32 %v1960, %v2019
        %vm2021 = vcmp.eq.f32.partialorder %v1960, inf
        %v2022 = vsel %vm2021, %v1960, %v2020
        %vm2023 = vcmp.eq.f32.partialorder %v1960, 0.0
        %v2024 = vand.u32 %v1960, 2147483648
        %v2025 = vsel %vm2023, %v2024, %v2022
        %v2026 = vrsqrt.pop %v1962
        %v2027 = vmul.f32 %v1962, %v2026
        %vm2028 = vcmp.eq.f32.partialorder %v1962, inf
        %v2029 = vsel %vm2028, %v1962, %v2027
        %vm2030 = vcmp.eq.f32.partialorder %v1962, 0.0
        %v2031 = vand.u32 %v1962, 2147483648
        %v2032 = vsel %vm2030, %v2031, %v2029
        %v2033 = vrsqrt.pop %v1964
        %v2034 = vmul.f32 %v1964, %v2033
        %vm2035 = vcmp.eq.f32.partialorder %v1964, inf
        %v2036 = vsel %vm2035, %v1964, %v2034
        %vm2037 = vcmp.eq.f32.partialorder %v1964, 0.0
        %v2038 = vand.u32 %v1964, 2147483648
        %v2039 = vsel %vm2037, %v2038, %v2036
        %v2040 = vrsqrt.pop %v1966
        %v2041 = vmul.f32 %v1966, %v2040
        %vm2042 = vcmp.eq.f32.partialorder %v1966, inf
        %v2043 = vsel %vm2042, %v1966, %v2041
        %vm2044 = vcmp.eq.f32.partialorder %v1966, 0.0
        %v2045 = vand.u32 %v1966, 2147483648
        %v2046 = vsel %vm2044, %v2045, %v2043
        %v2047 = vrsqrt.pop %v1968
        %v2048 = vmul.f32 %v1968, %v2047
        %vm2049 = vcmp.eq.f32.partialorder %v1968, inf
        %v2050 = vsel %vm2049, %v1968, %v2048
        %vm2051 = vcmp.eq.f32.partialorder %v1968, 0.0
        %v2052 = vand.u32 %v1968, 2147483648
        %v2053 = vsel %vm2051, %v2052, %v2050
        %v2054 = vrsqrt.pop %v1970
        %v2055 = vmul.f32 %v1970, %v2054
        %vm2056 = vcmp.eq.f32.partialorder %v1970, inf
        %v2057 = vsel %vm2056, %v1970, %v2055
        %vm2058 = vcmp.eq.f32.partialorder %v1970, 0.0
        %v2059 = vand.u32 %v1970, 2147483648
        %v2060 = vsel %vm2058, %v2059, %v2057
        %v2061 = vrsqrt.pop %v1972
        %v2062 = vmul.f32 %v1972, %v2061
        %vm2063 = vcmp.eq.f32.partialorder %v1972, inf
        %v2064 = vsel %vm2063, %v1972, %v2062
        %vm2065 = vcmp.eq.f32.partialorder %v1972, 0.0
        %v2066 = vand.u32 %v1972, 2147483648
        %v2067 = vsel %vm2065, %v2066, %v2064
        %v2068 = vrsqrt.pop %v1974
        %v2069 = vmul.f32 %v1974, %v2068
        %vm2070 = vcmp.eq.f32.partialorder %v1974, inf
        %v2071 = vsel %vm2070, %v1974, %v2069
        %vm2072 = vcmp.eq.f32.partialorder %v1974, 0.0
        %v2073 = vand.u32 %v1974, 2147483648
        %v2074 = vsel %vm2072, %v2073, %v2071
        %v2075 = vrsqrt.pop %v1976
        %v2076 = vmul.f32 %v1976, %v2075
        %vm2077 = vcmp.eq.f32.partialorder %v1976, inf
        %v2078 = vsel %vm2077, %v1976, %v2076
        %vm2079 = vcmp.eq.f32.partialorder %v1976, 0.0
        %v2080 = vand.u32 %v1976, 2147483648
        %v2081 = vsel %vm2079, %v2080, %v2078
        %v2082 = vrsqrt.pop %v1978
        %v2083 = vmul.f32 %v1978, %v2082
        %vm2084 = vcmp.eq.f32.partialorder %v1978, inf
        %v2085 = vsel %vm2084, %v1978, %v2083
        %vm2086 = vcmp.eq.f32.partialorder %v1978, 0.0
        %v2087 = vand.u32 %v1978, 2147483648
        %v2088 = vsel %vm2086, %v2087, %v2085
        %v2089 = vrsqrt.pop %v1980
        %v2090 = vmul.f32 %v1980, %v2089
        %vm2091 = vcmp.eq.f32.partialorder %v1980, inf
        %v2092 = vsel %vm2091, %v1980, %v2090
        %vm2093 = vcmp.eq.f32.partialorder %v1980, 0.0
        %v2094 = vand.u32 %v1980, 2147483648
        %v2095 = vsel %vm2093, %v2094, %v2092
        %v2096 = vrsqrt.pop %v1982
        %v2097 = vmul.f32 %v1982, %v2096
        %vm2098 = vcmp.eq.f32.partialorder %v1982, inf
        %v2099 = vsel %vm2098, %v1982, %v2097
        %vm2100 = vcmp.eq.f32.partialorder %v1982, 0.0
        %v2101 = vand.u32 %v1982, 2147483648
        %v2102 = vsel %vm2100, %v2101, %v2099
        %v2103 = vrsqrt.pop %v1984
        %v2104 = vmul.f32 %v1984, %v2103
        %vm2105 = vcmp.eq.f32.partialorder %v1984, inf
        %v2106 = vsel %vm2105, %v1984, %v2104
        %vm2107 = vcmp.eq.f32.partialorder %v1984, 0.0
        %v2108 = vand.u32 %v1984, 2147483648
        %v2109 = vsel %vm2107, %v2108, %v2106
        %v2110 = vrsqrt.pop %v1986
        %v2111 = vmul.f32 %v1986, %v2110
        %vm2112 = vcmp.eq.f32.partialorder %v1986, inf
        %v2113 = vsel %vm2112, %v1986, %v2111
        %vm2114 = vcmp.eq.f32.partialorder %v1986, 0.0
        %v2115 = vand.u32 %v1986, 2147483648
        %v2116 = vsel %vm2114, %v2115, %v2113
        %v2117 = vrsqrt.pop %v1988
        %v2118 = vmul.f32 %v1988, %v2117
        %vm2119 = vcmp.eq.f32.partialorder %v1988, inf
        %v2120 = vsel %vm2119, %v1988, %v2118
        %vm2121 = vcmp.eq.f32.partialorder %v1988, 0.0
        %v2122 = vand.u32 %v1988, 2147483648
        %v2123 = vsel %vm2121, %v2122, %v2120
        %v2124 = vrsqrt.pop %v1990
        %v2125 = vmul.f32 %v1990, %v2124
        %vm2126 = vcmp.eq.f32.partialorder %v1990, inf
        %v2127 = vsel %vm2126, %v1990, %v2125
        %vm2128 = vcmp.eq.f32.partialorder %v1990, 0.0
        %v2129 = vand.u32 %v1990, 2147483648
        %v2130 = vsel %vm2128, %v2129, %v2127
        %v2131 = vmul.f32 %v1952, -10000.0
        %v2132 = vmul.f32 %v1954, -10000.0
        %v2133 = vmul.f32 %v1956, -10000.0
        %v2134 = vmul.f32 %v1958, -10000.0
        %v2135 = vmul.f32 %v1960, -10000.0
        %v2136 = vmul.f32 %v1962, -10000.0
        %v2137 = vmul.f32 %v1964, -10000.0
        %v2138 = vmul.f32 %v1966, -10000.0
        %v2139 = vmul.f32 %v1968, -10000.0
        %v2140 = vmul.f32 %v1970, -10000.0
        %v2141 = vmul.f32 %v1972, -10000.0
        %v2142 = vmul.f32 %v1974, -10000.0
        %v2143 = vmul.f32 %v1976, -10000.0
        %v2144 = vmul.f32 %v1978, -10000.0
        %v2145 = vmul.f32 %v1980, -10000.0
        %v2146 = vmul.f32 %v1982, -10000.0
        %v2147 = vmul.f32 %v1984, -10000.0
        %v2148 = vmul.f32 %v1986, -10000.0
        %v2149 = vmul.f32 %v1988, -10000.0
        %v2150 = vmul.f32 %v1990, -10000.0
        %v2151 = vmul.f32 %v2131, 1.442695
        %v2152 = vpow.pop %v2151
        %v2153 = vmul.f32 %v2132, 1.442695
        %v2154 = vpow.pop %v2153
        %v2155 = vmul.f32 %v2133, 1.442695
        %v2156 = vpow.pop %v2155
        %v2157 = vmul.f32 %v2134, 1.442695
        %v2158 = vpow.pop %v2157
        %v2159 = vmul.f32 %v2135, 1.442695
        %v2160 = vpow.pop %v2159
        %v2161 = vmul.f32 %v2136, 1.442695
        %v2162 = vpow.pop %v2161
        %v2163 = vmul.f32 %v2137, 1.442695
        %v2164 = vpow.pop %v2163
        %v2165 = vmul.f32 %v2138, 1.442695
        %v2166 = vpow.pop %v2165
        %v2167 = vmul.f32 %v2139, 1.442695
        %v2168 = vpow.pop %v2167
        %v2169 = vmul.f32 %v2140, 1.442695
        %v2170 = vpow.pop %v2169
        %v2171 = vmul.f32 %v2141, 1.442695
        %v2172 = vpow.pop %v2171
        %v2173 = vmul.f32 %v2142, 1.442695
        %v2174 = vpow.pop %v2173
        %v2175 = vmul.f32 %v2143, 1.442695
        %v2176 = vpow.pop %v2175
        %v2177 = vmul.f32 %v2144, 1.442695
        %v2178 = vpow.pop %v2177
        %v2179 = vmul.f32 %v2145, 1.442695
        %v2180 = vpow.pop %v2179
        %v2181 = vmul.f32 %v2146, 1.442695
        %v2182 = vpow.pop %v2181
        %v2183 = vmul.f32 %v2147, 1.442695
        %v2184 = vpow.pop %v2183
        %v2185 = vmul.f32 %v2148, 1.442695
        %v2186 = vpow.pop %v2185
        %v2187 = vmul.f32 %v2149, 1.442695
        %v2188 = vpow.pop %v2187
        %v2189 = vmul.f32 %v2150, 1.442695
        %v2190 = vpow.pop %v2189
        %v2191 = vmul.f32 %v1997, %v2152
        %v2192 = vmul.f32 %v2004, %v2154
        %v2193 = vmul.f32 %v2011, %v2156
        %v2194 = vmul.f32 %v2018, %v2158
        %v2195 = vmul.f32 %v2025, %v2160
        %v2196 = vmul.f32 %v2032, %v2162
        %v2197 = vmul.f32 %v2039, %v2164
        %v2198 = vmul.f32 %v2046, %v2166
        %v2199 = vmul.f32 %v2053, %v2168
        %v2200 = vmul.f32 %v2060, %v2170
        %v2201 = vmul.f32 %v2067, %v2172
        %v2202 = vmul.f32 %v2074, %v2174
        %v2203 = vmul.f32 %v2081, %v2176
        %v2204 = vmul.f32 %v2088, %v2178
        %v2205 = vmul.f32 %v2095, %v2180
        %v2206 = vmul.f32 %v2102, %v2182
        %v2207 = vmul.f32 %v2109, %v2184
        %v2208 = vmul.f32 %v2116, %v2186
        %v2209 = vmul.f32 %v2123, %v2188
        %v2210 = vmul.f32 %v2130, %v2190
        %v2211 = vsub.f32 %v1891, %v2191
        %v2212 = vsub.f32 %v1892, %v2192
        %v2213 = vsub.f32 %v1893, %v2193
        %v2214 = vsub.f32 %v1894, %v2194
        %v2215 = vsub.f32 %v1895, %v2195
        %v2216 = vsub.f32 %v1896, %v2196
        %v2217 = vsub.f32 %v1897, %v2197
        %v2218 = vsub.f32 %v1898, %v2198
        %v2219 = vsub.f32 %v1899, %v2199
        %v2220 = vsub.f32 %v1900, %v2200
        %v2221 = vsub.f32 %v1901, %v2201
        %v2222 = vsub.f32 %v1902, %v2202
        %v2223 = vsub.f32 %v1903, %v2203
        %v2224 = vsub.f32 %v1904, %v2204
        %v2225 = vsub.f32 %v1905, %v2205
        %v2226 = vsub.f32 %v1906, %v2206
        %v2227 = vsub.f32 %v1907, %v2207
        %v2228 = vsub.f32 %v1908, %v2208
        %v2229 = vsub.f32 %v1909, %v2209
        %v2230 = vsub.f32 %v1910, %v2210
        %vm2231 = vcmp.eq.f32.partialorder %v1931, %v1952
        %vm2232 = vcmp.eq.f32.partialorder %v1932, %v1954
        %vm2233 = vcmp.eq.f32.partialorder %v1933, %v1956
        %vm2234 = vcmp.eq.f32.partialorder %v1934, %v1958
        %vm2235 = vcmp.eq.f32.partialorder %v1935, %v1960
        %vm2236 = vcmp.eq.f32.partialorder %v1936, %v1962
        %vm2237 = vcmp.eq.f32.partialorder %v1937, %v1964
        %vm2238 = vcmp.eq.f32.partialorder %v1938, %v1966
        %vm2239 = vcmp.eq.f32.partialorder %v1939, %v1968
        %vm2240 = vcmp.eq.f32.partialorder %v1940, %v1970
        %vm2241 = vcmp.eq.f32.partialorder %v1941, %v1972
        %vm2242 = vcmp.eq.f32.partialorder %v1942, %v1974
        %vm2243 = vcmp.eq.f32.partialorder %v1943, %v1976
        %vm2244 = vcmp.eq.f32.partialorder %v1944, %v1978
        %vm2245 = vcmp.eq.f32.partialorder %v1945, %v1980
        %vm2246 = vcmp.eq.f32.partialorder %v1946, %v1982
        %vm2247 = vcmp.eq.f32.partialorder %v1947, %v1984
        %vm2248 = vcmp.eq.f32.partialorder %v1948, %v1986
        %vm2249 = vcmp.eq.f32.partialorder %v1949, %v1988
        %vm2250 = vcmp.eq.f32.partialorder %v1950, %v1990
        %v2251 = vsel %vm2231, 1e+18, %v1931
        %v2252 = vsel %vm2232, 1e+18, %v1932
        %v2253 = vsel %vm2233, 1e+18, %v1933
        %v2254 = vsel %vm2234, 1e+18, %v1934
        %v2255 = vsel %vm2235, 1e+18, %v1935
        %v2256 = vsel %vm2236, 1e+18, %v1936
        %v2257 = vsel %vm2237, 1e+18, %v1937
        %v2258 = vsel %vm2238, 1e+18, %v1938
        %v2259 = vsel %vm2239, 1e+18, %v1939
        %v2260 = vsel %vm2240, 1e+18, %v1940
        %v2261 = vsel %vm2241, 1e+18, %v1941
        %v2262 = vsel %vm2242, 1e+18, %v1942
        %v2263 = vsel %vm2243, 1e+18, %v1943
        %v2264 = vsel %vm2244, 1e+18, %v1944
        %v2265 = vsel %vm2245, 1e+18, %v1945
        %v2266 = vsel %vm2246, 1e+18, %v1946
        %v2267 = vsel %vm2247, 1e+18, %v1947
        %v2268 = vsel %vm2248, 1e+18, %v1948
        %v2269 = vsel %vm2249, 1e+18, %v1949
        %v2270 = vsel %vm2250, 1e+18, %v1950
        %2271 = vmin.xlane.f32.xlu0 %v2251
        %v2272 = vpop.xlane.xlu0 %2271
        %2273 = vmin.xlane.f32.xlu0 %v2252
        %v2274 = vpop.xlane.xlu0 %2273
        %2275 = vmin.xlane.f32.xlu0 %v2253
        %v2276 = vpop.xlane.xlu0 %2275
        %2277 = vmin.xlane.f32.xlu0 %v2254
        %v2278 = vpop.xlane.xlu0 %2277
        %2279 = vmin.xlane.f32.xlu0 %v2255
        %v2280 = vpop.xlane.xlu0 %2279
        %2281 = vmin.xlane.f32.xlu0 %v2256
        %v2282 = vpop.xlane.xlu0 %2281
        %2283 = vmin.xlane.f32.xlu0 %v2257
        %v2284 = vpop.xlane.xlu0 %2283
        %2285 = vmin.xlane.f32.xlu0 %v2258
        %v2286 = vpop.xlane.xlu0 %2285
        %2287 = vmin.xlane.f32.xlu0 %v2259
        %v2288 = vpop.xlane.xlu0 %2287
        %2289 = vmin.xlane.f32.xlu0 %v2260
        %v2290 = vpop.xlane.xlu0 %2289
        %2291 = vmin.xlane.f32.xlu0 %v2261
        %v2292 = vpop.xlane.xlu0 %2291
        %2293 = vmin.xlane.f32.xlu0 %v2262
        %v2294 = vpop.xlane.xlu0 %2293
        %2295 = vmin.xlane.f32.xlu0 %v2263
        %v2296 = vpop.xlane.xlu0 %2295
        %2297 = vmin.xlane.f32.xlu0 %v2264
        %v2298 = vpop.xlane.xlu0 %2297
        %2299 = vmin.xlane.f32.xlu0 %v2265
        %v2300 = vpop.xlane.xlu0 %2299
        %2301 = vmin.xlane.f32.xlu0 %v2266
        %v2302 = vpop.xlane.xlu0 %2301
        %2303 = vmin.xlane.f32.xlu0 %v2267
        %v2304 = vpop.xlane.xlu0 %2303
        %2305 = vmin.xlane.f32.xlu0 %v2268
        %v2306 = vpop.xlane.xlu0 %2305
        %2307 = vmin.xlane.f32.xlu0 %v2269
        %v2308 = vpop.xlane.xlu0 %2307
        %2309 = vmin.xlane.f32.xlu0 %v2270
        %v2310 = vpop.xlane.xlu0 %2309
        %v2311 = vrsqrt.pop %v2272
        %v2312 = vmul.f32 %v2272, %v2311
        %vm2313 = vcmp.eq.f32.partialorder %v2272, inf
        %v2314 = vsel %vm2313, %v2272, %v2312
        %vm2315 = vcmp.eq.f32.partialorder %v2272, 0.0
        %v2316 = vand.u32 %v2272, 2147483648
        %v2317 = vsel %vm2315, %v2316, %v2314
        %v2318 = vrsqrt.pop %v2274
        %v2319 = vmul.f32 %v2274, %v2318
        %vm2320 = vcmp.eq.f32.partialorder %v2274, inf
        %v2321 = vsel %vm2320, %v2274, %v2319
        %vm2322 = vcmp.eq.f32.partialorder %v2274, 0.0
        %v2323 = vand.u32 %v2274, 2147483648
        %v2324 = vsel %vm2322, %v2323, %v2321
        %v2325 = vrsqrt.pop %v2276
        %v2326 = vmul.f32 %v2276, %v2325
        %vm2327 = vcmp.eq.f32.partialorder %v2276, inf
        %v2328 = vsel %vm2327, %v2276, %v2326
        %vm2329 = vcmp.eq.f32.partialorder %v2276, 0.0
        %v2330 = vand.u32 %v2276, 2147483648
        %v2331 = vsel %vm2329, %v2330, %v2328
        %v2332 = vrsqrt.pop %v2278
        %v2333 = vmul.f32 %v2278, %v2332
        %vm2334 = vcmp.eq.f32.partialorder %v2278, inf
        %v2335 = vsel %vm2334, %v2278, %v2333
        %vm2336 = vcmp.eq.f32.partialorder %v2278, 0.0
        %v2337 = vand.u32 %v2278, 2147483648
        %v2338 = vsel %vm2336, %v2337, %v2335
        %v2339 = vrsqrt.pop %v2280
        %v2340 = vmul.f32 %v2280, %v2339
        %vm2341 = vcmp.eq.f32.partialorder %v2280, inf
        %v2342 = vsel %vm2341, %v2280, %v2340
        %vm2343 = vcmp.eq.f32.partialorder %v2280, 0.0
        %v2344 = vand.u32 %v2280, 2147483648
        %v2345 = vsel %vm2343, %v2344, %v2342
        %v2346 = vrsqrt.pop %v2282
        %v2347 = vmul.f32 %v2282, %v2346
        %vm2348 = vcmp.eq.f32.partialorder %v2282, inf
        %v2349 = vsel %vm2348, %v2282, %v2347
        %vm2350 = vcmp.eq.f32.partialorder %v2282, 0.0
        %v2351 = vand.u32 %v2282, 2147483648
        %v2352 = vsel %vm2350, %v2351, %v2349
        %v2353 = vrsqrt.pop %v2284
        %v2354 = vmul.f32 %v2284, %v2353
        %vm2355 = vcmp.eq.f32.partialorder %v2284, inf
        %v2356 = vsel %vm2355, %v2284, %v2354
        %vm2357 = vcmp.eq.f32.partialorder %v2284, 0.0
        %v2358 = vand.u32 %v2284, 2147483648
        %v2359 = vsel %vm2357, %v2358, %v2356
        %v2360 = vrsqrt.pop %v2286
        %v2361 = vmul.f32 %v2286, %v2360
        %vm2362 = vcmp.eq.f32.partialorder %v2286, inf
        %v2363 = vsel %vm2362, %v2286, %v2361
        %vm2364 = vcmp.eq.f32.partialorder %v2286, 0.0
        %v2365 = vand.u32 %v2286, 2147483648
        %v2366 = vsel %vm2364, %v2365, %v2363
        %v2367 = vrsqrt.pop %v2288
        %v2368 = vmul.f32 %v2288, %v2367
        %vm2369 = vcmp.eq.f32.partialorder %v2288, inf
        %v2370 = vsel %vm2369, %v2288, %v2368
        %vm2371 = vcmp.eq.f32.partialorder %v2288, 0.0
        %v2372 = vand.u32 %v2288, 2147483648
        %v2373 = vsel %vm2371, %v2372, %v2370
        %v2374 = vrsqrt.pop %v2290
        %v2375 = vmul.f32 %v2290, %v2374
        %vm2376 = vcmp.eq.f32.partialorder %v2290, inf
        %v2377 = vsel %vm2376, %v2290, %v2375
        %vm2378 = vcmp.eq.f32.partialorder %v2290, 0.0
        %v2379 = vand.u32 %v2290, 2147483648
        %v2380 = vsel %vm2378, %v2379, %v2377
        %v2381 = vrsqrt.pop %v2292
        %v2382 = vmul.f32 %v2292, %v2381
        %vm2383 = vcmp.eq.f32.partialorder %v2292, inf
        %v2384 = vsel %vm2383, %v2292, %v2382
        %vm2385 = vcmp.eq.f32.partialorder %v2292, 0.0
        %v2386 = vand.u32 %v2292, 2147483648
        %v2387 = vsel %vm2385, %v2386, %v2384
        %v2388 = vrsqrt.pop %v2294
        %v2389 = vmul.f32 %v2294, %v2388
        %vm2390 = vcmp.eq.f32.partialorder %v2294, inf
        %v2391 = vsel %vm2390, %v2294, %v2389
        %vm2392 = vcmp.eq.f32.partialorder %v2294, 0.0
        %v2393 = vand.u32 %v2294, 2147483648
        %v2394 = vsel %vm2392, %v2393, %v2391
        %v2395 = vrsqrt.pop %v2296
        %v2396 = vmul.f32 %v2296, %v2395
        %vm2397 = vcmp.eq.f32.partialorder %v2296, inf
        %v2398 = vsel %vm2397, %v2296, %v2396
        %vm2399 = vcmp.eq.f32.partialorder %v2296, 0.0
        %v2400 = vand.u32 %v2296, 2147483648
        %v2401 = vsel %vm2399, %v2400, %v2398
        %v2402 = vrsqrt.pop %v2298
        %v2403 = vmul.f32 %v2298, %v2402
        %vm2404 = vcmp.eq.f32.partialorder %v2298, inf
        %v2405 = vsel %vm2404, %v2298, %v2403
        %vm2406 = vcmp.eq.f32.partialorder %v2298, 0.0
        %v2407 = vand.u32 %v2298, 2147483648
        %v2408 = vsel %vm2406, %v2407, %v2405
        %v2409 = vrsqrt.pop %v2300
        %v2410 = vmul.f32 %v2300, %v2409
        %vm2411 = vcmp.eq.f32.partialorder %v2300, inf
        %v2412 = vsel %vm2411, %v2300, %v2410
        %vm2413 = vcmp.eq.f32.partialorder %v2300, 0.0
        %v2414 = vand.u32 %v2300, 2147483648
        %v2415 = vsel %vm2413, %v2414, %v2412
        %v2416 = vrsqrt.pop %v2302
        %v2417 = vmul.f32 %v2302, %v2416
        %vm2418 = vcmp.eq.f32.partialorder %v2302, inf
        %v2419 = vsel %vm2418, %v2302, %v2417
        %vm2420 = vcmp.eq.f32.partialorder %v2302, 0.0
        %v2421 = vand.u32 %v2302, 2147483648
        %v2422 = vsel %vm2420, %v2421, %v2419
        %v2423 = vrsqrt.pop %v2304
        %v2424 = vmul.f32 %v2304, %v2423
        %vm2425 = vcmp.eq.f32.partialorder %v2304, inf
        %v2426 = vsel %vm2425, %v2304, %v2424
        %vm2427 = vcmp.eq.f32.partialorder %v2304, 0.0
        %v2428 = vand.u32 %v2304, 2147483648
        %v2429 = vsel %vm2427, %v2428, %v2426
        %v2430 = vrsqrt.pop %v2306
        %v2431 = vmul.f32 %v2306, %v2430
        %vm2432 = vcmp.eq.f32.partialorder %v2306, inf
        %v2433 = vsel %vm2432, %v2306, %v2431
        %vm2434 = vcmp.eq.f32.partialorder %v2306, 0.0
        %v2435 = vand.u32 %v2306, 2147483648
        %v2436 = vsel %vm2434, %v2435, %v2433
        %v2437 = vrsqrt.pop %v2308
        %v2438 = vmul.f32 %v2308, %v2437
        %vm2439 = vcmp.eq.f32.partialorder %v2308, inf
        %v2440 = vsel %vm2439, %v2308, %v2438
        %vm2441 = vcmp.eq.f32.partialorder %v2308, 0.0
        %v2442 = vand.u32 %v2308, 2147483648
        %v2443 = vsel %vm2441, %v2442, %v2440
        %v2444 = vrsqrt.pop %v2310
        %v2445 = vmul.f32 %v2310, %v2444
        %vm2446 = vcmp.eq.f32.partialorder %v2310, inf
        %v2447 = vsel %vm2446, %v2310, %v2445
        %vm2448 = vcmp.eq.f32.partialorder %v2310, 0.0
        %v2449 = vand.u32 %v2310, 2147483648
        %v2450 = vsel %vm2448, %v2449, %v2447
        %v2451 = vmul.f32 %v2272, -10000.0
        %v2452 = vmul.f32 %v2274, -10000.0
        %v2453 = vmul.f32 %v2276, -10000.0
        %v2454 = vmul.f32 %v2278, -10000.0
        %v2455 = vmul.f32 %v2280, -10000.0
        %v2456 = vmul.f32 %v2282, -10000.0
        %v2457 = vmul.f32 %v2284, -10000.0
        %v2458 = vmul.f32 %v2286, -10000.0
        %v2459 = vmul.f32 %v2288, -10000.0
        %v2460 = vmul.f32 %v2290, -10000.0
        %v2461 = vmul.f32 %v2292, -10000.0
        %v2462 = vmul.f32 %v2294, -10000.0
        %v2463 = vmul.f32 %v2296, -10000.0
        %v2464 = vmul.f32 %v2298, -10000.0
        %v2465 = vmul.f32 %v2300, -10000.0
        %v2466 = vmul.f32 %v2302, -10000.0
        %v2467 = vmul.f32 %v2304, -10000.0
        %v2468 = vmul.f32 %v2306, -10000.0
        %v2469 = vmul.f32 %v2308, -10000.0
        %v2470 = vmul.f32 %v2310, -10000.0
        %v2471 = vmul.f32 %v2451, 1.442695
        %v2472 = vpow.pop %v2471
        %v2473 = vmul.f32 %v2452, 1.442695
        %v2474 = vpow.pop %v2473
        %v2475 = vmul.f32 %v2453, 1.442695
        %v2476 = vpow.pop %v2475
        %v2477 = vmul.f32 %v2454, 1.442695
        %v2478 = vpow.pop %v2477
        %v2479 = vmul.f32 %v2455, 1.442695
        %v2480 = vpow.pop %v2479
        %v2481 = vmul.f32 %v2456, 1.442695
        %v2482 = vpow.pop %v2481
        %v2483 = vmul.f32 %v2457, 1.442695
        %v2484 = vpow.pop %v2483
        %v2485 = vmul.f32 %v2458, 1.442695
        %v2486 = vpow.pop %v2485
        %v2487 = vmul.f32 %v2459, 1.442695
        %v2488 = vpow.pop %v2487
        %v2489 = vmul.f32 %v2460, 1.442695
        %v2490 = vpow.pop %v2489
        %v2491 = vmul.f32 %v2461, 1.442695
        %v2492 = vpow.pop %v2491
        %v2493 = vmul.f32 %v2462, 1.442695
        %v2494 = vpow.pop %v2493
        %v2495 = vmul.f32 %v2463, 1.442695
        %v2496 = vpow.pop %v2495
        %v2497 = vmul.f32 %v2464, 1.442695
        %v2498 = vpow.pop %v2497
        %v2499 = vmul.f32 %v2465, 1.442695
        %v2500 = vpow.pop %v2499
        %v2501 = vmul.f32 %v2466, 1.442695
        %v2502 = vpow.pop %v2501
        %v2503 = vmul.f32 %v2467, 1.442695
        %v2504 = vpow.pop %v2503
        %v2505 = vmul.f32 %v2468, 1.442695
        %v2506 = vpow.pop %v2505
        %v2507 = vmul.f32 %v2469, 1.442695
        %v2508 = vpow.pop %v2507
        %v2509 = vmul.f32 %v2470, 1.442695
        %v2510 = vpow.pop %v2509
        %v2511 = vmul.f32 %v2317, %v2472
        %v2512 = vmul.f32 %v2324, %v2474
        %v2513 = vmul.f32 %v2331, %v2476
        %v2514 = vmul.f32 %v2338, %v2478
        %v2515 = vmul.f32 %v2345, %v2480
        %v2516 = vmul.f32 %v2352, %v2482
        %v2517 = vmul.f32 %v2359, %v2484
        %v2518 = vmul.f32 %v2366, %v2486
        %v2519 = vmul.f32 %v2373, %v2488
        %v2520 = vmul.f32 %v2380, %v2490
        %v2521 = vmul.f32 %v2387, %v2492
        %v2522 = vmul.f32 %v2394, %v2494
        %v2523 = vmul.f32 %v2401, %v2496
        %v2524 = vmul.f32 %v2408, %v2498
        %v2525 = vmul.f32 %v2415, %v2500
        %v2526 = vmul.f32 %v2422, %v2502
        %v2527 = vmul.f32 %v2429, %v2504
        %v2528 = vmul.f32 %v2436, %v2506
        %v2529 = vmul.f32 %v2443, %v2508
        %v2530 = vmul.f32 %v2450, %v2510
        %v2531 = vsub.f32 %v2211, %v2511
        %v2532 = vsub.f32 %v2212, %v2512
        %v2533 = vsub.f32 %v2213, %v2513
        %v2534 = vsub.f32 %v2214, %v2514
        %v2535 = vsub.f32 %v2215, %v2515
        %v2536 = vsub.f32 %v2216, %v2516
        %v2537 = vsub.f32 %v2217, %v2517
        %v2538 = vsub.f32 %v2218, %v2518
        %v2539 = vsub.f32 %v2219, %v2519
        %v2540 = vsub.f32 %v2220, %v2520
        %v2541 = vsub.f32 %v2221, %v2521
        %v2542 = vsub.f32 %v2222, %v2522
        %v2543 = vsub.f32 %v2223, %v2523
        %v2544 = vsub.f32 %v2224, %v2524
        %v2545 = vsub.f32 %v2225, %v2525
        %v2546 = vsub.f32 %v2226, %v2526
        %v2547 = vsub.f32 %v2227, %v2527
        %v2548 = vsub.f32 %v2228, %v2528
        %v2549 = vsub.f32 %v2229, %v2529
        %v2550 = vsub.f32 %v2230, %v2530
        %vm2551 = vcmp.eq.f32.partialorder %v2251, %v2272
        %vm2552 = vcmp.eq.f32.partialorder %v2252, %v2274
        %vm2553 = vcmp.eq.f32.partialorder %v2253, %v2276
        %vm2554 = vcmp.eq.f32.partialorder %v2254, %v2278
        %vm2555 = vcmp.eq.f32.partialorder %v2255, %v2280
        %vm2556 = vcmp.eq.f32.partialorder %v2256, %v2282
        %vm2557 = vcmp.eq.f32.partialorder %v2257, %v2284
        %vm2558 = vcmp.eq.f32.partialorder %v2258, %v2286
        %vm2559 = vcmp.eq.f32.partialorder %v2259, %v2288
        %vm2560 = vcmp.eq.f32.partialorder %v2260, %v2290
        %vm2561 = vcmp.eq.f32.partialorder %v2261, %v2292
        %vm2562 = vcmp.eq.f32.partialorder %v2262, %v2294
        %vm2563 = vcmp.eq.f32.partialorder %v2263, %v2296
        %vm2564 = vcmp.eq.f32.partialorder %v2264, %v2298
        %vm2565 = vcmp.eq.f32.partialorder %v2265, %v2300
        %vm2566 = vcmp.eq.f32.partialorder %v2266, %v2302
        %vm2567 = vcmp.eq.f32.partialorder %v2267, %v2304
        %vm2568 = vcmp.eq.f32.partialorder %v2268, %v2306
        %vm2569 = vcmp.eq.f32.partialorder %v2269, %v2308
        %vm2570 = vcmp.eq.f32.partialorder %v2270, %v2310
        %v2571 = vsel %vm2551, 1e+18, %v2251
        %v2572 = vsel %vm2552, 1e+18, %v2252
        %v2573 = vsel %vm2553, 1e+18, %v2253
        %v2574 = vsel %vm2554, 1e+18, %v2254
        %v2575 = vsel %vm2555, 1e+18, %v2255
        %v2576 = vsel %vm2556, 1e+18, %v2256
        %v2577 = vsel %vm2557, 1e+18, %v2257
        %v2578 = vsel %vm2558, 1e+18, %v2258
        %v2579 = vsel %vm2559, 1e+18, %v2259
        %v2580 = vsel %vm2560, 1e+18, %v2260
        %v2581 = vsel %vm2561, 1e+18, %v2261
        %v2582 = vsel %vm2562, 1e+18, %v2262
        %v2583 = vsel %vm2563, 1e+18, %v2263
        %v2584 = vsel %vm2564, 1e+18, %v2264
        %v2585 = vsel %vm2565, 1e+18, %v2265
        %v2586 = vsel %vm2566, 1e+18, %v2266
        %v2587 = vsel %vm2567, 1e+18, %v2267
        %v2588 = vsel %vm2568, 1e+18, %v2268
        %v2589 = vsel %vm2569, 1e+18, %v2269
        %v2590 = vsel %vm2570, 1e+18, %v2270
        %2591 = vmin.xlane.f32.xlu0 %v2571
        %v2592 = vpop.xlane.xlu0 %2591
        %2593 = vmin.xlane.f32.xlu0 %v2572
        %v2594 = vpop.xlane.xlu0 %2593
        %2595 = vmin.xlane.f32.xlu0 %v2573
        %v2596 = vpop.xlane.xlu0 %2595
        %2597 = vmin.xlane.f32.xlu0 %v2574
        %v2598 = vpop.xlane.xlu0 %2597
        %2599 = vmin.xlane.f32.xlu0 %v2575
        %v2600 = vpop.xlane.xlu0 %2599
        %2601 = vmin.xlane.f32.xlu0 %v2576
        %v2602 = vpop.xlane.xlu0 %2601
        %2603 = vmin.xlane.f32.xlu0 %v2577
        %v2604 = vpop.xlane.xlu0 %2603
        %2605 = vmin.xlane.f32.xlu0 %v2578
        %v2606 = vpop.xlane.xlu0 %2605
        %2607 = vmin.xlane.f32.xlu0 %v2579
        %v2608 = vpop.xlane.xlu0 %2607
        %2609 = vmin.xlane.f32.xlu0 %v2580
        %v2610 = vpop.xlane.xlu0 %2609
        %2611 = vmin.xlane.f32.xlu0 %v2581
        %v2612 = vpop.xlane.xlu0 %2611
        %2613 = vmin.xlane.f32.xlu0 %v2582
        %v2614 = vpop.xlane.xlu0 %2613
        %2615 = vmin.xlane.f32.xlu0 %v2583
        %v2616 = vpop.xlane.xlu0 %2615
        %2617 = vmin.xlane.f32.xlu0 %v2584
        %v2618 = vpop.xlane.xlu0 %2617
        %2619 = vmin.xlane.f32.xlu0 %v2585
        %v2620 = vpop.xlane.xlu0 %2619
        %2621 = vmin.xlane.f32.xlu0 %v2586
        %v2622 = vpop.xlane.xlu0 %2621
        %2623 = vmin.xlane.f32.xlu0 %v2587
        %v2624 = vpop.xlane.xlu0 %2623
        %2625 = vmin.xlane.f32.xlu0 %v2588
        %v2626 = vpop.xlane.xlu0 %2625
        %2627 = vmin.xlane.f32.xlu0 %v2589
        %v2628 = vpop.xlane.xlu0 %2627
        %2629 = vmin.xlane.f32.xlu0 %v2590
        %v2630 = vpop.xlane.xlu0 %2629
        %v2631 = vrsqrt.pop %v2592
        %v2632 = vmul.f32 %v2592, %v2631
        %vm2633 = vcmp.eq.f32.partialorder %v2592, inf
        %v2634 = vsel %vm2633, %v2592, %v2632
        %vm2635 = vcmp.eq.f32.partialorder %v2592, 0.0
        %v2636 = vand.u32 %v2592, 2147483648
        %v2637 = vsel %vm2635, %v2636, %v2634
        %v2638 = vrsqrt.pop %v2594
        %v2639 = vmul.f32 %v2594, %v2638
        %vm2640 = vcmp.eq.f32.partialorder %v2594, inf
        %v2641 = vsel %vm2640, %v2594, %v2639
        %vm2642 = vcmp.eq.f32.partialorder %v2594, 0.0
        %v2643 = vand.u32 %v2594, 2147483648
        %v2644 = vsel %vm2642, %v2643, %v2641
        %v2645 = vrsqrt.pop %v2596
        %v2646 = vmul.f32 %v2596, %v2645
        %vm2647 = vcmp.eq.f32.partialorder %v2596, inf
        %v2648 = vsel %vm2647, %v2596, %v2646
        %vm2649 = vcmp.eq.f32.partialorder %v2596, 0.0
        %v2650 = vand.u32 %v2596, 2147483648
        %v2651 = vsel %vm2649, %v2650, %v2648
        %v2652 = vrsqrt.pop %v2598
        %v2653 = vmul.f32 %v2598, %v2652
        %vm2654 = vcmp.eq.f32.partialorder %v2598, inf
        %v2655 = vsel %vm2654, %v2598, %v2653
        %vm2656 = vcmp.eq.f32.partialorder %v2598, 0.0
        %v2657 = vand.u32 %v2598, 2147483648
        %v2658 = vsel %vm2656, %v2657, %v2655
        %v2659 = vrsqrt.pop %v2600
        %v2660 = vmul.f32 %v2600, %v2659
        %vm2661 = vcmp.eq.f32.partialorder %v2600, inf
        %v2662 = vsel %vm2661, %v2600, %v2660
        %vm2663 = vcmp.eq.f32.partialorder %v2600, 0.0
        %v2664 = vand.u32 %v2600, 2147483648
        %v2665 = vsel %vm2663, %v2664, %v2662
        %v2666 = vrsqrt.pop %v2602
        %v2667 = vmul.f32 %v2602, %v2666
        %vm2668 = vcmp.eq.f32.partialorder %v2602, inf
        %v2669 = vsel %vm2668, %v2602, %v2667
        %vm2670 = vcmp.eq.f32.partialorder %v2602, 0.0
        %v2671 = vand.u32 %v2602, 2147483648
        %v2672 = vsel %vm2670, %v2671, %v2669
        %v2673 = vrsqrt.pop %v2604
        %v2674 = vmul.f32 %v2604, %v2673
        %vm2675 = vcmp.eq.f32.partialorder %v2604, inf
        %v2676 = vsel %vm2675, %v2604, %v2674
        %vm2677 = vcmp.eq.f32.partialorder %v2604, 0.0
        %v2678 = vand.u32 %v2604, 2147483648
        %v2679 = vsel %vm2677, %v2678, %v2676
        %v2680 = vrsqrt.pop %v2606
        %v2681 = vmul.f32 %v2606, %v2680
        %vm2682 = vcmp.eq.f32.partialorder %v2606, inf
        %v2683 = vsel %vm2682, %v2606, %v2681
        %vm2684 = vcmp.eq.f32.partialorder %v2606, 0.0
        %v2685 = vand.u32 %v2606, 2147483648
        %v2686 = vsel %vm2684, %v2685, %v2683
        %v2687 = vrsqrt.pop %v2608
        %v2688 = vmul.f32 %v2608, %v2687
        %vm2689 = vcmp.eq.f32.partialorder %v2608, inf
        %v2690 = vsel %vm2689, %v2608, %v2688
        %vm2691 = vcmp.eq.f32.partialorder %v2608, 0.0
        %v2692 = vand.u32 %v2608, 2147483648
        %v2693 = vsel %vm2691, %v2692, %v2690
        %v2694 = vrsqrt.pop %v2610
        %v2695 = vmul.f32 %v2610, %v2694
        %vm2696 = vcmp.eq.f32.partialorder %v2610, inf
        %v2697 = vsel %vm2696, %v2610, %v2695
        %vm2698 = vcmp.eq.f32.partialorder %v2610, 0.0
        %v2699 = vand.u32 %v2610, 2147483648
        %v2700 = vsel %vm2698, %v2699, %v2697
        %v2701 = vrsqrt.pop %v2612
        %v2702 = vmul.f32 %v2612, %v2701
        %vm2703 = vcmp.eq.f32.partialorder %v2612, inf
        %v2704 = vsel %vm2703, %v2612, %v2702
        %vm2705 = vcmp.eq.f32.partialorder %v2612, 0.0
        %v2706 = vand.u32 %v2612, 2147483648
        %v2707 = vsel %vm2705, %v2706, %v2704
        %v2708 = vrsqrt.pop %v2614
        %v2709 = vmul.f32 %v2614, %v2708
        %vm2710 = vcmp.eq.f32.partialorder %v2614, inf
        %v2711 = vsel %vm2710, %v2614, %v2709
        %vm2712 = vcmp.eq.f32.partialorder %v2614, 0.0
        %v2713 = vand.u32 %v2614, 2147483648
        %v2714 = vsel %vm2712, %v2713, %v2711
        %v2715 = vrsqrt.pop %v2616
        %v2716 = vmul.f32 %v2616, %v2715
        %vm2717 = vcmp.eq.f32.partialorder %v2616, inf
        %v2718 = vsel %vm2717, %v2616, %v2716
        %vm2719 = vcmp.eq.f32.partialorder %v2616, 0.0
        %v2720 = vand.u32 %v2616, 2147483648
        %v2721 = vsel %vm2719, %v2720, %v2718
        %v2722 = vrsqrt.pop %v2618
        %v2723 = vmul.f32 %v2618, %v2722
        %vm2724 = vcmp.eq.f32.partialorder %v2618, inf
        %v2725 = vsel %vm2724, %v2618, %v2723
        %vm2726 = vcmp.eq.f32.partialorder %v2618, 0.0
        %v2727 = vand.u32 %v2618, 2147483648
        %v2728 = vsel %vm2726, %v2727, %v2725
        %v2729 = vrsqrt.pop %v2620
        %v2730 = vmul.f32 %v2620, %v2729
        %vm2731 = vcmp.eq.f32.partialorder %v2620, inf
        %v2732 = vsel %vm2731, %v2620, %v2730
        %vm2733 = vcmp.eq.f32.partialorder %v2620, 0.0
        %v2734 = vand.u32 %v2620, 2147483648
        %v2735 = vsel %vm2733, %v2734, %v2732
        %v2736 = vrsqrt.pop %v2622
        %v2737 = vmul.f32 %v2622, %v2736
        %vm2738 = vcmp.eq.f32.partialorder %v2622, inf
        %v2739 = vsel %vm2738, %v2622, %v2737
        %vm2740 = vcmp.eq.f32.partialorder %v2622, 0.0
        %v2741 = vand.u32 %v2622, 2147483648
        %v2742 = vsel %vm2740, %v2741, %v2739
        %v2743 = vrsqrt.pop %v2624
        %v2744 = vmul.f32 %v2624, %v2743
        %vm2745 = vcmp.eq.f32.partialorder %v2624, inf
        %v2746 = vsel %vm2745, %v2624, %v2744
        %vm2747 = vcmp.eq.f32.partialorder %v2624, 0.0
        %v2748 = vand.u32 %v2624, 2147483648
        %v2749 = vsel %vm2747, %v2748, %v2746
        %v2750 = vrsqrt.pop %v2626
        %v2751 = vmul.f32 %v2626, %v2750
        %vm2752 = vcmp.eq.f32.partialorder %v2626, inf
        %v2753 = vsel %vm2752, %v2626, %v2751
        %vm2754 = vcmp.eq.f32.partialorder %v2626, 0.0
        %v2755 = vand.u32 %v2626, 2147483648
        %v2756 = vsel %vm2754, %v2755, %v2753
        %v2757 = vrsqrt.pop %v2628
        %v2758 = vmul.f32 %v2628, %v2757
        %vm2759 = vcmp.eq.f32.partialorder %v2628, inf
        %v2760 = vsel %vm2759, %v2628, %v2758
        %vm2761 = vcmp.eq.f32.partialorder %v2628, 0.0
        %v2762 = vand.u32 %v2628, 2147483648
        %v2763 = vsel %vm2761, %v2762, %v2760
        %v2764 = vrsqrt.pop %v2630
        %v2765 = vmul.f32 %v2630, %v2764
        %vm2766 = vcmp.eq.f32.partialorder %v2630, inf
        %v2767 = vsel %vm2766, %v2630, %v2765
        %vm2768 = vcmp.eq.f32.partialorder %v2630, 0.0
        %v2769 = vand.u32 %v2630, 2147483648
        %v2770 = vsel %vm2768, %v2769, %v2767
        %v2771 = vmul.f32 %v2592, -10000.0
        %v2772 = vmul.f32 %v2594, -10000.0
        %v2773 = vmul.f32 %v2596, -10000.0
        %v2774 = vmul.f32 %v2598, -10000.0
        %v2775 = vmul.f32 %v2600, -10000.0
        %v2776 = vmul.f32 %v2602, -10000.0
        %v2777 = vmul.f32 %v2604, -10000.0
        %v2778 = vmul.f32 %v2606, -10000.0
        %v2779 = vmul.f32 %v2608, -10000.0
        %v2780 = vmul.f32 %v2610, -10000.0
        %v2781 = vmul.f32 %v2612, -10000.0
        %v2782 = vmul.f32 %v2614, -10000.0
        %v2783 = vmul.f32 %v2616, -10000.0
        %v2784 = vmul.f32 %v2618, -10000.0
        %v2785 = vmul.f32 %v2620, -10000.0
        %v2786 = vmul.f32 %v2622, -10000.0
        %v2787 = vmul.f32 %v2624, -10000.0
        %v2788 = vmul.f32 %v2626, -10000.0
        %v2789 = vmul.f32 %v2628, -10000.0
        %v2790 = vmul.f32 %v2630, -10000.0
        %v2791 = vmul.f32 %v2771, 1.442695
        %v2792 = vpow.pop %v2791
        %v2793 = vmul.f32 %v2772, 1.442695
        %v2794 = vpow.pop %v2793
        %v2795 = vmul.f32 %v2773, 1.442695
        %v2796 = vpow.pop %v2795
        %v2797 = vmul.f32 %v2774, 1.442695
        %v2798 = vpow.pop %v2797
        %v2799 = vmul.f32 %v2775, 1.442695
        %v2800 = vpow.pop %v2799
        %v2801 = vmul.f32 %v2776, 1.442695
        %v2802 = vpow.pop %v2801
        %v2803 = vmul.f32 %v2777, 1.442695
        %v2804 = vpow.pop %v2803
        %v2805 = vmul.f32 %v2778, 1.442695
        %v2806 = vpow.pop %v2805
        %v2807 = vmul.f32 %v2779, 1.442695
        %v2808 = vpow.pop %v2807
        %v2809 = vmul.f32 %v2780, 1.442695
        %v2810 = vpow.pop %v2809
        %v2811 = vmul.f32 %v2781, 1.442695
        %v2812 = vpow.pop %v2811
        %v2813 = vmul.f32 %v2782, 1.442695
        %v2814 = vpow.pop %v2813
        %v2815 = vmul.f32 %v2783, 1.442695
        %v2816 = vpow.pop %v2815
        %v2817 = vmul.f32 %v2784, 1.442695
        %v2818 = vpow.pop %v2817
        %v2819 = vmul.f32 %v2785, 1.442695
        %v2820 = vpow.pop %v2819
        %v2821 = vmul.f32 %v2786, 1.442695
        %v2822 = vpow.pop %v2821
        %v2823 = vmul.f32 %v2787, 1.442695
        %v2824 = vpow.pop %v2823
        %v2825 = vmul.f32 %v2788, 1.442695
        %v2826 = vpow.pop %v2825
        %v2827 = vmul.f32 %v2789, 1.442695
        %v2828 = vpow.pop %v2827
        %v2829 = vmul.f32 %v2790, 1.442695
        %v2830 = vpow.pop %v2829
        %v2831 = vmul.f32 %v2637, %v2792
        %v2832 = vmul.f32 %v2644, %v2794
        %v2833 = vmul.f32 %v2651, %v2796
        %v2834 = vmul.f32 %v2658, %v2798
        %v2835 = vmul.f32 %v2665, %v2800
        %v2836 = vmul.f32 %v2672, %v2802
        %v2837 = vmul.f32 %v2679, %v2804
        %v2838 = vmul.f32 %v2686, %v2806
        %v2839 = vmul.f32 %v2693, %v2808
        %v2840 = vmul.f32 %v2700, %v2810
        %v2841 = vmul.f32 %v2707, %v2812
        %v2842 = vmul.f32 %v2714, %v2814
        %v2843 = vmul.f32 %v2721, %v2816
        %v2844 = vmul.f32 %v2728, %v2818
        %v2845 = vmul.f32 %v2735, %v2820
        %v2846 = vmul.f32 %v2742, %v2822
        %v2847 = vmul.f32 %v2749, %v2824
        %v2848 = vmul.f32 %v2756, %v2826
        %v2849 = vmul.f32 %v2763, %v2828
        %v2850 = vmul.f32 %v2770, %v2830
        %v2851 = vsub.f32 %v2531, %v2831
        %v2852 = vsub.f32 %v2532, %v2832
        %v2853 = vsub.f32 %v2533, %v2833
        %v2854 = vsub.f32 %v2534, %v2834
        %v2855 = vsub.f32 %v2535, %v2835
        %v2856 = vsub.f32 %v2536, %v2836
        %v2857 = vsub.f32 %v2537, %v2837
        %v2858 = vsub.f32 %v2538, %v2838
        %v2859 = vsub.f32 %v2539, %v2839
        %v2860 = vsub.f32 %v2540, %v2840
        %v2861 = vsub.f32 %v2541, %v2841
        %v2862 = vsub.f32 %v2542, %v2842
        %v2863 = vsub.f32 %v2543, %v2843
        %v2864 = vsub.f32 %v2544, %v2844
        %v2865 = vsub.f32 %v2545, %v2845
        %v2866 = vsub.f32 %v2546, %v2846
        %v2867 = vsub.f32 %v2547, %v2847
        %v2868 = vsub.f32 %v2548, %v2848
        %v2869 = vsub.f32 %v2549, %v2849
        %v2870 = vsub.f32 %v2550, %v2850
        %vm2871 = vcmp.eq.f32.partialorder %v2571, %v2592
        %vm2872 = vcmp.eq.f32.partialorder %v2572, %v2594
        %vm2873 = vcmp.eq.f32.partialorder %v2573, %v2596
        %vm2874 = vcmp.eq.f32.partialorder %v2574, %v2598
        %vm2875 = vcmp.eq.f32.partialorder %v2575, %v2600
        %vm2876 = vcmp.eq.f32.partialorder %v2576, %v2602
        %vm2877 = vcmp.eq.f32.partialorder %v2577, %v2604
        %vm2878 = vcmp.eq.f32.partialorder %v2578, %v2606
        %vm2879 = vcmp.eq.f32.partialorder %v2579, %v2608
        %vm2880 = vcmp.eq.f32.partialorder %v2580, %v2610
        %vm2881 = vcmp.eq.f32.partialorder %v2581, %v2612
        %vm2882 = vcmp.eq.f32.partialorder %v2582, %v2614
        %vm2883 = vcmp.eq.f32.partialorder %v2583, %v2616
        %vm2884 = vcmp.eq.f32.partialorder %v2584, %v2618
        %vm2885 = vcmp.eq.f32.partialorder %v2585, %v2620
        %vm2886 = vcmp.eq.f32.partialorder %v2586, %v2622
        %vm2887 = vcmp.eq.f32.partialorder %v2587, %v2624
        %vm2888 = vcmp.eq.f32.partialorder %v2588, %v2626
        %vm2889 = vcmp.eq.f32.partialorder %v2589, %v2628
        %vm2890 = vcmp.eq.f32.partialorder %v2590, %v2630
        %v2891 = vsel %vm2871, 1e+18, %v2571
        %v2892 = vsel %vm2872, 1e+18, %v2572
        %v2893 = vsel %vm2873, 1e+18, %v2573
        %v2894 = vsel %vm2874, 1e+18, %v2574
        %v2895 = vsel %vm2875, 1e+18, %v2575
        %v2896 = vsel %vm2876, 1e+18, %v2576
        %v2897 = vsel %vm2877, 1e+18, %v2577
        %v2898 = vsel %vm2878, 1e+18, %v2578
        %v2899 = vsel %vm2879, 1e+18, %v2579
        %v2900 = vsel %vm2880, 1e+18, %v2580
        %v2901 = vsel %vm2881, 1e+18, %v2581
        %v2902 = vsel %vm2882, 1e+18, %v2582
        %v2903 = vsel %vm2883, 1e+18, %v2583
        %v2904 = vsel %vm2884, 1e+18, %v2584
        %v2905 = vsel %vm2885, 1e+18, %v2585
        %v2906 = vsel %vm2886, 1e+18, %v2586
        %v2907 = vsel %vm2887, 1e+18, %v2587
        %v2908 = vsel %vm2888, 1e+18, %v2588
        %v2909 = vsel %vm2889, 1e+18, %v2589
        %v2910 = vsel %vm2890, 1e+18, %v2590
        %2911 = vmin.xlane.f32.xlu0 %v2891
        %v2912 = vpop.xlane.xlu0 %2911
        %2913 = vmin.xlane.f32.xlu0 %v2892
        %v2914 = vpop.xlane.xlu0 %2913
        %2915 = vmin.xlane.f32.xlu0 %v2893
        %v2916 = vpop.xlane.xlu0 %2915
        %2917 = vmin.xlane.f32.xlu0 %v2894
        %v2918 = vpop.xlane.xlu0 %2917
        %2919 = vmin.xlane.f32.xlu0 %v2895
        %v2920 = vpop.xlane.xlu0 %2919
        %2921 = vmin.xlane.f32.xlu0 %v2896
        %v2922 = vpop.xlane.xlu0 %2921
        %2923 = vmin.xlane.f32.xlu0 %v2897
        %v2924 = vpop.xlane.xlu0 %2923
        %2925 = vmin.xlane.f32.xlu0 %v2898
        %v2926 = vpop.xlane.xlu0 %2925
        %2927 = vmin.xlane.f32.xlu0 %v2899
        %v2928 = vpop.xlane.xlu0 %2927
        %2929 = vmin.xlane.f32.xlu0 %v2900
        %v2930 = vpop.xlane.xlu0 %2929
        %2931 = vmin.xlane.f32.xlu0 %v2901
        %v2932 = vpop.xlane.xlu0 %2931
        %2933 = vmin.xlane.f32.xlu0 %v2902
        %v2934 = vpop.xlane.xlu0 %2933
        %2935 = vmin.xlane.f32.xlu0 %v2903
        %v2936 = vpop.xlane.xlu0 %2935
        %2937 = vmin.xlane.f32.xlu0 %v2904
        %v2938 = vpop.xlane.xlu0 %2937
        %2939 = vmin.xlane.f32.xlu0 %v2905
        %v2940 = vpop.xlane.xlu0 %2939
        %2941 = vmin.xlane.f32.xlu0 %v2906
        %v2942 = vpop.xlane.xlu0 %2941
        %2943 = vmin.xlane.f32.xlu0 %v2907
        %v2944 = vpop.xlane.xlu0 %2943
        %2945 = vmin.xlane.f32.xlu0 %v2908
        %v2946 = vpop.xlane.xlu0 %2945
        %2947 = vmin.xlane.f32.xlu0 %v2909
        %v2948 = vpop.xlane.xlu0 %2947
        %2949 = vmin.xlane.f32.xlu0 %v2910
        %v2950 = vpop.xlane.xlu0 %2949
        %v2951 = vrsqrt.pop %v2912
        %v2952 = vmul.f32 %v2912, %v2951
        %vm2953 = vcmp.eq.f32.partialorder %v2912, inf
        %v2954 = vsel %vm2953, %v2912, %v2952
        %vm2955 = vcmp.eq.f32.partialorder %v2912, 0.0
        %v2956 = vand.u32 %v2912, 2147483648
        %v2957 = vsel %vm2955, %v2956, %v2954
        %v2958 = vrsqrt.pop %v2914
        %v2959 = vmul.f32 %v2914, %v2958
        %vm2960 = vcmp.eq.f32.partialorder %v2914, inf
        %v2961 = vsel %vm2960, %v2914, %v2959
        %vm2962 = vcmp.eq.f32.partialorder %v2914, 0.0
        %v2963 = vand.u32 %v2914, 2147483648
        %v2964 = vsel %vm2962, %v2963, %v2961
        %v2965 = vrsqrt.pop %v2916
        %v2966 = vmul.f32 %v2916, %v2965
        %vm2967 = vcmp.eq.f32.partialorder %v2916, inf
        %v2968 = vsel %vm2967, %v2916, %v2966
        %vm2969 = vcmp.eq.f32.partialorder %v2916, 0.0
        %v2970 = vand.u32 %v2916, 2147483648
        %v2971 = vsel %vm2969, %v2970, %v2968
        %v2972 = vrsqrt.pop %v2918
        %v2973 = vmul.f32 %v2918, %v2972
        %vm2974 = vcmp.eq.f32.partialorder %v2918, inf
        %v2975 = vsel %vm2974, %v2918, %v2973
        %vm2976 = vcmp.eq.f32.partialorder %v2918, 0.0
        %v2977 = vand.u32 %v2918, 2147483648
        %v2978 = vsel %vm2976, %v2977, %v2975
        %v2979 = vrsqrt.pop %v2920
        %v2980 = vmul.f32 %v2920, %v2979
        %vm2981 = vcmp.eq.f32.partialorder %v2920, inf
        %v2982 = vsel %vm2981, %v2920, %v2980
        %vm2983 = vcmp.eq.f32.partialorder %v2920, 0.0
        %v2984 = vand.u32 %v2920, 2147483648
        %v2985 = vsel %vm2983, %v2984, %v2982
        %v2986 = vrsqrt.pop %v2922
        %v2987 = vmul.f32 %v2922, %v2986
        %vm2988 = vcmp.eq.f32.partialorder %v2922, inf
        %v2989 = vsel %vm2988, %v2922, %v2987
        %vm2990 = vcmp.eq.f32.partialorder %v2922, 0.0
        %v2991 = vand.u32 %v2922, 2147483648
        %v2992 = vsel %vm2990, %v2991, %v2989
        %v2993 = vrsqrt.pop %v2924
        %v2994 = vmul.f32 %v2924, %v2993
        %vm2995 = vcmp.eq.f32.partialorder %v2924, inf
        %v2996 = vsel %vm2995, %v2924, %v2994
        %vm2997 = vcmp.eq.f32.partialorder %v2924, 0.0
        %v2998 = vand.u32 %v2924, 2147483648
        %v2999 = vsel %vm2997, %v2998, %v2996
        %v3000 = vrsqrt.pop %v2926
        %v3001 = vmul.f32 %v2926, %v3000
        %vm3002 = vcmp.eq.f32.partialorder %v2926, inf
        %v3003 = vsel %vm3002, %v2926, %v3001
        %vm3004 = vcmp.eq.f32.partialorder %v2926, 0.0
        %v3005 = vand.u32 %v2926, 2147483648
        %v3006 = vsel %vm3004, %v3005, %v3003
        %v3007 = vrsqrt.pop %v2928
        %v3008 = vmul.f32 %v2928, %v3007
        %vm3009 = vcmp.eq.f32.partialorder %v2928, inf
        %v3010 = vsel %vm3009, %v2928, %v3008
        %vm3011 = vcmp.eq.f32.partialorder %v2928, 0.0
        %v3012 = vand.u32 %v2928, 2147483648
        %v3013 = vsel %vm3011, %v3012, %v3010
        %v3014 = vrsqrt.pop %v2930
        %v3015 = vmul.f32 %v2930, %v3014
        %vm3016 = vcmp.eq.f32.partialorder %v2930, inf
        %v3017 = vsel %vm3016, %v2930, %v3015
        %vm3018 = vcmp.eq.f32.partialorder %v2930, 0.0
        %v3019 = vand.u32 %v2930, 2147483648
        %v3020 = vsel %vm3018, %v3019, %v3017
        %v3021 = vrsqrt.pop %v2932
        %v3022 = vmul.f32 %v2932, %v3021
        %vm3023 = vcmp.eq.f32.partialorder %v2932, inf
        %v3024 = vsel %vm3023, %v2932, %v3022
        %vm3025 = vcmp.eq.f32.partialorder %v2932, 0.0
        %v3026 = vand.u32 %v2932, 2147483648
        %v3027 = vsel %vm3025, %v3026, %v3024
        %v3028 = vrsqrt.pop %v2934
        %v3029 = vmul.f32 %v2934, %v3028
        %vm3030 = vcmp.eq.f32.partialorder %v2934, inf
        %v3031 = vsel %vm3030, %v2934, %v3029
        %vm3032 = vcmp.eq.f32.partialorder %v2934, 0.0
        %v3033 = vand.u32 %v2934, 2147483648
        %v3034 = vsel %vm3032, %v3033, %v3031
        %v3035 = vrsqrt.pop %v2936
        %v3036 = vmul.f32 %v2936, %v3035
        %vm3037 = vcmp.eq.f32.partialorder %v2936, inf
        %v3038 = vsel %vm3037, %v2936, %v3036
        %vm3039 = vcmp.eq.f32.partialorder %v2936, 0.0
        %v3040 = vand.u32 %v2936, 2147483648
        %v3041 = vsel %vm3039, %v3040, %v3038
        %v3042 = vrsqrt.pop %v2938
        %v3043 = vmul.f32 %v2938, %v3042
        %vm3044 = vcmp.eq.f32.partialorder %v2938, inf
        %v3045 = vsel %vm3044, %v2938, %v3043
        %vm3046 = vcmp.eq.f32.partialorder %v2938, 0.0
        %v3047 = vand.u32 %v2938, 2147483648
        %v3048 = vsel %vm3046, %v3047, %v3045
        %v3049 = vrsqrt.pop %v2940
        %v3050 = vmul.f32 %v2940, %v3049
        %vm3051 = vcmp.eq.f32.partialorder %v2940, inf
        %v3052 = vsel %vm3051, %v2940, %v3050
        %vm3053 = vcmp.eq.f32.partialorder %v2940, 0.0
        %v3054 = vand.u32 %v2940, 2147483648
        %v3055 = vsel %vm3053, %v3054, %v3052
        %v3056 = vrsqrt.pop %v2942
        %v3057 = vmul.f32 %v2942, %v3056
        %vm3058 = vcmp.eq.f32.partialorder %v2942, inf
        %v3059 = vsel %vm3058, %v2942, %v3057
        %vm3060 = vcmp.eq.f32.partialorder %v2942, 0.0
        %v3061 = vand.u32 %v2942, 2147483648
        %v3062 = vsel %vm3060, %v3061, %v3059
        %v3063 = vrsqrt.pop %v2944
        %v3064 = vmul.f32 %v2944, %v3063
        %vm3065 = vcmp.eq.f32.partialorder %v2944, inf
        %v3066 = vsel %vm3065, %v2944, %v3064
        %vm3067 = vcmp.eq.f32.partialorder %v2944, 0.0
        %v3068 = vand.u32 %v2944, 2147483648
        %v3069 = vsel %vm3067, %v3068, %v3066
        %v3070 = vrsqrt.pop %v2946
        %v3071 = vmul.f32 %v2946, %v3070
        %vm3072 = vcmp.eq.f32.partialorder %v2946, inf
        %v3073 = vsel %vm3072, %v2946, %v3071
        %vm3074 = vcmp.eq.f32.partialorder %v2946, 0.0
        %v3075 = vand.u32 %v2946, 2147483648
        %v3076 = vsel %vm3074, %v3075, %v3073
        %v3077 = vrsqrt.pop %v2948
        %v3078 = vmul.f32 %v2948, %v3077
        %vm3079 = vcmp.eq.f32.partialorder %v2948, inf
        %v3080 = vsel %vm3079, %v2948, %v3078
        %vm3081 = vcmp.eq.f32.partialorder %v2948, 0.0
        %v3082 = vand.u32 %v2948, 2147483648
        %v3083 = vsel %vm3081, %v3082, %v3080
        %v3084 = vrsqrt.pop %v2950
        %v3085 = vmul.f32 %v2950, %v3084
        %vm3086 = vcmp.eq.f32.partialorder %v2950, inf
        %v3087 = vsel %vm3086, %v2950, %v3085
        %vm3088 = vcmp.eq.f32.partialorder %v2950, 0.0
        %v3089 = vand.u32 %v2950, 2147483648
        %v3090 = vsel %vm3088, %v3089, %v3087
        %v3091 = vmul.f32 %v2912, -10000.0
        %v3092 = vmul.f32 %v2914, -10000.0
        %v3093 = vmul.f32 %v2916, -10000.0
        %v3094 = vmul.f32 %v2918, -10000.0
        %v3095 = vmul.f32 %v2920, -10000.0
        %v3096 = vmul.f32 %v2922, -10000.0
        %v3097 = vmul.f32 %v2924, -10000.0
        %v3098 = vmul.f32 %v2926, -10000.0
        %v3099 = vmul.f32 %v2928, -10000.0
        %v3100 = vmul.f32 %v2930, -10000.0
        %v3101 = vmul.f32 %v2932, -10000.0
        %v3102 = vmul.f32 %v2934, -10000.0
        %v3103 = vmul.f32 %v2936, -10000.0
        %v3104 = vmul.f32 %v2938, -10000.0
        %v3105 = vmul.f32 %v2940, -10000.0
        %v3106 = vmul.f32 %v2942, -10000.0
        %v3107 = vmul.f32 %v2944, -10000.0
        %v3108 = vmul.f32 %v2946, -10000.0
        %v3109 = vmul.f32 %v2948, -10000.0
        %v3110 = vmul.f32 %v2950, -10000.0
        %v3111 = vmul.f32 %v3091, 1.442695
        %v3112 = vpow.pop %v3111
        %v3113 = vmul.f32 %v3092, 1.442695
        %v3114 = vpow.pop %v3113
        %v3115 = vmul.f32 %v3093, 1.442695
        %v3116 = vpow.pop %v3115
        %v3117 = vmul.f32 %v3094, 1.442695
        %v3118 = vpow.pop %v3117
        %v3119 = vmul.f32 %v3095, 1.442695
        %v3120 = vpow.pop %v3119
        %v3121 = vmul.f32 %v3096, 1.442695
        %v3122 = vpow.pop %v3121
        %v3123 = vmul.f32 %v3097, 1.442695
        %v3124 = vpow.pop %v3123
        %v3125 = vmul.f32 %v3098, 1.442695
        %v3126 = vpow.pop %v3125
        %v3127 = vmul.f32 %v3099, 1.442695
        %v3128 = vpow.pop %v3127
        %v3129 = vmul.f32 %v3100, 1.442695
        %v3130 = vpow.pop %v3129
        %v3131 = vmul.f32 %v3101, 1.442695
        %v3132 = vpow.pop %v3131
        %v3133 = vmul.f32 %v3102, 1.442695
        %v3134 = vpow.pop %v3133
        %v3135 = vmul.f32 %v3103, 1.442695
        %v3136 = vpow.pop %v3135
        %v3137 = vmul.f32 %v3104, 1.442695
        %v3138 = vpow.pop %v3137
        %v3139 = vmul.f32 %v3105, 1.442695
        %v3140 = vpow.pop %v3139
        %v3141 = vmul.f32 %v3106, 1.442695
        %v3142 = vpow.pop %v3141
        %v3143 = vmul.f32 %v3107, 1.442695
        %v3144 = vpow.pop %v3143
        %v3145 = vmul.f32 %v3108, 1.442695
        %v3146 = vpow.pop %v3145
        %v3147 = vmul.f32 %v3109, 1.442695
        %v3148 = vpow.pop %v3147
        %v3149 = vmul.f32 %v3110, 1.442695
        %v3150 = vpow.pop %v3149
        %v3151 = vmul.f32 %v2957, %v3112
        %v3152 = vmul.f32 %v2964, %v3114
        %v3153 = vmul.f32 %v2971, %v3116
        %v3154 = vmul.f32 %v2978, %v3118
        %v3155 = vmul.f32 %v2985, %v3120
        %v3156 = vmul.f32 %v2992, %v3122
        %v3157 = vmul.f32 %v2999, %v3124
        %v3158 = vmul.f32 %v3006, %v3126
        %v3159 = vmul.f32 %v3013, %v3128
        %v3160 = vmul.f32 %v3020, %v3130
        %v3161 = vmul.f32 %v3027, %v3132
        %v3162 = vmul.f32 %v3034, %v3134
        %v3163 = vmul.f32 %v3041, %v3136
        %v3164 = vmul.f32 %v3048, %v3138
        %v3165 = vmul.f32 %v3055, %v3140
        %v3166 = vmul.f32 %v3062, %v3142
        %v3167 = vmul.f32 %v3069, %v3144
        %v3168 = vmul.f32 %v3076, %v3146
        %v3169 = vmul.f32 %v3083, %v3148
        %v3170 = vmul.f32 %v3090, %v3150
        %v3171 = vsub.f32 %v2851, %v3151
        %v3172 = vsub.f32 %v2852, %v3152
        %v3173 = vsub.f32 %v2853, %v3153
        %v3174 = vsub.f32 %v2854, %v3154
        %v3175 = vsub.f32 %v2855, %v3155
        %v3176 = vsub.f32 %v2856, %v3156
        %v3177 = vsub.f32 %v2857, %v3157
        %v3178 = vsub.f32 %v2858, %v3158
        %v3179 = vsub.f32 %v2859, %v3159
        %v3180 = vsub.f32 %v2860, %v3160
        %v3181 = vsub.f32 %v2861, %v3161
        %v3182 = vsub.f32 %v2862, %v3162
        %v3183 = vsub.f32 %v2863, %v3163
        %v3184 = vsub.f32 %v2864, %v3164
        %v3185 = vsub.f32 %v2865, %v3165
        %v3186 = vsub.f32 %v2866, %v3166
        %v3187 = vsub.f32 %v2867, %v3167
        %v3188 = vsub.f32 %v2868, %v3168
        %v3189 = vsub.f32 %v2869, %v3169
        %v3190 = vsub.f32 %v2870, %v3170
        %vm3191 = vcmp.eq.f32.partialorder %v2891, %v2912
        %vm3192 = vcmp.eq.f32.partialorder %v2892, %v2914
        %vm3193 = vcmp.eq.f32.partialorder %v2893, %v2916
        %vm3194 = vcmp.eq.f32.partialorder %v2894, %v2918
        %vm3195 = vcmp.eq.f32.partialorder %v2895, %v2920
        %vm3196 = vcmp.eq.f32.partialorder %v2896, %v2922
        %vm3197 = vcmp.eq.f32.partialorder %v2897, %v2924
        %vm3198 = vcmp.eq.f32.partialorder %v2898, %v2926
        %vm3199 = vcmp.eq.f32.partialorder %v2899, %v2928
        %vm3200 = vcmp.eq.f32.partialorder %v2900, %v2930
        %vm3201 = vcmp.eq.f32.partialorder %v2901, %v2932
        %vm3202 = vcmp.eq.f32.partialorder %v2902, %v2934
        %vm3203 = vcmp.eq.f32.partialorder %v2903, %v2936
        %vm3204 = vcmp.eq.f32.partialorder %v2904, %v2938
        %vm3205 = vcmp.eq.f32.partialorder %v2905, %v2940
        %vm3206 = vcmp.eq.f32.partialorder %v2906, %v2942
        %vm3207 = vcmp.eq.f32.partialorder %v2907, %v2944
        %vm3208 = vcmp.eq.f32.partialorder %v2908, %v2946
        %vm3209 = vcmp.eq.f32.partialorder %v2909, %v2948
        %vm3210 = vcmp.eq.f32.partialorder %v2910, %v2950
        %v3211 = vsel %vm3191, 1e+18, %v2891
        %v3212 = vsel %vm3192, 1e+18, %v2892
        %v3213 = vsel %vm3193, 1e+18, %v2893
        %v3214 = vsel %vm3194, 1e+18, %v2894
        %v3215 = vsel %vm3195, 1e+18, %v2895
        %v3216 = vsel %vm3196, 1e+18, %v2896
        %v3217 = vsel %vm3197, 1e+18, %v2897
        %v3218 = vsel %vm3198, 1e+18, %v2898
        %v3219 = vsel %vm3199, 1e+18, %v2899
        %v3220 = vsel %vm3200, 1e+18, %v2900
        %v3221 = vsel %vm3201, 1e+18, %v2901
        %v3222 = vsel %vm3202, 1e+18, %v2902
        %v3223 = vsel %vm3203, 1e+18, %v2903
        %v3224 = vsel %vm3204, 1e+18, %v2904
        %v3225 = vsel %vm3205, 1e+18, %v2905
        %v3226 = vsel %vm3206, 1e+18, %v2906
        %v3227 = vsel %vm3207, 1e+18, %v2907
        %v3228 = vsel %vm3208, 1e+18, %v2908
        %v3229 = vsel %vm3209, 1e+18, %v2909
        %v3230 = vsel %vm3210, 1e+18, %v2910
        %3231 = vmin.xlane.f32.xlu0 %v3211
        %v3232 = vpop.xlane.xlu0 %3231
        %3233 = vmin.xlane.f32.xlu0 %v3212
        %v3234 = vpop.xlane.xlu0 %3233
        %3235 = vmin.xlane.f32.xlu0 %v3213
        %v3236 = vpop.xlane.xlu0 %3235
        %3237 = vmin.xlane.f32.xlu0 %v3214
        %v3238 = vpop.xlane.xlu0 %3237
        %3239 = vmin.xlane.f32.xlu0 %v3215
        %v3240 = vpop.xlane.xlu0 %3239
        %3241 = vmin.xlane.f32.xlu0 %v3216
        %v3242 = vpop.xlane.xlu0 %3241
        %3243 = vmin.xlane.f32.xlu0 %v3217
        %v3244 = vpop.xlane.xlu0 %3243
        %3245 = vmin.xlane.f32.xlu0 %v3218
        %v3246 = vpop.xlane.xlu0 %3245
        %3247 = vmin.xlane.f32.xlu0 %v3219
        %v3248 = vpop.xlane.xlu0 %3247
        %3249 = vmin.xlane.f32.xlu0 %v3220
        %v3250 = vpop.xlane.xlu0 %3249
        %3251 = vmin.xlane.f32.xlu0 %v3221
        %v3252 = vpop.xlane.xlu0 %3251
        %3253 = vmin.xlane.f32.xlu0 %v3222
        %v3254 = vpop.xlane.xlu0 %3253
        %3255 = vmin.xlane.f32.xlu0 %v3223
        %v3256 = vpop.xlane.xlu0 %3255
        %3257 = vmin.xlane.f32.xlu0 %v3224
        %v3258 = vpop.xlane.xlu0 %3257
        %3259 = vmin.xlane.f32.xlu0 %v3225
        %v3260 = vpop.xlane.xlu0 %3259
        %3261 = vmin.xlane.f32.xlu0 %v3226
        %v3262 = vpop.xlane.xlu0 %3261
        %3263 = vmin.xlane.f32.xlu0 %v3227
        %v3264 = vpop.xlane.xlu0 %3263
        %3265 = vmin.xlane.f32.xlu0 %v3228
        %v3266 = vpop.xlane.xlu0 %3265
        %3267 = vmin.xlane.f32.xlu0 %v3229
        %v3268 = vpop.xlane.xlu0 %3267
        %3269 = vmin.xlane.f32.xlu0 %v3230
        %v3270 = vpop.xlane.xlu0 %3269
        %v3271 = vrsqrt.pop %v3232
        %v3272 = vmul.f32 %v3232, %v3271
        %vm3273 = vcmp.eq.f32.partialorder %v3232, inf
        %v3274 = vsel %vm3273, %v3232, %v3272
        %vm3275 = vcmp.eq.f32.partialorder %v3232, 0.0
        %v3276 = vand.u32 %v3232, 2147483648
        %v3277 = vsel %vm3275, %v3276, %v3274
        %v3278 = vrsqrt.pop %v3234
        %v3279 = vmul.f32 %v3234, %v3278
        %vm3280 = vcmp.eq.f32.partialorder %v3234, inf
        %v3281 = vsel %vm3280, %v3234, %v3279
        %vm3282 = vcmp.eq.f32.partialorder %v3234, 0.0
        %v3283 = vand.u32 %v3234, 2147483648
        %v3284 = vsel %vm3282, %v3283, %v3281
        %v3285 = vrsqrt.pop %v3236
        %v3286 = vmul.f32 %v3236, %v3285
        %vm3287 = vcmp.eq.f32.partialorder %v3236, inf
        %v3288 = vsel %vm3287, %v3236, %v3286
        %vm3289 = vcmp.eq.f32.partialorder %v3236, 0.0
        %v3290 = vand.u32 %v3236, 2147483648
        %v3291 = vsel %vm3289, %v3290, %v3288
        %v3292 = vrsqrt.pop %v3238
        %v3293 = vmul.f32 %v3238, %v3292
        %vm3294 = vcmp.eq.f32.partialorder %v3238, inf
        %v3295 = vsel %vm3294, %v3238, %v3293
        %vm3296 = vcmp.eq.f32.partialorder %v3238, 0.0
        %v3297 = vand.u32 %v3238, 2147483648
        %v3298 = vsel %vm3296, %v3297, %v3295
        %v3299 = vrsqrt.pop %v3240
        %v3300 = vmul.f32 %v3240, %v3299
        %vm3301 = vcmp.eq.f32.partialorder %v3240, inf
        %v3302 = vsel %vm3301, %v3240, %v3300
        %vm3303 = vcmp.eq.f32.partialorder %v3240, 0.0
        %v3304 = vand.u32 %v3240, 2147483648
        %v3305 = vsel %vm3303, %v3304, %v3302
        %v3306 = vrsqrt.pop %v3242
        %v3307 = vmul.f32 %v3242, %v3306
        %vm3308 = vcmp.eq.f32.partialorder %v3242, inf
        %v3309 = vsel %vm3308, %v3242, %v3307
        %vm3310 = vcmp.eq.f32.partialorder %v3242, 0.0
        %v3311 = vand.u32 %v3242, 2147483648
        %v3312 = vsel %vm3310, %v3311, %v3309
        %v3313 = vrsqrt.pop %v3244
        %v3314 = vmul.f32 %v3244, %v3313
        %vm3315 = vcmp.eq.f32.partialorder %v3244, inf
        %v3316 = vsel %vm3315, %v3244, %v3314
        %vm3317 = vcmp.eq.f32.partialorder %v3244, 0.0
        %v3318 = vand.u32 %v3244, 2147483648
        %v3319 = vsel %vm3317, %v3318, %v3316
        %v3320 = vrsqrt.pop %v3246
        %v3321 = vmul.f32 %v3246, %v3320
        %vm3322 = vcmp.eq.f32.partialorder %v3246, inf
        %v3323 = vsel %vm3322, %v3246, %v3321
        %vm3324 = vcmp.eq.f32.partialorder %v3246, 0.0
        %v3325 = vand.u32 %v3246, 2147483648
        %v3326 = vsel %vm3324, %v3325, %v3323
        %v3327 = vrsqrt.pop %v3248
        %v3328 = vmul.f32 %v3248, %v3327
        %vm3329 = vcmp.eq.f32.partialorder %v3248, inf
        %v3330 = vsel %vm3329, %v3248, %v3328
        %vm3331 = vcmp.eq.f32.partialorder %v3248, 0.0
        %v3332 = vand.u32 %v3248, 2147483648
        %v3333 = vsel %vm3331, %v3332, %v3330
        %v3334 = vrsqrt.pop %v3250
        %v3335 = vmul.f32 %v3250, %v3334
        %vm3336 = vcmp.eq.f32.partialorder %v3250, inf
        %v3337 = vsel %vm3336, %v3250, %v3335
        %vm3338 = vcmp.eq.f32.partialorder %v3250, 0.0
        %v3339 = vand.u32 %v3250, 2147483648
        %v3340 = vsel %vm3338, %v3339, %v3337
        %v3341 = vrsqrt.pop %v3252
        %v3342 = vmul.f32 %v3252, %v3341
        %vm3343 = vcmp.eq.f32.partialorder %v3252, inf
        %v3344 = vsel %vm3343, %v3252, %v3342
        %vm3345 = vcmp.eq.f32.partialorder %v3252, 0.0
        %v3346 = vand.u32 %v3252, 2147483648
        %v3347 = vsel %vm3345, %v3346, %v3344
        %v3348 = vrsqrt.pop %v3254
        %v3349 = vmul.f32 %v3254, %v3348
        %vm3350 = vcmp.eq.f32.partialorder %v3254, inf
        %v3351 = vsel %vm3350, %v3254, %v3349
        %vm3352 = vcmp.eq.f32.partialorder %v3254, 0.0
        %v3353 = vand.u32 %v3254, 2147483648
        %v3354 = vsel %vm3352, %v3353, %v3351
        %v3355 = vrsqrt.pop %v3256
        %v3356 = vmul.f32 %v3256, %v3355
        %vm3357 = vcmp.eq.f32.partialorder %v3256, inf
        %v3358 = vsel %vm3357, %v3256, %v3356
        %vm3359 = vcmp.eq.f32.partialorder %v3256, 0.0
        %v3360 = vand.u32 %v3256, 2147483648
        %v3361 = vsel %vm3359, %v3360, %v3358
        %v3362 = vrsqrt.pop %v3258
        %v3363 = vmul.f32 %v3258, %v3362
        %vm3364 = vcmp.eq.f32.partialorder %v3258, inf
        %v3365 = vsel %vm3364, %v3258, %v3363
        %vm3366 = vcmp.eq.f32.partialorder %v3258, 0.0
        %v3367 = vand.u32 %v3258, 2147483648
        %v3368 = vsel %vm3366, %v3367, %v3365
        %v3369 = vrsqrt.pop %v3260
        %v3370 = vmul.f32 %v3260, %v3369
        %vm3371 = vcmp.eq.f32.partialorder %v3260, inf
        %v3372 = vsel %vm3371, %v3260, %v3370
        %vm3373 = vcmp.eq.f32.partialorder %v3260, 0.0
        %v3374 = vand.u32 %v3260, 2147483648
        %v3375 = vsel %vm3373, %v3374, %v3372
        %v3376 = vrsqrt.pop %v3262
        %v3377 = vmul.f32 %v3262, %v3376
        %vm3378 = vcmp.eq.f32.partialorder %v3262, inf
        %v3379 = vsel %vm3378, %v3262, %v3377
        %vm3380 = vcmp.eq.f32.partialorder %v3262, 0.0
        %v3381 = vand.u32 %v3262, 2147483648
        %v3382 = vsel %vm3380, %v3381, %v3379
        %v3383 = vrsqrt.pop %v3264
        %v3384 = vmul.f32 %v3264, %v3383
        %vm3385 = vcmp.eq.f32.partialorder %v3264, inf
        %v3386 = vsel %vm3385, %v3264, %v3384
        %vm3387 = vcmp.eq.f32.partialorder %v3264, 0.0
        %v3388 = vand.u32 %v3264, 2147483648
        %v3389 = vsel %vm3387, %v3388, %v3386
        %v3390 = vrsqrt.pop %v3266
        %v3391 = vmul.f32 %v3266, %v3390
        %vm3392 = vcmp.eq.f32.partialorder %v3266, inf
        %v3393 = vsel %vm3392, %v3266, %v3391
        %vm3394 = vcmp.eq.f32.partialorder %v3266, 0.0
        %v3395 = vand.u32 %v3266, 2147483648
        %v3396 = vsel %vm3394, %v3395, %v3393
        %v3397 = vrsqrt.pop %v3268
        %v3398 = vmul.f32 %v3268, %v3397
        %vm3399 = vcmp.eq.f32.partialorder %v3268, inf
        %v3400 = vsel %vm3399, %v3268, %v3398
        %vm3401 = vcmp.eq.f32.partialorder %v3268, 0.0
        %v3402 = vand.u32 %v3268, 2147483648
        %v3403 = vsel %vm3401, %v3402, %v3400
        %v3404 = vrsqrt.pop %v3270
        %v3405 = vmul.f32 %v3270, %v3404
        %vm3406 = vcmp.eq.f32.partialorder %v3270, inf
        %v3407 = vsel %vm3406, %v3270, %v3405
        %vm3408 = vcmp.eq.f32.partialorder %v3270, 0.0
        %v3409 = vand.u32 %v3270, 2147483648
        %v3410 = vsel %vm3408, %v3409, %v3407
        %v3411 = vmul.f32 %v3232, -10000.0
        %v3412 = vmul.f32 %v3234, -10000.0
        %v3413 = vmul.f32 %v3236, -10000.0
        %v3414 = vmul.f32 %v3238, -10000.0
        %v3415 = vmul.f32 %v3240, -10000.0
        %v3416 = vmul.f32 %v3242, -10000.0
        %v3417 = vmul.f32 %v3244, -10000.0
        %v3418 = vmul.f32 %v3246, -10000.0
        %v3419 = vmul.f32 %v3248, -10000.0
        %v3420 = vmul.f32 %v3250, -10000.0
        %v3421 = vmul.f32 %v3252, -10000.0
        %v3422 = vmul.f32 %v3254, -10000.0
        %v3423 = vmul.f32 %v3256, -10000.0
        %v3424 = vmul.f32 %v3258, -10000.0
        %v3425 = vmul.f32 %v3260, -10000.0
        %v3426 = vmul.f32 %v3262, -10000.0
        %v3427 = vmul.f32 %v3264, -10000.0
        %v3428 = vmul.f32 %v3266, -10000.0
        %v3429 = vmul.f32 %v3268, -10000.0
        %v3430 = vmul.f32 %v3270, -10000.0
        %v3431 = vmul.f32 %v3411, 1.442695
        %v3432 = vpow.pop %v3431
        %v3433 = vmul.f32 %v3412, 1.442695
        %v3434 = vpow.pop %v3433
        %v3435 = vmul.f32 %v3413, 1.442695
        %v3436 = vpow.pop %v3435
        %v3437 = vmul.f32 %v3414, 1.442695
        %v3438 = vpow.pop %v3437
        %v3439 = vmul.f32 %v3415, 1.442695
        %v3440 = vpow.pop %v3439
        %v3441 = vmul.f32 %v3416, 1.442695
        %v3442 = vpow.pop %v3441
        %v3443 = vmul.f32 %v3417, 1.442695
        %v3444 = vpow.pop %v3443
        %v3445 = vmul.f32 %v3418, 1.442695
        %v3446 = vpow.pop %v3445
        %v3447 = vmul.f32 %v3419, 1.442695
        %v3448 = vpow.pop %v3447
        %v3449 = vmul.f32 %v3420, 1.442695
        %v3450 = vpow.pop %v3449
        %v3451 = vmul.f32 %v3421, 1.442695
        %v3452 = vpow.pop %v3451
        %v3453 = vmul.f32 %v3422, 1.442695
        %v3454 = vpow.pop %v3453
        %v3455 = vmul.f32 %v3423, 1.442695
        %v3456 = vpow.pop %v3455
        %v3457 = vmul.f32 %v3424, 1.442695
        %v3458 = vpow.pop %v3457
        %v3459 = vmul.f32 %v3425, 1.442695
        %v3460 = vpow.pop %v3459
        %v3461 = vmul.f32 %v3426, 1.442695
        %v3462 = vpow.pop %v3461
        %v3463 = vmul.f32 %v3427, 1.442695
        %v3464 = vpow.pop %v3463
        %v3465 = vmul.f32 %v3428, 1.442695
        %v3466 = vpow.pop %v3465
        %v3467 = vmul.f32 %v3429, 1.442695
        %v3468 = vpow.pop %v3467
        %v3469 = vmul.f32 %v3430, 1.442695
        %v3470 = vpow.pop %v3469
        %v3471 = vmul.f32 %v3277, %v3432
        %v3472 = vmul.f32 %v3284, %v3434
        %v3473 = vmul.f32 %v3291, %v3436
        %v3474 = vmul.f32 %v3298, %v3438
        %v3475 = vmul.f32 %v3305, %v3440
        %v3476 = vmul.f32 %v3312, %v3442
        %v3477 = vmul.f32 %v3319, %v3444
        %v3478 = vmul.f32 %v3326, %v3446
        %v3479 = vmul.f32 %v3333, %v3448
        %v3480 = vmul.f32 %v3340, %v3450
        %v3481 = vmul.f32 %v3347, %v3452
        %v3482 = vmul.f32 %v3354, %v3454
        %v3483 = vmul.f32 %v3361, %v3456
        %v3484 = vmul.f32 %v3368, %v3458
        %v3485 = vmul.f32 %v3375, %v3460
        %v3486 = vmul.f32 %v3382, %v3462
        %v3487 = vmul.f32 %v3389, %v3464
        %v3488 = vmul.f32 %v3396, %v3466
        %v3489 = vmul.f32 %v3403, %v3468
        %v3490 = vmul.f32 %v3410, %v3470
        %v3491 = vsub.f32 %v3171, %v3471
        %v3492 = vsub.f32 %v3172, %v3472
        %v3493 = vsub.f32 %v3173, %v3473
        %v3494 = vsub.f32 %v3174, %v3474
        %v3495 = vsub.f32 %v3175, %v3475
        %v3496 = vsub.f32 %v3176, %v3476
        %v3497 = vsub.f32 %v3177, %v3477
        %v3498 = vsub.f32 %v3178, %v3478
        %v3499 = vsub.f32 %v3179, %v3479
        %v3500 = vsub.f32 %v3180, %v3480
        %v3501 = vsub.f32 %v3181, %v3481
        %v3502 = vsub.f32 %v3182, %v3482
        %v3503 = vsub.f32 %v3183, %v3483
        %v3504 = vsub.f32 %v3184, %v3484
        %v3505 = vsub.f32 %v3185, %v3485
        %v3506 = vsub.f32 %v3186, %v3486
        %v3507 = vsub.f32 %v3187, %v3487
        %v3508 = vsub.f32 %v3188, %v3488
        %v3509 = vsub.f32 %v3189, %v3489
        %v3510 = vsub.f32 %v3190, %v3490
        %vm3511 = vcmp.eq.f32.partialorder %v3211, %v3232
        %vm3512 = vcmp.eq.f32.partialorder %v3212, %v3234
        %vm3513 = vcmp.eq.f32.partialorder %v3213, %v3236
        %vm3514 = vcmp.eq.f32.partialorder %v3214, %v3238
        %vm3515 = vcmp.eq.f32.partialorder %v3215, %v3240
        %vm3516 = vcmp.eq.f32.partialorder %v3216, %v3242
        %vm3517 = vcmp.eq.f32.partialorder %v3217, %v3244
        %vm3518 = vcmp.eq.f32.partialorder %v3218, %v3246
        %vm3519 = vcmp.eq.f32.partialorder %v3219, %v3248
        %vm3520 = vcmp.eq.f32.partialorder %v3220, %v3250
        %vm3521 = vcmp.eq.f32.partialorder %v3221, %v3252
        %vm3522 = vcmp.eq.f32.partialorder %v3222, %v3254
        %vm3523 = vcmp.eq.f32.partialorder %v3223, %v3256
        %vm3524 = vcmp.eq.f32.partialorder %v3224, %v3258
        %vm3525 = vcmp.eq.f32.partialorder %v3225, %v3260
        %vm3526 = vcmp.eq.f32.partialorder %v3226, %v3262
        %vm3527 = vcmp.eq.f32.partialorder %v3227, %v3264
        %vm3528 = vcmp.eq.f32.partialorder %v3228, %v3266
        %vm3529 = vcmp.eq.f32.partialorder %v3229, %v3268
        %vm3530 = vcmp.eq.f32.partialorder %v3230, %v3270
        %v3531 = vsel %vm3511, 1e+18, %v3211
        %v3532 = vsel %vm3512, 1e+18, %v3212
        %v3533 = vsel %vm3513, 1e+18, %v3213
        %v3534 = vsel %vm3514, 1e+18, %v3214
        %v3535 = vsel %vm3515, 1e+18, %v3215
        %v3536 = vsel %vm3516, 1e+18, %v3216
        %v3537 = vsel %vm3517, 1e+18, %v3217
        %v3538 = vsel %vm3518, 1e+18, %v3218
        %v3539 = vsel %vm3519, 1e+18, %v3219
        %v3540 = vsel %vm3520, 1e+18, %v3220
        %v3541 = vsel %vm3521, 1e+18, %v3221
        %v3542 = vsel %vm3522, 1e+18, %v3222
        %v3543 = vsel %vm3523, 1e+18, %v3223
        %v3544 = vsel %vm3524, 1e+18, %v3224
        %v3545 = vsel %vm3525, 1e+18, %v3225
        %v3546 = vsel %vm3526, 1e+18, %v3226
        %v3547 = vsel %vm3527, 1e+18, %v3227
        %v3548 = vsel %vm3528, 1e+18, %v3228
        %v3549 = vsel %vm3529, 1e+18, %v3229
        %v3550 = vsel %vm3530, 1e+18, %v3230
        %3551 = vmin.xlane.f32.xlu0 %v3531
        %v3552 = vpop.xlane.xlu0 %3551
        %3553 = vmin.xlane.f32.xlu0 %v3532
        %v3554 = vpop.xlane.xlu0 %3553
        %3555 = vmin.xlane.f32.xlu0 %v3533
        %v3556 = vpop.xlane.xlu0 %3555
        %3557 = vmin.xlane.f32.xlu0 %v3534
        %v3558 = vpop.xlane.xlu0 %3557
        %3559 = vmin.xlane.f32.xlu0 %v3535
        %v3560 = vpop.xlane.xlu0 %3559
        %3561 = vmin.xlane.f32.xlu0 %v3536
        %v3562 = vpop.xlane.xlu0 %3561
        %3563 = vmin.xlane.f32.xlu0 %v3537
        %v3564 = vpop.xlane.xlu0 %3563
        %3565 = vmin.xlane.f32.xlu0 %v3538
        %v3566 = vpop.xlane.xlu0 %3565
        %3567 = vmin.xlane.f32.xlu0 %v3539
        %v3568 = vpop.xlane.xlu0 %3567
        %3569 = vmin.xlane.f32.xlu0 %v3540
        %v3570 = vpop.xlane.xlu0 %3569
        %3571 = vmin.xlane.f32.xlu0 %v3541
        %v3572 = vpop.xlane.xlu0 %3571
        %3573 = vmin.xlane.f32.xlu0 %v3542
        %v3574 = vpop.xlane.xlu0 %3573
        %3575 = vmin.xlane.f32.xlu0 %v3543
        %v3576 = vpop.xlane.xlu0 %3575
        %3577 = vmin.xlane.f32.xlu0 %v3544
        %v3578 = vpop.xlane.xlu0 %3577
        %3579 = vmin.xlane.f32.xlu0 %v3545
        %v3580 = vpop.xlane.xlu0 %3579
        %3581 = vmin.xlane.f32.xlu0 %v3546
        %v3582 = vpop.xlane.xlu0 %3581
        %3583 = vmin.xlane.f32.xlu0 %v3547
        %v3584 = vpop.xlane.xlu0 %3583
        %3585 = vmin.xlane.f32.xlu0 %v3548
        %v3586 = vpop.xlane.xlu0 %3585
        %3587 = vmin.xlane.f32.xlu0 %v3549
        %v3588 = vpop.xlane.xlu0 %3587
        %3589 = vmin.xlane.f32.xlu0 %v3550
        %v3590 = vpop.xlane.xlu0 %3589
        %v3591 = vrsqrt.pop %v3552
        %v3592 = vmul.f32 %v3552, %v3591
        %vm3593 = vcmp.eq.f32.partialorder %v3552, inf
        %v3594 = vsel %vm3593, %v3552, %v3592
        %vm3595 = vcmp.eq.f32.partialorder %v3552, 0.0
        %v3596 = vand.u32 %v3552, 2147483648
        %v3597 = vsel %vm3595, %v3596, %v3594
        %v3598 = vrsqrt.pop %v3554
        %v3599 = vmul.f32 %v3554, %v3598
        %vm3600 = vcmp.eq.f32.partialorder %v3554, inf
        %v3601 = vsel %vm3600, %v3554, %v3599
        %vm3602 = vcmp.eq.f32.partialorder %v3554, 0.0
        %v3603 = vand.u32 %v3554, 2147483648
        %v3604 = vsel %vm3602, %v3603, %v3601
        %v3605 = vrsqrt.pop %v3556
        %v3606 = vmul.f32 %v3556, %v3605
        %vm3607 = vcmp.eq.f32.partialorder %v3556, inf
        %v3608 = vsel %vm3607, %v3556, %v3606
        %vm3609 = vcmp.eq.f32.partialorder %v3556, 0.0
        %v3610 = vand.u32 %v3556, 2147483648
        %v3611 = vsel %vm3609, %v3610, %v3608
        %v3612 = vrsqrt.pop %v3558
        %v3613 = vmul.f32 %v3558, %v3612
        %vm3614 = vcmp.eq.f32.partialorder %v3558, inf
        %v3615 = vsel %vm3614, %v3558, %v3613
        %vm3616 = vcmp.eq.f32.partialorder %v3558, 0.0
        %v3617 = vand.u32 %v3558, 2147483648
        %v3618 = vsel %vm3616, %v3617, %v3615
        %v3619 = vrsqrt.pop %v3560
        %v3620 = vmul.f32 %v3560, %v3619
        %vm3621 = vcmp.eq.f32.partialorder %v3560, inf
        %v3622 = vsel %vm3621, %v3560, %v3620
        %vm3623 = vcmp.eq.f32.partialorder %v3560, 0.0
        %v3624 = vand.u32 %v3560, 2147483648
        %v3625 = vsel %vm3623, %v3624, %v3622
        %v3626 = vrsqrt.pop %v3562
        %v3627 = vmul.f32 %v3562, %v3626
        %vm3628 = vcmp.eq.f32.partialorder %v3562, inf
        %v3629 = vsel %vm3628, %v3562, %v3627
        %vm3630 = vcmp.eq.f32.partialorder %v3562, 0.0
        %v3631 = vand.u32 %v3562, 2147483648
        %v3632 = vsel %vm3630, %v3631, %v3629
        %v3633 = vrsqrt.pop %v3564
        %v3634 = vmul.f32 %v3564, %v3633
        %vm3635 = vcmp.eq.f32.partialorder %v3564, inf
        %v3636 = vsel %vm3635, %v3564, %v3634
        %vm3637 = vcmp.eq.f32.partialorder %v3564, 0.0
        %v3638 = vand.u32 %v3564, 2147483648
        %v3639 = vsel %vm3637, %v3638, %v3636
        %v3640 = vrsqrt.pop %v3566
        %v3641 = vmul.f32 %v3566, %v3640
        %vm3642 = vcmp.eq.f32.partialorder %v3566, inf
        %v3643 = vsel %vm3642, %v3566, %v3641
        %vm3644 = vcmp.eq.f32.partialorder %v3566, 0.0
        %v3645 = vand.u32 %v3566, 2147483648
        %v3646 = vsel %vm3644, %v3645, %v3643
        %v3647 = vrsqrt.pop %v3568
        %v3648 = vmul.f32 %v3568, %v3647
        %vm3649 = vcmp.eq.f32.partialorder %v3568, inf
        %v3650 = vsel %vm3649, %v3568, %v3648
        %vm3651 = vcmp.eq.f32.partialorder %v3568, 0.0
        %v3652 = vand.u32 %v3568, 2147483648
        %v3653 = vsel %vm3651, %v3652, %v3650
        %v3654 = vrsqrt.pop %v3570
        %v3655 = vmul.f32 %v3570, %v3654
        %vm3656 = vcmp.eq.f32.partialorder %v3570, inf
        %v3657 = vsel %vm3656, %v3570, %v3655
        %vm3658 = vcmp.eq.f32.partialorder %v3570, 0.0
        %v3659 = vand.u32 %v3570, 2147483648
        %v3660 = vsel %vm3658, %v3659, %v3657
        %v3661 = vrsqrt.pop %v3572
        %v3662 = vmul.f32 %v3572, %v3661
        %vm3663 = vcmp.eq.f32.partialorder %v3572, inf
        %v3664 = vsel %vm3663, %v3572, %v3662
        %vm3665 = vcmp.eq.f32.partialorder %v3572, 0.0
        %v3666 = vand.u32 %v3572, 2147483648
        %v3667 = vsel %vm3665, %v3666, %v3664
        %v3668 = vrsqrt.pop %v3574
        %v3669 = vmul.f32 %v3574, %v3668
        %vm3670 = vcmp.eq.f32.partialorder %v3574, inf
        %v3671 = vsel %vm3670, %v3574, %v3669
        %vm3672 = vcmp.eq.f32.partialorder %v3574, 0.0
        %v3673 = vand.u32 %v3574, 2147483648
        %v3674 = vsel %vm3672, %v3673, %v3671
        %v3675 = vrsqrt.pop %v3576
        %v3676 = vmul.f32 %v3576, %v3675
        %vm3677 = vcmp.eq.f32.partialorder %v3576, inf
        %v3678 = vsel %vm3677, %v3576, %v3676
        %vm3679 = vcmp.eq.f32.partialorder %v3576, 0.0
        %v3680 = vand.u32 %v3576, 2147483648
        %v3681 = vsel %vm3679, %v3680, %v3678
        %v3682 = vrsqrt.pop %v3578
        %v3683 = vmul.f32 %v3578, %v3682
        %vm3684 = vcmp.eq.f32.partialorder %v3578, inf
        %v3685 = vsel %vm3684, %v3578, %v3683
        %vm3686 = vcmp.eq.f32.partialorder %v3578, 0.0
        %v3687 = vand.u32 %v3578, 2147483648
        %v3688 = vsel %vm3686, %v3687, %v3685
        %v3689 = vrsqrt.pop %v3580
        %v3690 = vmul.f32 %v3580, %v3689
        %vm3691 = vcmp.eq.f32.partialorder %v3580, inf
        %v3692 = vsel %vm3691, %v3580, %v3690
        %vm3693 = vcmp.eq.f32.partialorder %v3580, 0.0
        %v3694 = vand.u32 %v3580, 2147483648
        %v3695 = vsel %vm3693, %v3694, %v3692
        %v3696 = vrsqrt.pop %v3582
        %v3697 = vmul.f32 %v3582, %v3696
        %vm3698 = vcmp.eq.f32.partialorder %v3582, inf
        %v3699 = vsel %vm3698, %v3582, %v3697
        %vm3700 = vcmp.eq.f32.partialorder %v3582, 0.0
        %v3701 = vand.u32 %v3582, 2147483648
        %v3702 = vsel %vm3700, %v3701, %v3699
        %v3703 = vrsqrt.pop %v3584
        %v3704 = vmul.f32 %v3584, %v3703
        %vm3705 = vcmp.eq.f32.partialorder %v3584, inf
        %v3706 = vsel %vm3705, %v3584, %v3704
        %vm3707 = vcmp.eq.f32.partialorder %v3584, 0.0
        %v3708 = vand.u32 %v3584, 2147483648
        %v3709 = vsel %vm3707, %v3708, %v3706
        %v3710 = vrsqrt.pop %v3586
        %v3711 = vmul.f32 %v3586, %v3710
        %vm3712 = vcmp.eq.f32.partialorder %v3586, inf
        %v3713 = vsel %vm3712, %v3586, %v3711
        %vm3714 = vcmp.eq.f32.partialorder %v3586, 0.0
        %v3715 = vand.u32 %v3586, 2147483648
        %v3716 = vsel %vm3714, %v3715, %v3713
        %v3717 = vrsqrt.pop %v3588
        %v3718 = vmul.f32 %v3588, %v3717
        %vm3719 = vcmp.eq.f32.partialorder %v3588, inf
        %v3720 = vsel %vm3719, %v3588, %v3718
        %vm3721 = vcmp.eq.f32.partialorder %v3588, 0.0
        %v3722 = vand.u32 %v3588, 2147483648
        %v3723 = vsel %vm3721, %v3722, %v3720
        %v3724 = vrsqrt.pop %v3590
        %v3725 = vmul.f32 %v3590, %v3724
        %vm3726 = vcmp.eq.f32.partialorder %v3590, inf
        %v3727 = vsel %vm3726, %v3590, %v3725
        %vm3728 = vcmp.eq.f32.partialorder %v3590, 0.0
        %v3729 = vand.u32 %v3590, 2147483648
        %v3730 = vsel %vm3728, %v3729, %v3727
        %v3731 = vmul.f32 %v3552, -10000.0
        %v3732 = vmul.f32 %v3554, -10000.0
        %v3733 = vmul.f32 %v3556, -10000.0
        %v3734 = vmul.f32 %v3558, -10000.0
        %v3735 = vmul.f32 %v3560, -10000.0
        %v3736 = vmul.f32 %v3562, -10000.0
        %v3737 = vmul.f32 %v3564, -10000.0
        %v3738 = vmul.f32 %v3566, -10000.0
        %v3739 = vmul.f32 %v3568, -10000.0
        %v3740 = vmul.f32 %v3570, -10000.0
        %v3741 = vmul.f32 %v3572, -10000.0
        %v3742 = vmul.f32 %v3574, -10000.0
        %v3743 = vmul.f32 %v3576, -10000.0
        %v3744 = vmul.f32 %v3578, -10000.0
        %v3745 = vmul.f32 %v3580, -10000.0
        %v3746 = vmul.f32 %v3582, -10000.0
        %v3747 = vmul.f32 %v3584, -10000.0
        %v3748 = vmul.f32 %v3586, -10000.0
        %v3749 = vmul.f32 %v3588, -10000.0
        %v3750 = vmul.f32 %v3590, -10000.0
        %v3751 = vmul.f32 %v3731, 1.442695
        %v3752 = vpow.pop %v3751
        %v3753 = vmul.f32 %v3732, 1.442695
        %v3754 = vpow.pop %v3753
        %v3755 = vmul.f32 %v3733, 1.442695
        %v3756 = vpow.pop %v3755
        %v3757 = vmul.f32 %v3734, 1.442695
        %v3758 = vpow.pop %v3757
        %v3759 = vmul.f32 %v3735, 1.442695
        %v3760 = vpow.pop %v3759
        %v3761 = vmul.f32 %v3736, 1.442695
        %v3762 = vpow.pop %v3761
        %v3763 = vmul.f32 %v3737, 1.442695
        %v3764 = vpow.pop %v3763
        %v3765 = vmul.f32 %v3738, 1.442695
        %v3766 = vpow.pop %v3765
        %v3767 = vmul.f32 %v3739, 1.442695
        %v3768 = vpow.pop %v3767
        %v3769 = vmul.f32 %v3740, 1.442695
        %v3770 = vpow.pop %v3769
        %v3771 = vmul.f32 %v3741, 1.442695
        %v3772 = vpow.pop %v3771
        %v3773 = vmul.f32 %v3742, 1.442695
        %v3774 = vpow.pop %v3773
        %v3775 = vmul.f32 %v3743, 1.442695
        %v3776 = vpow.pop %v3775
        %v3777 = vmul.f32 %v3744, 1.442695
        %v3778 = vpow.pop %v3777
        %v3779 = vmul.f32 %v3745, 1.442695
        %v3780 = vpow.pop %v3779
        %v3781 = vmul.f32 %v3746, 1.442695
        %v3782 = vpow.pop %v3781
        %v3783 = vmul.f32 %v3747, 1.442695
        %v3784 = vpow.pop %v3783
        %v3785 = vmul.f32 %v3748, 1.442695
        %v3786 = vpow.pop %v3785
        %v3787 = vmul.f32 %v3749, 1.442695
        %v3788 = vpow.pop %v3787
        %v3789 = vmul.f32 %v3750, 1.442695
        %v3790 = vpow.pop %v3789
        %v3791 = vmul.f32 %v3597, %v3752
        %v3792 = vmul.f32 %v3604, %v3754
        %v3793 = vmul.f32 %v3611, %v3756
        %v3794 = vmul.f32 %v3618, %v3758
        %v3795 = vmul.f32 %v3625, %v3760
        %v3796 = vmul.f32 %v3632, %v3762
        %v3797 = vmul.f32 %v3639, %v3764
        %v3798 = vmul.f32 %v3646, %v3766
        %v3799 = vmul.f32 %v3653, %v3768
        %v3800 = vmul.f32 %v3660, %v3770
        %v3801 = vmul.f32 %v3667, %v3772
        %v3802 = vmul.f32 %v3674, %v3774
        %v3803 = vmul.f32 %v3681, %v3776
        %v3804 = vmul.f32 %v3688, %v3778
        %v3805 = vmul.f32 %v3695, %v3780
        %v3806 = vmul.f32 %v3702, %v3782
        %v3807 = vmul.f32 %v3709, %v3784
        %v3808 = vmul.f32 %v3716, %v3786
        %v3809 = vmul.f32 %v3723, %v3788
        %v3810 = vmul.f32 %v3730, %v3790
        %v3811 = vsub.f32 %v3491, %v3791
        %v3812 = vsub.f32 %v3492, %v3792
        %v3813 = vsub.f32 %v3493, %v3793
        %v3814 = vsub.f32 %v3494, %v3794
        %v3815 = vsub.f32 %v3495, %v3795
        %v3816 = vsub.f32 %v3496, %v3796
        %v3817 = vsub.f32 %v3497, %v3797
        %v3818 = vsub.f32 %v3498, %v3798
        %v3819 = vsub.f32 %v3499, %v3799
        %v3820 = vsub.f32 %v3500, %v3800
        %v3821 = vsub.f32 %v3501, %v3801
        %v3822 = vsub.f32 %v3502, %v3802
        %v3823 = vsub.f32 %v3503, %v3803
        %v3824 = vsub.f32 %v3504, %v3804
        %v3825 = vsub.f32 %v3505, %v3805
        %v3826 = vsub.f32 %v3506, %v3806
        %v3827 = vsub.f32 %v3507, %v3807
        %v3828 = vsub.f32 %v3508, %v3808
        %v3829 = vsub.f32 %v3509, %v3809
        %v3830 = vsub.f32 %v3510, %v3810
        %vm3831 = vcmp.eq.f32.partialorder %v3531, %v3552
        %vm3832 = vcmp.eq.f32.partialorder %v3532, %v3554
        %vm3833 = vcmp.eq.f32.partialorder %v3533, %v3556
        %vm3834 = vcmp.eq.f32.partialorder %v3534, %v3558
        %vm3835 = vcmp.eq.f32.partialorder %v3535, %v3560
        %vm3836 = vcmp.eq.f32.partialorder %v3536, %v3562
        %vm3837 = vcmp.eq.f32.partialorder %v3537, %v3564
        %vm3838 = vcmp.eq.f32.partialorder %v3538, %v3566
        %vm3839 = vcmp.eq.f32.partialorder %v3539, %v3568
        %vm3840 = vcmp.eq.f32.partialorder %v3540, %v3570
        %vm3841 = vcmp.eq.f32.partialorder %v3541, %v3572
        %vm3842 = vcmp.eq.f32.partialorder %v3542, %v3574
        %vm3843 = vcmp.eq.f32.partialorder %v3543, %v3576
        %vm3844 = vcmp.eq.f32.partialorder %v3544, %v3578
        %vm3845 = vcmp.eq.f32.partialorder %v3545, %v3580
        %vm3846 = vcmp.eq.f32.partialorder %v3546, %v3582
        %vm3847 = vcmp.eq.f32.partialorder %v3547, %v3584
        %vm3848 = vcmp.eq.f32.partialorder %v3548, %v3586
        %vm3849 = vcmp.eq.f32.partialorder %v3549, %v3588
        %vm3850 = vcmp.eq.f32.partialorder %v3550, %v3590
        %v3851 = vsel %vm3831, 1e+18, %v3531
        %v3852 = vsel %vm3832, 1e+18, %v3532
        %v3853 = vsel %vm3833, 1e+18, %v3533
        %v3854 = vsel %vm3834, 1e+18, %v3534
        %v3855 = vsel %vm3835, 1e+18, %v3535
        %v3856 = vsel %vm3836, 1e+18, %v3536
        %v3857 = vsel %vm3837, 1e+18, %v3537
        %v3858 = vsel %vm3838, 1e+18, %v3538
        %v3859 = vsel %vm3839, 1e+18, %v3539
        %v3860 = vsel %vm3840, 1e+18, %v3540
        %v3861 = vsel %vm3841, 1e+18, %v3541
        %v3862 = vsel %vm3842, 1e+18, %v3542
        %v3863 = vsel %vm3843, 1e+18, %v3543
        %v3864 = vsel %vm3844, 1e+18, %v3544
        %v3865 = vsel %vm3845, 1e+18, %v3545
        %v3866 = vsel %vm3846, 1e+18, %v3546
        %v3867 = vsel %vm3847, 1e+18, %v3547
        %v3868 = vsel %vm3848, 1e+18, %v3548
        %v3869 = vsel %vm3849, 1e+18, %v3549
        %v3870 = vsel %vm3850, 1e+18, %v3550
        %3871 = vmin.xlane.f32.xlu0 %v3851
        %v3872 = vpop.xlane.xlu0 %3871
        %3873 = vmin.xlane.f32.xlu0 %v3852
        %v3874 = vpop.xlane.xlu0 %3873
        %3875 = vmin.xlane.f32.xlu0 %v3853
        %v3876 = vpop.xlane.xlu0 %3875
        %3877 = vmin.xlane.f32.xlu0 %v3854
        %v3878 = vpop.xlane.xlu0 %3877
        %3879 = vmin.xlane.f32.xlu0 %v3855
        %v3880 = vpop.xlane.xlu0 %3879
        %3881 = vmin.xlane.f32.xlu0 %v3856
        %v3882 = vpop.xlane.xlu0 %3881
        %3883 = vmin.xlane.f32.xlu0 %v3857
        %v3884 = vpop.xlane.xlu0 %3883
        %3885 = vmin.xlane.f32.xlu0 %v3858
        %v3886 = vpop.xlane.xlu0 %3885
        %3887 = vmin.xlane.f32.xlu0 %v3859
        %v3888 = vpop.xlane.xlu0 %3887
        %3889 = vmin.xlane.f32.xlu0 %v3860
        %v3890 = vpop.xlane.xlu0 %3889
        %3891 = vmin.xlane.f32.xlu0 %v3861
        %v3892 = vpop.xlane.xlu0 %3891
        %3893 = vmin.xlane.f32.xlu0 %v3862
        %v3894 = vpop.xlane.xlu0 %3893
        %3895 = vmin.xlane.f32.xlu0 %v3863
        %v3896 = vpop.xlane.xlu0 %3895
        %3897 = vmin.xlane.f32.xlu0 %v3864
        %v3898 = vpop.xlane.xlu0 %3897
        %3899 = vmin.xlane.f32.xlu0 %v3865
        %v3900 = vpop.xlane.xlu0 %3899
        %3901 = vmin.xlane.f32.xlu0 %v3866
        %v3902 = vpop.xlane.xlu0 %3901
        %3903 = vmin.xlane.f32.xlu0 %v3867
        %v3904 = vpop.xlane.xlu0 %3903
        %3905 = vmin.xlane.f32.xlu0 %v3868
        %v3906 = vpop.xlane.xlu0 %3905
        %3907 = vmin.xlane.f32.xlu0 %v3869
        %v3908 = vpop.xlane.xlu0 %3907
        %3909 = vmin.xlane.f32.xlu0 %v3870
        %v3910 = vpop.xlane.xlu0 %3909
        %v3911 = vrsqrt.pop %v3872
        %v3912 = vmul.f32 %v3872, %v3911
        %vm3913 = vcmp.eq.f32.partialorder %v3872, inf
        %v3914 = vsel %vm3913, %v3872, %v3912
        %vm3915 = vcmp.eq.f32.partialorder %v3872, 0.0
        %v3916 = vand.u32 %v3872, 2147483648
        %v3917 = vsel %vm3915, %v3916, %v3914
        %v3918 = vrsqrt.pop %v3874
        %v3919 = vmul.f32 %v3874, %v3918
        %vm3920 = vcmp.eq.f32.partialorder %v3874, inf
        %v3921 = vsel %vm3920, %v3874, %v3919
        %vm3922 = vcmp.eq.f32.partialorder %v3874, 0.0
        %v3923 = vand.u32 %v3874, 2147483648
        %v3924 = vsel %vm3922, %v3923, %v3921
        %v3925 = vrsqrt.pop %v3876
        %v3926 = vmul.f32 %v3876, %v3925
        %vm3927 = vcmp.eq.f32.partialorder %v3876, inf
        %v3928 = vsel %vm3927, %v3876, %v3926
        %vm3929 = vcmp.eq.f32.partialorder %v3876, 0.0
        %v3930 = vand.u32 %v3876, 2147483648
        %v3931 = vsel %vm3929, %v3930, %v3928
        %v3932 = vrsqrt.pop %v3878
        %v3933 = vmul.f32 %v3878, %v3932
        %vm3934 = vcmp.eq.f32.partialorder %v3878, inf
        %v3935 = vsel %vm3934, %v3878, %v3933
        %vm3936 = vcmp.eq.f32.partialorder %v3878, 0.0
        %v3937 = vand.u32 %v3878, 2147483648
        %v3938 = vsel %vm3936, %v3937, %v3935
        %v3939 = vrsqrt.pop %v3880
        %v3940 = vmul.f32 %v3880, %v3939
        %vm3941 = vcmp.eq.f32.partialorder %v3880, inf
        %v3942 = vsel %vm3941, %v3880, %v3940
        %vm3943 = vcmp.eq.f32.partialorder %v3880, 0.0
        %v3944 = vand.u32 %v3880, 2147483648
        %v3945 = vsel %vm3943, %v3944, %v3942
        %v3946 = vrsqrt.pop %v3882
        %v3947 = vmul.f32 %v3882, %v3946
        %vm3948 = vcmp.eq.f32.partialorder %v3882, inf
        %v3949 = vsel %vm3948, %v3882, %v3947
        %vm3950 = vcmp.eq.f32.partialorder %v3882, 0.0
        %v3951 = vand.u32 %v3882, 2147483648
        %v3952 = vsel %vm3950, %v3951, %v3949
        %v3953 = vrsqrt.pop %v3884
        %v3954 = vmul.f32 %v3884, %v3953
        %vm3955 = vcmp.eq.f32.partialorder %v3884, inf
        %v3956 = vsel %vm3955, %v3884, %v3954
        %vm3957 = vcmp.eq.f32.partialorder %v3884, 0.0
        %v3958 = vand.u32 %v3884, 2147483648
        %v3959 = vsel %vm3957, %v3958, %v3956
        %v3960 = vrsqrt.pop %v3886
        %v3961 = vmul.f32 %v3886, %v3960
        %vm3962 = vcmp.eq.f32.partialorder %v3886, inf
        %v3963 = vsel %vm3962, %v3886, %v3961
        %vm3964 = vcmp.eq.f32.partialorder %v3886, 0.0
        %v3965 = vand.u32 %v3886, 2147483648
        %v3966 = vsel %vm3964, %v3965, %v3963
        %v3967 = vrsqrt.pop %v3888
        %v3968 = vmul.f32 %v3888, %v3967
        %vm3969 = vcmp.eq.f32.partialorder %v3888, inf
        %v3970 = vsel %vm3969, %v3888, %v3968
        %vm3971 = vcmp.eq.f32.partialorder %v3888, 0.0
        %v3972 = vand.u32 %v3888, 2147483648
        %v3973 = vsel %vm3971, %v3972, %v3970
        %v3974 = vrsqrt.pop %v3890
        %v3975 = vmul.f32 %v3890, %v3974
        %vm3976 = vcmp.eq.f32.partialorder %v3890, inf
        %v3977 = vsel %vm3976, %v3890, %v3975
        %vm3978 = vcmp.eq.f32.partialorder %v3890, 0.0
        %v3979 = vand.u32 %v3890, 2147483648
        %v3980 = vsel %vm3978, %v3979, %v3977
        %v3981 = vrsqrt.pop %v3892
        %v3982 = vmul.f32 %v3892, %v3981
        %vm3983 = vcmp.eq.f32.partialorder %v3892, inf
        %v3984 = vsel %vm3983, %v3892, %v3982
        %vm3985 = vcmp.eq.f32.partialorder %v3892, 0.0
        %v3986 = vand.u32 %v3892, 2147483648
        %v3987 = vsel %vm3985, %v3986, %v3984
        %v3988 = vrsqrt.pop %v3894
        %v3989 = vmul.f32 %v3894, %v3988
        %vm3990 = vcmp.eq.f32.partialorder %v3894, inf
        %v3991 = vsel %vm3990, %v3894, %v3989
        %vm3992 = vcmp.eq.f32.partialorder %v3894, 0.0
        %v3993 = vand.u32 %v3894, 2147483648
        %v3994 = vsel %vm3992, %v3993, %v3991
        %v3995 = vrsqrt.pop %v3896
        %v3996 = vmul.f32 %v3896, %v3995
        %vm3997 = vcmp.eq.f32.partialorder %v3896, inf
        %v3998 = vsel %vm3997, %v3896, %v3996
        %vm3999 = vcmp.eq.f32.partialorder %v3896, 0.0
        %v4000 = vand.u32 %v3896, 2147483648
        %v4001 = vsel %vm3999, %v4000, %v3998
        %v4002 = vrsqrt.pop %v3898
        %v4003 = vmul.f32 %v3898, %v4002
        %vm4004 = vcmp.eq.f32.partialorder %v3898, inf
        %v4005 = vsel %vm4004, %v3898, %v4003
        %vm4006 = vcmp.eq.f32.partialorder %v3898, 0.0
        %v4007 = vand.u32 %v3898, 2147483648
        %v4008 = vsel %vm4006, %v4007, %v4005
        %v4009 = vrsqrt.pop %v3900
        %v4010 = vmul.f32 %v3900, %v4009
        %vm4011 = vcmp.eq.f32.partialorder %v3900, inf
        %v4012 = vsel %vm4011, %v3900, %v4010
        %vm4013 = vcmp.eq.f32.partialorder %v3900, 0.0
        %v4014 = vand.u32 %v3900, 2147483648
        %v4015 = vsel %vm4013, %v4014, %v4012
        %v4016 = vrsqrt.pop %v3902
        %v4017 = vmul.f32 %v3902, %v4016
        %vm4018 = vcmp.eq.f32.partialorder %v3902, inf
        %v4019 = vsel %vm4018, %v3902, %v4017
        %vm4020 = vcmp.eq.f32.partialorder %v3902, 0.0
        %v4021 = vand.u32 %v3902, 2147483648
        %v4022 = vsel %vm4020, %v4021, %v4019
        %v4023 = vrsqrt.pop %v3904
        %v4024 = vmul.f32 %v3904, %v4023
        %vm4025 = vcmp.eq.f32.partialorder %v3904, inf
        %v4026 = vsel %vm4025, %v3904, %v4024
        %vm4027 = vcmp.eq.f32.partialorder %v3904, 0.0
        %v4028 = vand.u32 %v3904, 2147483648
        %v4029 = vsel %vm4027, %v4028, %v4026
        %v4030 = vrsqrt.pop %v3906
        %v4031 = vmul.f32 %v3906, %v4030
        %vm4032 = vcmp.eq.f32.partialorder %v3906, inf
        %v4033 = vsel %vm4032, %v3906, %v4031
        %vm4034 = vcmp.eq.f32.partialorder %v3906, 0.0
        %v4035 = vand.u32 %v3906, 2147483648
        %v4036 = vsel %vm4034, %v4035, %v4033
        %v4037 = vrsqrt.pop %v3908
        %v4038 = vmul.f32 %v3908, %v4037
        %vm4039 = vcmp.eq.f32.partialorder %v3908, inf
        %v4040 = vsel %vm4039, %v3908, %v4038
        %vm4041 = vcmp.eq.f32.partialorder %v3908, 0.0
        %v4042 = vand.u32 %v3908, 2147483648
        %v4043 = vsel %vm4041, %v4042, %v4040
        %v4044 = vrsqrt.pop %v3910
        %v4045 = vmul.f32 %v3910, %v4044
        %vm4046 = vcmp.eq.f32.partialorder %v3910, inf
        %v4047 = vsel %vm4046, %v3910, %v4045
        %vm4048 = vcmp.eq.f32.partialorder %v3910, 0.0
        %v4049 = vand.u32 %v3910, 2147483648
        %v4050 = vsel %vm4048, %v4049, %v4047
        %v4051 = vmul.f32 %v3872, -10000.0
        %v4052 = vmul.f32 %v3874, -10000.0
        %v4053 = vmul.f32 %v3876, -10000.0
        %v4054 = vmul.f32 %v3878, -10000.0
        %v4055 = vmul.f32 %v3880, -10000.0
        %v4056 = vmul.f32 %v3882, -10000.0
        %v4057 = vmul.f32 %v3884, -10000.0
        %v4058 = vmul.f32 %v3886, -10000.0
        %v4059 = vmul.f32 %v3888, -10000.0
        %v4060 = vmul.f32 %v3890, -10000.0
        %v4061 = vmul.f32 %v3892, -10000.0
        %v4062 = vmul.f32 %v3894, -10000.0
        %v4063 = vmul.f32 %v3896, -10000.0
        %v4064 = vmul.f32 %v3898, -10000.0
        %v4065 = vmul.f32 %v3900, -10000.0
        %v4066 = vmul.f32 %v3902, -10000.0
        %v4067 = vmul.f32 %v3904, -10000.0
        %v4068 = vmul.f32 %v3906, -10000.0
        %v4069 = vmul.f32 %v3908, -10000.0
        %v4070 = vmul.f32 %v3910, -10000.0
        %v4071 = vmul.f32 %v4051, 1.442695
        %v4072 = vpow.pop %v4071
        %v4073 = vmul.f32 %v4052, 1.442695
        %v4074 = vpow.pop %v4073
        %v4075 = vmul.f32 %v4053, 1.442695
        %v4076 = vpow.pop %v4075
        %v4077 = vmul.f32 %v4054, 1.442695
        %v4078 = vpow.pop %v4077
        %v4079 = vmul.f32 %v4055, 1.442695
        %v4080 = vpow.pop %v4079
        %v4081 = vmul.f32 %v4056, 1.442695
        %v4082 = vpow.pop %v4081
        %v4083 = vmul.f32 %v4057, 1.442695
        %v4084 = vpow.pop %v4083
        %v4085 = vmul.f32 %v4058, 1.442695
        %v4086 = vpow.pop %v4085
        %v4087 = vmul.f32 %v4059, 1.442695
        %v4088 = vpow.pop %v4087
        %v4089 = vmul.f32 %v4060, 1.442695
        %v4090 = vpow.pop %v4089
        %v4091 = vmul.f32 %v4061, 1.442695
        %v4092 = vpow.pop %v4091
        %v4093 = vmul.f32 %v4062, 1.442695
        %v4094 = vpow.pop %v4093
        %v4095 = vmul.f32 %v4063, 1.442695
        %v4096 = vpow.pop %v4095
        %v4097 = vmul.f32 %v4064, 1.442695
        %v4098 = vpow.pop %v4097
        %v4099 = vmul.f32 %v4065, 1.442695
        %v4100 = vpow.pop %v4099
        %v4101 = vmul.f32 %v4066, 1.442695
        %v4102 = vpow.pop %v4101
        %v4103 = vmul.f32 %v4067, 1.442695
        %v4104 = vpow.pop %v4103
        %v4105 = vmul.f32 %v4068, 1.442695
        %v4106 = vpow.pop %v4105
        %v4107 = vmul.f32 %v4069, 1.442695
        %v4108 = vpow.pop %v4107
        %v4109 = vmul.f32 %v4070, 1.442695
        %v4110 = vpow.pop %v4109
        %v4111 = vmul.f32 %v3917, %v4072
        %v4112 = vmul.f32 %v3924, %v4074
        %v4113 = vmul.f32 %v3931, %v4076
        %v4114 = vmul.f32 %v3938, %v4078
        %v4115 = vmul.f32 %v3945, %v4080
        %v4116 = vmul.f32 %v3952, %v4082
        %v4117 = vmul.f32 %v3959, %v4084
        %v4118 = vmul.f32 %v3966, %v4086
        %v4119 = vmul.f32 %v3973, %v4088
        %v4120 = vmul.f32 %v3980, %v4090
        %v4121 = vmul.f32 %v3987, %v4092
        %v4122 = vmul.f32 %v3994, %v4094
        %v4123 = vmul.f32 %v4001, %v4096
        %v4124 = vmul.f32 %v4008, %v4098
        %v4125 = vmul.f32 %v4015, %v4100
        %v4126 = vmul.f32 %v4022, %v4102
        %v4127 = vmul.f32 %v4029, %v4104
        %v4128 = vmul.f32 %v4036, %v4106
        %v4129 = vmul.f32 %v4043, %v4108
        %v4130 = vmul.f32 %v4050, %v4110
        %v4131 = vsub.f32 %v3811, %v4111
        %v4132 = vsub.f32 %v3812, %v4112
        %v4133 = vsub.f32 %v3813, %v4113
        %v4134 = vsub.f32 %v3814, %v4114
        %v4135 = vsub.f32 %v3815, %v4115
        %v4136 = vsub.f32 %v3816, %v4116
        %v4137 = vsub.f32 %v3817, %v4117
        %v4138 = vsub.f32 %v3818, %v4118
        %v4139 = vsub.f32 %v3819, %v4119
        %v4140 = vsub.f32 %v3820, %v4120
        %v4141 = vsub.f32 %v3821, %v4121
        %v4142 = vsub.f32 %v3822, %v4122
        %v4143 = vsub.f32 %v3823, %v4123
        %v4144 = vsub.f32 %v3824, %v4124
        %v4145 = vsub.f32 %v3825, %v4125
        %v4146 = vsub.f32 %v3826, %v4126
        %v4147 = vsub.f32 %v3827, %v4127
        %v4148 = vsub.f32 %v3828, %v4128
        %v4149 = vsub.f32 %v3829, %v4129
        %v4150 = vsub.f32 %v3830, %v4130
        %v4151 = vadd.f32 %v4131, %v4132
        %v4152 = vadd.f32 %v4151, %v4133
        %v4153 = vadd.f32 %v4152, %v4134
        %v4154 = vadd.f32 %v4153, %v4135
        %v4155 = vadd.f32 %v4154, %v4136
        %v4156 = vadd.f32 %v4155, %v4137
        %v4157 = vadd.f32 %v4156, %v4138
        %v4158 = vadd.f32 %v4157, %v4139
        %v4159 = vadd.f32 %v4158, %v4140
        %v4160 = vadd.f32 %v4159, %v4141
        %v4161 = vadd.f32 %v4160, %v4142
        %v4162 = vadd.f32 %v4161, %v4143
        %v4163 = vadd.f32 %v4162, %v4144
        %v4164 = vadd.f32 %v4163, %v4145
        %v4165 = vadd.f32 %v4164, %v4146
        %v4166 = vadd.f32 %v4165, %v4147
        %v4167 = vadd.f32 %v4166, %v4148
        %v4168 = vadd.f32 %v4167, %v4149
        %v4169 = vadd.f32 %v4168, %v4150
        %4170 = vst [vmem:[%s174] sm:$0xff] %v4169
        %s4171 = sand.u32 %s79, 1
        %s4172 = scalar_lea.sflag [#allocation4], %s4171
        %s4173 = sand.u32 %s79, 1
        %s4174 = smul.addr %s4173, 8
        %s4175 = scalar_lea.vmem [#allocation5], %s4174
        // Predicated region
        $region33: #{tpu_custom_call.1} parent=27 // pred_check
          %p4176 = pneg %p89
        $region34: #{tpu_custom_call.1} parent=27 // pred_check_branch
          %4178 = sbr.rel (%p4176) target = $region36
        $region35: #{tpu_custom_call.1} parent=27 // pred_region
          %s4180 = ssub.s32 128, 128
          %4181 = vsyncadd %s4172, %s4180
          %s4182 = smul.addr %s19, 128
          %s4183 = scalar_lea.hbm %s2, %s4182
          %s4185 = sshll.u32 %s4175, 4
          %s4186 = int_to_ptr.vmem [resolvable:$true] %s4185
          %4188 = dma.vmem_to_hbm [thread:$0]  %s4186, 128, %s4183, %s4172
        $region36: #{tpu_custom_call.1} parent=27 // pred_fallthru
          _
      $region28: #{tpu_custom_call.1} parent=5 // pred_fallthru
        _
      %p4189 = scmp.le.s32.totalorder 2, %s14
      // Predicated region
      $region37: #{tpu_custom_call.1} parent=5 // pred_check
        %p4190 = pneg %p4189
      $region38: #{tpu_custom_call.1} parent=5 // pred_check_branch
        %4192 = sbr.rel (%p4190) target = $region40
      $region39: #{tpu_custom_call.1} parent=5 // pred_region
        %s4193 = ssub.s32 %s14, 2
        // Predicated region
        $region41: #{tpu_custom_call.1} parent=39 // pred_check
          %p4194 = pneg %p95
        $region42: #{tpu_custom_call.1} parent=39 // pred_check_branch
          %4196 = sbr.rel (%p4194) target = $region44
        $region43: #{tpu_custom_call.1} parent=39 // pred_region
          %s4197 = sand.u32 %s80, 1
          %s4198 = scalar_lea.sflag [#allocation4], %s4197
          %s4199 = sand.u32 %s80, 1
          %s4200 = smul.addr %s4199, 8
          %s4201 = scalar_lea.vmem [#allocation5], %s4200
          %4202 = dma.done %s4198, 128
        $region44: #{tpu_custom_call.1} parent=39 // pred_fallthru
          _
      $region40: #{tpu_custom_call.1} parent=5 // pred_fallthru
        _
    $region6: #{tpu_custom_call.1} parent=1 // loop_footer
      %s18 = sadd.s32 1, %s14
    $region7: #{tpu_custom_call.1} parent=1 // loop_footer_branch
      %13 = sbr.rel target = $region3
    $region8: #{tpu_custom_call.1} parent=1 // loop_exit
      _
    %4203 = vsyncpa [#allocation3], 1
    %s4204 = scalar_lea.sflag [#allocation3], 1
    %4205 = vsyncpa %s4204, 1
    %4206 = vsyncpa [#allocation4], 1
    %s4207 = scalar_lea.sflag [#allocation4], 1
    %4208 = vsyncpa %s4207, 1

</llo_original>
